<compile_context>
chip_gen: v6e
topology: v6e:2x2x1
jax: 0.10.0
libtpu: 0.0.40
codegen_flags: <defaults>
</compile_context>

<pallas_src>
import functools

import jax
import jax.numpy as jnp
from jax.experimental import pallas as pl
from jax.experimental.pallas import tpu as pltpu

_HEADS = (("center_view", 2), ("height_view", 1), ("dim_view", 3),
          ("rot_view", 2), ("vel_view", 2))
_EPS_LN = 1e-5
_EPS_BN = 1e-5
_MXU_DTYPE = jnp.bfloat16      # bf16 MXU operands are supported on v5e/v6e/v7x


def _mm(a, b):
    """MXU matmul: bf16 operands, f32 accumulation."""
    return jnp.dot(a.astype(_MXU_DTYPE), b.astype(_MXU_DTYPE),
                   preferred_element_type=jnp.float32)


def _layernorm(x, gamma, beta, eps):
    mu = jnp.mean(x, axis=-1, keepdims=True)
    xc = x - mu
    var = jnp.mean(xc * xc, axis=-1, keepdims=True)
    return xc * jax.lax.rsqrt(var + eps) * gamma + beta


def _const_spec(shape):
    n = len(shape)
    return pl.BlockSpec(shape, lambda b: (0,) * n)


# ---------------------------------------------------------------------------
# Kernel 1: CameraSE + view_projection (fused)
# ---------------------------------------------------------------------------
def _camera_se_kernel(feat_ref, cam_ref, bn_ref, w1_ref, b1_ref, w2_ref, b2_ref,
                      w3_ref, b3_ref, wv_ref, bv_ref, o_ref, *, eps):
    feat = feat_ref[0]                                   # [P, C]
    cam = cam_ref[0]                                     # [P, 16]
    mean, var = bn_ref[0:1, :], bn_ref[1:2, :]
    gamma, beta = bn_ref[2:3, :], bn_ref[3:4, :]
    # TODO(synk): BatchNorm1d implemented in eval mode (running stats), not
    # training batch statistics.
    cam = (cam - mean) * jax.lax.rsqrt(var + eps) * gamma + beta
    h = jnp.maximum(_mm(cam, w1_ref[...]) + b1_ref[...], 0.0)
    h = jnp.maximum(_mm(h, w2_ref[...]) + b2_ref[...], 0.0)
    gate = jax.nn.sigmoid(_mm(h, w3_ref[...]) + b3_ref[...])
    f = feat * gate
    # TODO(synk): view_projection assumed to be a single 1x1 Conv1d.
    o_ref[0] = (_mm(f, wv_ref[...]) + bv_ref[...]).astype(o_ref.dtype)


def camera_se_view_proj(feat, cam, p):
    B, P, C = feat.shape
    wargs = (p["bn"], p["w1"], p["b1"], p["w2"], p["b2"],
             p["w3"], p["b3"], p["vp_w"], p["vp_b"])
    return pl.pallas_call(
        functools.partial(_camera_se_kernel, eps=_EPS_BN),
        out_shape=jax.ShapeDtypeStruct((B, P, C), jnp.float32),
        grid=(B,),
        in_specs=[pl.BlockSpec((1, P, C), lambda b: (b, 0, 0)),
                  pl.BlockSpec((1, P, cam.shape[-1]), lambda b: (b, 0, 0))]
                 + [_const_spec(a.shape) for a in wargs],
        out_specs=pl.BlockSpec((1, P, C), lambda b: (b, 0, 0)),
        compiler_params=pltpu.CompilerParams(dimension_semantics=("parallel",)),
    )(feat.astype(jnp.float32), cam.astype(jnp.float32), *wargs)


# ---------------------------------------------------------------------------
# Kernel 2: full TransformerDecoderLayer (cross_only=True), fused
# ---------------------------------------------------------------------------
def _decoder_kernel(x_ref, pos_ref, pe_w1_ref, pe_b1_ref, pe_w2_ref, pe_b2_ref,
                    wq_ref, bq_ref, wkv_ref, bkv_ref, wo_ref, bo_ref, ln_ref,
                    f_w1_ref, f_b1_ref, f_w2_ref, f_b2_ref, o_ref,
                    *, num_heads, eps):
    x = x_ref[0]                                         # [P, C]
    pos = pos_ref[0]                                     # [P, 9]
    C = x.shape[-1]
    Dh = C // num_heads
    scale = 1.0 / float(Dh) ** 0.5

    # Both positional MLPs (self_posembed / cross_posembed) in one pair of matmuls.
    h = jnp.maximum(_mm(pos, pe_w1_ref[...]) + pe_b1_ref[...], 0.0)   # [P, 2C]
    pe = _mm(h, pe_w2_ref[...]) + pe_b2_ref[...]                      # [P, 2C]
    q_in = x + pe[:, :C]                                 # query + self-pos embed
    kv_in = x + pe[:, C:]                                # key/value + cross-pos embed

    q = _mm(q_in, wq_ref[...]) + bq_ref[...]                          # [P, C]
    kv = _mm(kv_in, wkv_ref[...]) + bkv_ref[...]                      # [P, 2C]
    k = kv[:, :C]
    v = kv[:, C:]
    wo = wo_ref[...]

    # Multi-head attention: all heads inside the kernel; output projection folded
    # per head (concat_h(attn_h) @ Wo == sum_h attn_h @ Wo[h*Dh:(h+1)*Dh]).
    attn = None
    for hd in range(num_heads):
        lo, hi = hd * Dh, (hd + 1) * Dh
        s = jax.lax.dot_general(q[:, lo:hi].astype(_MXU_DTYPE),
                                k[:, lo:hi].astype(_MXU_DTYPE),
                                (((1,), (1,)), ((), ())),
                                preferred_element_type=jnp.float32) * scale
        s = s - jnp.max(s, axis=-1, keepdims=True)        # f32 softmax
        p = jnp.exp(s)
        p = p * pl.reciprocal(jnp.sum(p, axis=-1, keepdims=True), approx=True)
        oh = _mm(p, v[:, lo:hi])                                       # [P, Dh]
        contrib = _mm(oh, wo[lo:hi, :])                                # [P, C]
        attn = contrib if attn is None else attn + contrib
    attn = attn + bo_ref[...]

    # residual + norm2 (cross_only=True skips self-attn / norm1); dropout == identity
    y = _layernorm(x + attn, ln_ref[0:1, :], ln_ref[1:2, :], eps)
    # FFN + residual + norm3
    f = jnp.maximum(_mm(y, f_w1_ref[...]) + f_b1_ref[...], 0.0)
    f = _mm(f, f_w2_ref[...]) + f_b2_ref[...]
    o_ref[0] = _layernorm(y + f, ln_ref[2:3, :], ln_ref[3:4, :], eps).astype(o_ref.dtype)


def decoder_layer(x, pos, p, num_heads):
    B, P, C = x.shape
    wargs = (p["pe_w1"], p["pe_b1"], p["pe_w2"], p["pe_b2"],
             p["wq"], p["bq"], p["wkv"], p["bkv"], p["wo"], p["bo"], p["ln"],
             p["ffn_w1"], p["ffn_b1"], p["ffn_w2"], p["ffn_b2"])
    return pl.pallas_call(
        functools.partial(_decoder_kernel, num_heads=num_heads, eps=_EPS_LN),
        out_shape=jax.ShapeDtypeStruct((B, P, C), jnp.float32),
        grid=(B,),
        in_specs=[pl.BlockSpec((1, P, C), lambda b: (b, 0, 0)),
                  pl.BlockSpec((1, P, pos.shape[-1]), lambda b: (b, 0, 0))]
                 + [_const_spec(a.shape) for a in wargs],
        out_specs=pl.BlockSpec((1, P, C), lambda b: (b, 0, 0)),
        compiler_params=pltpu.CompilerParams(dimension_semantics=("parallel",)),
    )(x.astype(jnp.float32), pos.astype(jnp.float32), *wargs)


# ---------------------------------------------------------------------------
# Kernel 3: all prediction heads fused (concat W1, block-diagonal W2)
# ---------------------------------------------------------------------------
def _heads_kernel(x_ref, w1_ref, b1_ref, w2_ref, b2_ref, o_ref):
    x = x_ref[0]                                         # [P, C]
    h = jnp.maximum(_mm(x, w1_ref[...]) + b1_ref[...], 0.0)           # [P, 5C]
    o_ref[0] = (_mm(h, w2_ref[...]) + b2_ref[...]).astype(o_ref.dtype)


def prediction_heads(x, p):
    B, P, C = x.shape
    n_out = p["w2"].shape[-1]
    wargs = (p["w1"], p["b1"], p["w2"], p["b2"])
    return pl.pallas_call(
        _heads_kernel,
        out_shape=jax.ShapeDtypeStruct((B, P, n_out), jnp.float32),
        grid=(B,),
        in_specs=[pl.BlockSpec((1, P, C), lambda b: (b, 0, 0))]
                 + [_const_spec(a.shape) for a in wargs],
        out_specs=pl.BlockSpec((1, P, n_out), lambda b: (b, 0, 0)),
        compiler_params=pltpu.CompilerParams(dimension_semantics=("parallel",)),
    )(x.astype(jnp.float32), *wargs)


# ---------------------------------------------------------------------------
# JAX glue: ViewTransformer.forward
# ---------------------------------------------------------------------------
def inverse_sigmoid(x, eps=1e-5):
    x = jnp.clip(x, 0.0, 1.0)
    x1 = jnp.maximum(x, eps)
    x2 = jnp.maximum(1.0 - x, eps)
    return jnp.log(x1 / x2)


def view_transformer_forward(params, img_query_feat, img_query_pos_bev,
                             normal_img_query_pos, img_ret_dicts, camera_info,
                             *, test_cfg, num_heads):
    B, C, P = img_query_feat.shape

    # center_3d is sliced in the reference forward but never consumed afterwards.
    center_3d = jnp.transpose(img_ret_dicts[-1]["loc_cam_3d"], (0, 2, 1))[:, -P:]
    del center_3d

    feat = jnp.transpose(img_query_feat, (0, 2, 1)).astype(jnp.float32)   # [B,P,C]
    cam = jnp.transpose(camera_info, (0, 2, 1)).astype(jnp.float32)       # [B,P,16]

    # CameraSE gating + view_projection (single fused kernel).
    feat = camera_se_view_proj(feat, cam, params["camera"])

    # camera_t BEV normalization: present in the reference but its result is never
    # used downstream (dead code); kept for parity, DCE'd under jit.
    camera_R = cam[:, :, :9].reshape(B, P, 3, 3)
    camera_t = cam[:, :, 9:12].reshape(B, P, 3, 1)
    camera_t = -jnp.matmul(jnp.swapaxes(camera_R, -1, -2), camera_t)[..., 0]
    pc = test_cfg["pc_range"]
    gx = test_cfg["grid_size"][0] // test_cfg["out_size_factor"]
    tx = (camera_t[..., 0:1] - pc[0]) / (pc[3] - pc[0]) * gx
    ty = (camera_t[..., 1:2] - pc[1]) / (pc[4] - pc[1]) * gx   # grid_size[0] for both, as in reference
    _ = jnp.concatenate([tx, ty, camera_t[..., 2:3]], axis=-1)

    # decoder positional input: 7 BEV dims through inverse_sigmoid + 2 image dims
    pos7 = img_query_pos_bev[..., :7].astype(jnp.float32)
    qpos = jnp.concatenate([
        inverse_sigmoid((pos7[..., 0:2] + 12.0) / 204.0),
        inverse_sigmoid((pos7[..., 2:3] + 10.0) / 20.0),
        inverse_sigmoid((pos7[..., 3:5] + 1.0) / 2.0),
        pos7[..., 5:7],
        normal_img_query_pos.astype(jnp.float32),
    ], axis=-1)                                                           # [B,P,9]

    # TransformerDecoderLayer(cross_only=True) — one fused kernel.
    feat = decoder_layer(feat, qpos, params["decoder"], num_heads)

    # fused prediction heads -> [B, P, 10]
    heads_out = prediction_heads(feat, params["heads"])

    res_layer = {}
    off = 0
    for name, oc in _HEADS:
        res_layer[name] = jnp.transpose(heads_out[..., off:off + oc], (0, 2, 1))
        off += oc

    def bev_t(lo, hi):
        return jnp.transpose(img_query_pos_bev[..., lo:hi], (0, 2, 1))

    res_layer["center_mono"] = bev_t(0, 2)
    res_layer["height_mono"] = bev_t(2, 3)
    res_layer["rot_mono"] = bev_t(3, 5)
    res_layer["vel_mono"] = bev_t(5, 7)
    res_layer["dim_mono"] = bev_t(7, 10)
    res_layer["center_view"] = res_layer["center_view"] + bev_t(0, 2)

    new_img_query_pos_bev = jnp.transpose(res_layer["center_view"], (0, 2, 1))  # [B,P,2]
    img_query_feat_out = jnp.transpose(feat, (0, 2, 1))                         # [B,C,P]
    return img_query_feat_out, new_img_query_pos_bev, [res_layer]


# ---------------------------------------------------------------------------
# Deterministic parameter init (weights stored in the fused layouts)
# ---------------------------------------------------------------------------
def init_params(key, C, F):
    keys = iter(jax.random.split(key, 64))

    def w(shape, scale=0.1):
        return scale * jax.random.normal(next(keys), shape, jnp.float32)

    def b(n):
        return jnp.zeros((1, n), jnp.float32)

    camera = {
        # rows: running_mean, running_var, gamma, beta (BatchNorm1d(16), eval mode)
        "bn": jnp.stack([jnp.zeros((16,)), jnp.ones((16,)),
                         jnp.ones((16,)), jnp.zeros((16,))]).astype(jnp.float32),
        "w1": w((16, C)), "b1": b(C),
        "w2": w((C, C)), "b2": b(C),
        "w3": w((C, C)), "b3": b(C),
        "vp_w": w((C, C)), "vp_b": b(C),
    }

    pe_w2 = jnp.zeros((2 * C, 2 * C), jnp.float32)
    pe_w2 = pe_w2.at[:C, :C].set(w((C, C))).at[C:, C:].set(w((C, C)))
    decoder = {
        "pe_w1": jnp.concatenate([w((9, C)), w((9, C))], axis=1),   # [9, 2C]  self || cross
        "pe_b1": b(2 * C),
        "pe_w2": pe_w2,                                             # block-diag [2C, 2C]
        "pe_b2": b(2 * C),
        "wq": w((C, C)), "bq": b(C),
        "wkv": jnp.concatenate([w((C, C)), w((C, C))], axis=1),     # [C, 2C]  K || V
        "bkv": b(2 * C),
        "wo": w((C, C)), "bo": b(C),
        "ln": jnp.stack([jnp.ones((C,)), jnp.zeros((C,)),
                         jnp.ones((C,)), jnp.zeros((C,))]).astype(jnp.float32),
        "ffn_w1": w((C, F)), "ffn_b1": b(F),
        "ffn_w2": w((F, C)), "ffn_b2": b(C),
    }

    n_out = sum(oc for _, oc in _HEADS)
    hw2 = jnp.zeros((len(_HEADS) * C, n_out), jnp.float32)
    off = 0
    for i, (_, oc) in enumerate(_HEADS):
        hw2 = hw2.at[i * C:(i + 1) * C, off:off + oc].set(w((C, oc)))
        off += oc
    heads = {
        "w1": jnp.concatenate([w((C, C)) for _ in _HEADS], axis=1),  # [C, 5C]
        "b1": b(len(_HEADS) * C),
        "w2": hw2,                                                   # block-diag [5C, 10]
        "b2": b(n_out),
    }
    return {"camera": camera, "decoder": decoder, "heads": heads}


# ---------------------------------------------------------------------------
# Main
# ---------------------------------------------------------------------------
if __name__ == "__main__":
    B, C, P = 2, 32, 16
    NUM_HEADS = 4
    FFN = 64

    key = jax.random.PRNGKey(0)
    ks = iter(jax.random.split(key, 16))

    img_query_feat = jax.random.normal(next(ks), (B, C, P), jnp.float32)
    img_query_pos_bev = jax.random.normal(next(ks), (B, P, 10), jnp.float32)
    normal_img_query_pos = jax.random.uniform(next(ks), (B, P, 2), jnp.float32)
    camera_info = jax.random.normal(next(ks), (B, 16, P), jnp.float32)
    img_ret_dicts = [{"loc_cam_3d": jax.random.normal(next(ks), (B, 3, P), jnp.float32)}]

    test_cfg = {"pc_range": [-54.0, -54.0, -5.0, 54.0, 54.0, 3.0],
                "grid_size": [1440, 1440, 40], "out_size_factor": 8}

    params = init_params(jax.random.PRNGKey(42), C, FFN)

    fwd = jax.jit(functools.partial(view_transformer_forward,
                                    test_cfg=test_cfg, num_heads=NUM_HEADS))
    outs = fwd(params, img_query_feat, img_query_pos_bev,
               normal_img_query_pos, img_ret_dicts, camera_info)
    jax.block_until_ready(jax.tree_util.tree_leaves(outs))
    print("KERNEL_OK")
</pallas_src>

<mosaic_0001>
module attributes {stable_mosaic.version = 11 : i64} {
  func.func @_heads_kernel(%arg0: i32, %arg1: memref<1x16x32xf32, #tpu.memory_space<vmem>>, %arg2: memref<32x160xf32, #tpu.memory_space<vmem>>, %arg3: memref<1x160xf32, #tpu.memory_space<vmem>>, %arg4: memref<160x10xf32, #tpu.memory_space<vmem>>, %arg5: memref<1x10xf32, #tpu.memory_space<vmem>>, %arg6: memref<1x16x10xf32, #tpu.memory_space<vmem>>) attributes {dimension_semantics = [#tpu.dimension_semantics<parallel>], iteration_bounds = array<i64: 2>, scalar_prefetch = 0 : i64, scratch_operands = 0 : i64, tpu.core_type = #tpu.core_type<tc>, window_params = [{transform_indices = @transform_0, window_bounds = array<i64: 1, 16, 32>}, {pipeline_mode = #tpu.pipeline_mode<synchronous>, transform_indices = @transform_1, window_bounds = array<i64: 32, 160>}, {pipeline_mode = #tpu.pipeline_mode<synchronous>, transform_indices = @transform_2, window_bounds = array<i64: 1, 160>}, {pipeline_mode = #tpu.pipeline_mode<synchronous>, transform_indices = @transform_3, window_bounds = array<i64: 160, 10>}, {pipeline_mode = #tpu.pipeline_mode<synchronous>, transform_indices = @transform_4, window_bounds = array<i64: 1, 10>}, {transform_indices = @transform_5, window_bounds = array<i64: 1, 16, 10>}]} {
    %c0 = arith.constant 0 : index
    %c0_0 = arith.constant 0 : index
    %c0_1 = arith.constant 0 : index
    %0 = vector.load %arg1[%c0, %c0_0, %c0_1] : memref<1x16x32xf32, #tpu.memory_space<vmem>>, vector<1x16x32xf32>
    %1 = vector.shape_cast %0 : vector<1x16x32xf32> to vector<16x32xf32>
    %c0_2 = arith.constant 0 : index
    %c0_3 = arith.constant 0 : index
    %2 = vector.load %arg2[%c0_2, %c0_3] : memref<32x160xf32, #tpu.memory_space<vmem>>, vector<32x160xf32>
    %3 = arith.truncf %1 : vector<16x32xf32> to vector<16x32xbf16>
    %4 = arith.truncf %2 : vector<32x160xf32> to vector<32x160xbf16>
    %cst = arith.constant dense<0.000000e+00> : vector<16x160xf32>
    %5 = tpu.matmul %3, %4, %cst {dimension_numbers = #tpu.dot_dimension_numbers<[1], [0], [0], [1], [0, 0, 1, 1], [], []>} : vector<16x32xbf16>, vector<32x160xbf16>, vector<16x160xf32> -> vector<16x160xf32>
    %c0_4 = arith.constant 0 : index
    %c0_5 = arith.constant 0 : index
    %6 = vector.load %arg3[%c0_4, %c0_5] : memref<1x160xf32, #tpu.memory_space<vmem>>, vector<1x160xf32>
    %7 = vector.broadcast %6 : vector<1x160xf32> to vector<16x160xf32>
    %8 = arith.addf %5, %7 : vector<16x160xf32>
    %cst_6 = arith.constant 0.000000e+00 : f32
    %9 = vector.broadcast %cst_6 : f32 to vector<16x160xf32>
    %10 = arith.maximumf %8, %9 : vector<16x160xf32>
    %c0_7 = arith.constant 0 : index
    %c0_8 = arith.constant 0 : index
    %11 = vector.load %arg4[%c0_7, %c0_8] : memref<160x10xf32, #tpu.memory_space<vmem>>, vector<160x10xf32>
    %12 = arith.truncf %10 : vector<16x160xf32> to vector<16x160xbf16>
    %13 = arith.truncf %11 : vector<160x10xf32> to vector<160x10xbf16>
    %cst_9 = arith.constant dense<0.000000e+00> : vector<16x10xf32>
    %14 = tpu.matmul %12, %13, %cst_9 {dimension_numbers = #tpu.dot_dimension_numbers<[1], [0], [0], [1], [0, 0, 1, 1], [], []>} : vector<16x160xbf16>, vector<160x10xbf16>, vector<16x10xf32> -> vector<16x10xf32>
    %c0_10 = arith.constant 0 : index
    %c0_11 = arith.constant 0 : index
    %15 = vector.load %arg5[%c0_10, %c0_11] : memref<1x10xf32, #tpu.memory_space<vmem>>, vector<1x10xf32>
    %16 = vector.broadcast %15 : vector<1x10xf32> to vector<16x10xf32>
    %17 = arith.addf %14, %16 : vector<16x10xf32>
    %c0_12 = arith.constant 0 : index
    %c0_13 = arith.constant 0 : index
    %c0_14 = arith.constant 0 : index
    %18 = vector.load %arg6[%c0_12, %c0_13, %c0_14] : memref<1x16x10xf32, #tpu.memory_space<vmem>>, vector<1x16x10xf32>
    %19 = vector.shape_cast %18 : vector<1x16x10xf32> to vector<16x10xf32>
    %20 = vector.shape_cast %17 : vector<16x10xf32> to vector<1x16x10xf32>
    tpu.vector_store %arg6[%c0_12, %c0_13, %c0_14], %20 {strides = array<i32>} : memref<1x16x10xf32, #tpu.memory_space<vmem>>, vector<1x16x10xf32>,
    return
  }
  func.func @transform_0(%arg0: i32) -> (i32, i32, i32) {
    %c0_i32 = arith.constant 0 : i32
    %c0_i32_0 = arith.constant 0 : i32
    %c0_i32_1 = arith.constant 0 : i32
    return %arg0, %c0_i32, %c0_i32_0 : i32, i32, i32
  }
  func.func @transform_1(%arg0: i32) -> (i32, i32) {
    %c0_i32 = arith.constant 0 : i32
    %c0_i32_0 = arith.constant 0 : i32
    %c0_i32_1 = arith.constant 0 : i32
    return %c0_i32, %c0_i32_0 : i32, i32
  }
  func.func @transform_2(%arg0: i32) -> (i32, i32) {
    %c0_i32 = arith.constant 0 : i32
    %c0_i32_0 = arith.constant 0 : i32
    %c0_i32_1 = arith.constant 0 : i32
    return %c0_i32, %c0_i32_0 : i32, i32
  }
  func.func @transform_3(%arg0: i32) -> (i32, i32) {
    %c0_i32 = arith.constant 0 : i32
    %c0_i32_0 = arith.constant 0 : i32
    %c0_i32_1 = arith.constant 0 : i32
    return %c0_i32, %c0_i32_0 : i32, i32
  }
  func.func @transform_4(%arg0: i32) -> (i32, i32) {
    %c0_i32 = arith.constant 0 : i32
    %c0_i32_0 = arith.constant 0 : i32
    %c0_i32_1 = arith.constant 0 : i32
    return %c0_i32, %c0_i32_0 : i32, i32
  }
  func.func @transform_5(%arg0: i32) -> (i32, i32, i32) {
    %c0_i32 = arith.constant 0 : i32
    %c0_i32_0 = arith.constant 0 : i32
    %c0_i32_1 = arith.constant 0 : i32
    return %arg0, %c0_i32, %c0_i32_0 : i32, i32, i32
  }
}

module attributes {stable_mosaic.version = 11 : i64} {
  func.func @_camera_se_kernel(%arg0: i32, %arg1: memref<1x16x32xf32, #tpu.memory_space<vmem>>, %arg2: memref<1x16x16xf32, #tpu.memory_space<vmem>>, %arg3: memref<4x16xf32, #tpu.memory_space<vmem>>, %arg4: memref<16x32xf32, #tpu.memory_space<vmem>>, %arg5: memref<1x32xf32, #tpu.memory_space<vmem>>, %arg6: memref<32x32xf32, #tpu.memory_space<vmem>>, %arg7: memref<1x32xf32, #tpu.memory_space<vmem>>, %arg8: memref<32x32xf32, #tpu.memory_space<vmem>>, %arg9: memref<1x32xf32, #tpu.memory_space<vmem>>, %arg10: memref<32x32xf32, #tpu.memory_space<vmem>>, %arg11: memref<1x32xf32, #tpu.memory_space<vmem>>, %arg12: memref<1x16x32xf32, #tpu.memory_space<vmem>>) attributes {dimension_semantics = [#tpu.dimension_semantics<parallel>], iteration_bounds = array<i64: 2>, scalar_prefetch = 0 : i64, scratch_operands = 0 : i64, tpu.core_type = #tpu.core_type<tc>, window_params = [{transform_indices = @transform_0, window_bounds = array<i64: 1, 16, 32>}, {transform_indices = @transform_1, window_bounds = array<i64: 1, 16, 16>}, {pipeline_mode = #tpu.pipeline_mode<synchronous>, transform_indices = @transform_2, window_bounds = array<i64: 4, 16>}, {pipeline_mode = #tpu.pipeline_mode<synchronous>, transform_indices = @transform_3, window_bounds = array<i64: 16, 32>}, {pipeline_mode = #tpu.pipeline_mode<synchronous>, transform_indices = @transform_4, window_bounds = array<i64: 1, 32>}, {pipeline_mode = #tpu.pipeline_mode<synchronous>, transform_indices = @transform_5, window_bounds = array<i64: 32, 32>}, {pipeline_mode = #tpu.pipeline_mode<synchronous>, transform_indices = @transform_6, window_bounds = array<i64: 1, 32>}, {pipeline_mode = #tpu.pipeline_mode<synchronous>, transform_indices = @transform_7, window_bounds = array<i64: 32, 32>}, {pipeline_mode = #tpu.pipeline_mode<synchronous>, transform_indices = @transform_8, window_bounds = array<i64: 1, 32>}, {pipeline_mode = #tpu.pipeline_mode<synchronous>, transform_indices = @transform_9, window_bounds = array<i64: 32, 32>}, {pipeline_mode = #tpu.pipeline_mode<synchronous>, transform_indices = @transform_10, window_bounds = array<i64: 1, 32>}, {transform_indices = @transform_11, window_bounds = array<i64: 1, 16, 32>}]} {
    %c0 = arith.constant 0 : index
    %c0_0 = arith.constant 0 : index
    %c0_1 = arith.constant 0 : index
    %0 = vector.load %arg1[%c0, %c0_0, %c0_1] : memref<1x16x32xf32, #tpu.memory_space<vmem>>, vector<1x16x32xf32>
    %1 = vector.shape_cast %0 : vector<1x16x32xf32> to vector<16x32xf32>
    %c0_2 = arith.constant 0 : index
    %c0_3 = arith.constant 0 : index
    %c0_4 = arith.constant 0 : index
    %2 = vector.load %arg2[%c0_2, %c0_3, %c0_4] : memref<1x16x16xf32, #tpu.memory_space<vmem>>, vector<1x16x16xf32>
    %3 = vector.shape_cast %2 : vector<1x16x16xf32> to vector<16x16xf32>
    %c0_5 = arith.constant 0 : index
    %c0_6 = arith.constant 0 : index
    %4 = vector.load %arg3[%c0_5, %c0_6] : memref<4x16xf32, #tpu.memory_space<vmem>>, vector<1x16xf32>
    %c1 = arith.constant 1 : index
    %c0_7 = arith.constant 0 : index
    %5 = vector.load %arg3[%c1, %c0_7] : memref<4x16xf32, #tpu.memory_space<vmem>>, vector<1x16xf32>
    %c2 = arith.constant 2 : index
    %c0_8 = arith.constant 0 : index
    %6 = vector.load %arg3[%c2, %c0_8] : memref<4x16xf32, #tpu.memory_space<vmem>>, vector<1x16xf32>
    %c3 = arith.constant 3 : index
    %c0_9 = arith.constant 0 : index
    %7 = vector.load %arg3[%c3, %c0_9] : memref<4x16xf32, #tpu.memory_space<vmem>>, vector<1x16xf32>
    %8 = vector.broadcast %4 : vector<1x16xf32> to vector<16x16xf32>
    %9 = arith.subf %3, %8 : vector<16x16xf32>
    %cst = arith.constant 9.99999974E-6 : f32
    %10 = vector.broadcast %cst : f32 to vector<1x16xf32>
    %11 = arith.addf %5, %10 : vector<1x16xf32>
    %12 = math.rsqrt %11 : vector<1x16xf32>
    %13 = vector.broadcast %12 : vector<1x16xf32> to vector<16x16xf32>
    %14 = arith.mulf %9, %13 : vector<16x16xf32>
    %15 = vector.broadcast %6 : vector<1x16xf32> to vector<16x16xf32>
    %16 = arith.mulf %14, %15 : vector<16x16xf32>
    %17 = vector.broadcast %7 : vector<1x16xf32> to vector<16x16xf32>
    %18 = arith.addf %16, %17 : vector<16x16xf32>
    %c0_10 = arith.constant 0 : index
    %c0_11 = arith.constant 0 : index
    %19 = vector.load %arg4[%c0_10, %c0_11] : memref<16x32xf32, #tpu.memory_space<vmem>>, vector<16x32xf32>
    %20 = arith.truncf %18 : vector<16x16xf32> to vector<16x16xbf16>
    %21 = arith.truncf %19 : vector<16x32xf32> to vector<16x32xbf16>
    %cst_12 = arith.constant dense<0.000000e+00> : vector<16x32xf32>
    %22 = tpu.matmul %20, %21, %cst_12 {dimension_numbers = #tpu.dot_dimension_numbers<[1], [0], [0], [1], [0, 0, 1, 1], [], []>} : vector<16x16xbf16>, vector<16x32xbf16>, vector<16x32xf32> -> vector<16x32xf32>
    %c0_13 = arith.constant 0 : index
    %c0_14 = arith.constant 0 : index
    %23 = vector.load %arg5[%c0_13, %c0_14] : memref<1x32xf32, #tpu.memory_space<vmem>>, vector<1x32xf32>
    %24 = vector.broadcast %23 : vector<1x32xf32> to vector<16x32xf32>
    %25 = arith.addf %22, %24 : vector<16x32xf32>
    %cst_15 = arith.constant 0.000000e+00 : f32
    %26 = vector.broadcast %cst_15 : f32 to vector<16x32xf32>
    %27 = arith.maximumf %25, %26 : vector<16x32xf32>
    %c0_16 = arith.constant 0 : index
    %c0_17 = arith.constant 0 : index
    %28 = vector.load %arg6[%c0_16, %c0_17] : memref<32x32xf32, #tpu.memory_space<vmem>>, vector<32x32xf32>
    %29 = arith.truncf %27 : vector<16x32xf32> to vector<16x32xbf16>
    %30 = arith.truncf %28 : vector<32x32xf32> to vector<32x32xbf16>
    %cst_18 = arith.constant dense<0.000000e+00> : vector<16x32xf32>
    %31 = tpu.matmul %29, %30, %cst_18 {dimension_numbers = #tpu.dot_dimension_numbers<[1], [0], [0], [1], [0, 0, 1, 1], [], []>} : vector<16x32xbf16>, vector<32x32xbf16>, vector<16x32xf32> -> vector<16x32xf32>
    %c0_19 = arith.constant 0 : index
    %c0_20 = arith.constant 0 : index
    %32 = vector.load %arg7[%c0_19, %c0_20] : memref<1x32xf32, #tpu.memory_space<vmem>>, vector<1x32xf32>
    %33 = vector.broadcast %32 : vector<1x32xf32> to vector<16x32xf32>
    %34 = arith.addf %31, %33 : vector<16x32xf32>
    %cst_21 = arith.constant 0.000000e+00 : f32
    %35 = vector.broadcast %cst_21 : f32 to vector<16x32xf32>
    %36 = arith.maximumf %34, %35 : vector<16x32xf32>
    %c0_22 = arith.constant 0 : index
    %c0_23 = arith.constant 0 : index
    %37 = vector.load %arg8[%c0_22, %c0_23] : memref<32x32xf32, #tpu.memory_space<vmem>>, vector<32x32xf32>
    %38 = arith.truncf %36 : vector<16x32xf32> to vector<16x32xbf16>
    %39 = arith.truncf %37 : vector<32x32xf32> to vector<32x32xbf16>
    %cst_24 = arith.constant dense<0.000000e+00> : vector<16x32xf32>
    %40 = tpu.matmul %38, %39, %cst_24 {dimension_numbers = #tpu.dot_dimension_numbers<[1], [0], [0], [1], [0, 0, 1, 1], [], []>} : vector<16x32xbf16>, vector<32x32xbf16>, vector<16x32xf32> -> vector<16x32xf32>
    %c0_25 = arith.constant 0 : index
    %c0_26 = arith.constant 0 : index
    %41 = vector.load %arg9[%c0_25, %c0_26] : memref<1x32xf32, #tpu.memory_space<vmem>>, vector<1x32xf32>
    %42 = vector.broadcast %41 : vector<1x32xf32> to vector<16x32xf32>
    %43 = arith.addf %40, %42 : vector<16x32xf32>
    %44 = arith.negf %43 : vector<16x32xf32>
    %45 = math.exp %44 : vector<16x32xf32>
    %cst_27 = arith.constant 1.000000e+00 : f32
    %46 = vector.broadcast %cst_27 : f32 to vector<16x32xf32>
    %47 = arith.addf %46, %45 : vector<16x32xf32>
    %48 = arith.divf %46, %47 : vector<16x32xf32>
    %49 = arith.mulf %1, %48 : vector<16x32xf32>
    %c0_28 = arith.constant 0 : index
    %c0_29 = arith.constant 0 : index
    %50 = vector.load %arg10[%c0_28, %c0_29] : memref<32x32xf32, #tpu.memory_space<vmem>>, vector<32x32xf32>
    %51 = arith.truncf %49 : vector<16x32xf32> to vector<16x32xbf16>
    %52 = arith.truncf %50 : vector<32x32xf32> to vector<32x32xbf16>
    %cst_30 = arith.constant dense<0.000000e+00> : vector<16x32xf32>
    %53 = tpu.matmul %51, %52, %cst_30 {dimension_numbers = #tpu.dot_dimension_numbers<[1], [0], [0], [1], [0, 0, 1, 1], [], []>} : vector<16x32xbf16>, vector<32x32xbf16>, vector<16x32xf32> -> vector<16x32xf32>
    %c0_31 = arith.constant 0 : index
    %c0_32 = arith.constant 0 : index
    %54 = vector.load %arg11[%c0_31, %c0_32] : memref<1x32xf32, #tpu.memory_space<vmem>>, vector<1x32xf32>
    %55 = vector.broadcast %54 : vector<1x32xf32> to vector<16x32xf32>
    %56 = arith.addf %53, %55 : vector<16x32xf32>
    %c0_33 = arith.constant 0 : index
    %c0_34 = arith.constant 0 : index
    %c0_35 = arith.constant 0 : index
    %57 = vector.load %arg12[%c0_33, %c0_34, %c0_35] : memref<1x16x32xf32, #tpu.memory_space<vmem>>, vector<1x16x32xf32>
    %58 = vector.shape_cast %57 : vector<1x16x32xf32> to vector<16x32xf32>
    %59 = vector.shape_cast %56 : vector<16x32xf32> to vector<1x16x32xf32>
    tpu.vector_store %arg12[%c0_33, %c0_34, %c0_35], %59 {strides = array<i32>} : memref<1x16x32xf32, #tpu.memory_space<vmem>>, vector<1x16x32xf32>,
    return
  }
  func.func @transform_0(%arg0: i32) -> (i32, i32, i32) {
    %c0_i32 = arith.constant 0 : i32
    %c0_i32_0 = arith.constant 0 : i32
    %c0_i32_1 = arith.constant 0 : i32
    return %arg0, %c0_i32, %c0_i32_0 : i32, i32, i32
  }
  func.func @transform_1(%arg0: i32) -> (i32, i32, i32) {
    %c0_i32 = arith.constant 0 : i32
    %c0_i32_0 = arith.constant 0 : i32
    %c0_i32_1 = arith.constant 0 : i32
    return %arg0, %c0_i32, %c0_i32_0 : i32, i32, i32
  }
  func.func @transform_2(%arg0: i32) -> (i32, i32) {
    %c0_i32 = arith.constant 0 : i32
    %c0_i32_0 = arith.constant 0 : i32
    %c0_i32_1 = arith.constant 0 : i32
    return %c0_i32, %c0_i32_0 : i32, i32
  }
  func.func @transform_3(%arg0: i32) -> (i32, i32) {
    %c0_i32 = arith.constant 0 : i32
    %c0_i32_0 = arith.constant 0 : i32
    %c0_i32_1 = arith.constant 0 : i32
    return %c0_i32, %c0_i32_0 : i32, i32
  }
  func.func @transform_4(%arg0: i32) -> (i32, i32) {
    %c0_i32 = arith.constant 0 : i32
    %c0_i32_0 = arith.constant 0 : i32
    %c0_i32_1 = arith.constant 0 : i32
    return %c0_i32, %c0_i32_0 : i32, i32
  }
  func.func @transform_5(%arg0: i32) -> (i32, i32) {
    %c0_i32 = arith.constant 0 : i32
    %c0_i32_0 = arith.constant 0 : i32
    %c0_i32_1 = arith.constant 0 : i32
    return %c0_i32, %c0_i32_0 : i32, i32
  }
  func.func @transform_6(%arg0: i32) -> (i32, i32) {
    %c0_i32 = arith.constant 0 : i32
    %c0_i32_0 = arith.constant 0 : i32
    %c0_i32_1 = arith.constant 0 : i32
    return %c0_i32, %c0_i32_0 : i32, i32
  }
  func.func @transform_7(%arg0: i32) -> (i32, i32) {
    %c0_i32 = arith.constant 0 : i32
    %c0_i32_0 = arith.constant 0 : i32
    %c0_i32_1 = arith.constant 0 : i32
    return %c0_i32, %c0_i32_0 : i32, i32
  }
  func.func @transform_8(%arg0: i32) -> (i32, i32) {
    %c0_i32 = arith.constant 0 : i32
    %c0_i32_0 = arith.constant 0 : i32
    %c0_i32_1 = arith.constant 0 : i32
    return %c0_i32, %c0_i32_0 : i32, i32
  }
  func.func @transform_9(%arg0: i32) -> (i32, i32) {
    %c0_i32 = arith.constant 0 : i32
    %c0_i32_0 = arith.constant 0 : i32
    %c0_i32_1 = arith.constant 0 : i32
    return %c0_i32, %c0_i32_0 : i32, i32
  }
  func.func @transform_10(%arg0: i32) -> (i32, i32) {
    %c0_i32 = arith.constant 0 : i32
    %c0_i32_0 = arith.constant 0 : i32
    %c0_i32_1 = arith.constant 0 : i32
    return %c0_i32, %c0_i32_0 : i32, i32
  }
  func.func @transform_11(%arg0: i32) -> (i32, i32, i32) {
    %c0_i32 = arith.constant 0 : i32
    %c0_i32_0 = arith.constant 0 : i32
    %c0_i32_1 = arith.constant 0 : i32
    return %arg0, %c0_i32, %c0_i32_0 : i32, i32, i32
  }
}

module attributes {stable_mosaic.version = 11 : i64} {
  func.func @_decoder_kernel(%arg0: i32, %arg1: memref<1x16x32xf32, #tpu.memory_space<vmem>>, %arg2: memref<1x16x9xf32, #tpu.memory_space<vmem>>, %arg3: memref<9x64xf32, #tpu.memory_space<vmem>>, %arg4: memref<1x64xf32, #tpu.memory_space<vmem>>, %arg5: memref<64x64xf32, #tpu.memory_space<vmem>>, %arg6: memref<1x64xf32, #tpu.memory_space<vmem>>, %arg7: memref<32x32xf32, #tpu.memory_space<vmem>>, %arg8: memref<1x32xf32, #tpu.memory_space<vmem>>, %arg9: memref<32x64xf32, #tpu.memory_space<vmem>>, %arg10: memref<1x64xf32, #tpu.memory_space<vmem>>, %arg11: memref<32x32xf32, #tpu.memory_space<vmem>>, %arg12: memref<1x32xf32, #tpu.memory_space<vmem>>, %arg13: memref<4x32xf32, #tpu.memory_space<vmem>>, %arg14: memref<32x64xf32, #tpu.memory_space<vmem>>, %arg15: memref<1x64xf32, #tpu.memory_space<vmem>>, %arg16: memref<64x32xf32, #tpu.memory_space<vmem>>, %arg17: memref<1x32xf32, #tpu.memory_space<vmem>>, %arg18: memref<1x16x32xf32, #tpu.memory_space<vmem>>) attributes {dimension_semantics = [#tpu.dimension_semantics<parallel>], iteration_bounds = array<i64: 2>, scalar_prefetch = 0 : i64, scratch_operands = 0 : i64, tpu.core_type = #tpu.core_type<tc>, window_params = [{transform_indices = @transform_0, window_bounds = array<i64: 1, 16, 32>}, {transform_indices = @transform_1, window_bounds = array<i64: 1, 16, 9>}, {pipeline_mode = #tpu.pipeline_mode<synchronous>, transform_indices = @transform_2, window_bounds = array<i64: 9, 64>}, {pipeline_mode = #tpu.pipeline_mode<synchronous>, transform_indices = @transform_3, window_bounds = array<i64: 1, 64>}, {pipeline_mode = #tpu.pipeline_mode<synchronous>, transform_indices = @transform_4, window_bounds = array<i64: 64, 64>}, {pipeline_mode = #tpu.pipeline_mode<synchronous>, transform_indices = @transform_5, window_bounds = array<i64: 1, 64>}, {pipeline_mode = #tpu.pipeline_mode<synchronous>, transform_indices = @transform_6, window_bounds = array<i64: 32, 32>}, {pipeline_mode = #tpu.pipeline_mode<synchronous>, transform_indices = @transform_7, window_bounds = array<i64: 1, 32>}, {pipeline_mode = #tpu.pipeline_mode<synchronous>, transform_indices = @transform_8, window_bounds = array<i64: 32, 64>}, {pipeline_mode = #tpu.pipeline_mode<synchronous>, transform_indices = @transform_9, window_bounds = array<i64: 1, 64>}, {pipeline_mode = #tpu.pipeline_mode<synchronous>, transform_indices = @transform_10, window_bounds = array<i64: 32, 32>}, {pipeline_mode = #tpu.pipeline_mode<synchronous>, transform_indices = @transform_11, window_bounds = array<i64: 1, 32>}, {pipeline_mode = #tpu.pipeline_mode<synchronous>, transform_indices = @transform_12, window_bounds = array<i64: 4, 32>}, {pipeline_mode = #tpu.pipeline_mode<synchronous>, transform_indices = @transform_13, window_bounds = array<i64: 32, 64>}, {pipeline_mode = #tpu.pipeline_mode<synchronous>, transform_indices = @transform_14, window_bounds = array<i64: 1, 64>}, {pipeline_mode = #tpu.pipeline_mode<synchronous>, transform_indices = @transform_15, window_bounds = array<i64: 64, 32>}, {pipeline_mode = #tpu.pipeline_mode<synchronous>, transform_indices = @transform_16, window_bounds = array<i64: 1, 32>}, {transform_indices = @transform_17, window_bounds = array<i64: 1, 16, 32>}]} {
    %c0 = arith.constant 0 : index
    %c0_0 = arith.constant 0 : index
    %c0_1 = arith.constant 0 : index
    %0 = vector.load %arg1[%c0, %c0_0, %c0_1] : memref<1x16x32xf32, #tpu.memory_space<vmem>>, vector<1x16x32xf32>
    %1 = vector.shape_cast %0 : vector<1x16x32xf32> to vector<16x32xf32>
    %c0_2 = arith.constant 0 : index
    %c0_3 = arith.constant 0 : index
    %c0_4 = arith.constant 0 : index
    %2 = vector.load %arg2[%c0_2, %c0_3, %c0_4] : memref<1x16x9xf32, #tpu.memory_space<vmem>>, vector<1x16x9xf32>
    %3 = vector.shape_cast %2 : vector<1x16x9xf32> to vector<16x9xf32>
    %c0_5 = arith.constant 0 : index
    %c0_6 = arith.constant 0 : index
    %4 = vector.load %arg3[%c0_5, %c0_6] : memref<9x64xf32, #tpu.memory_space<vmem>>, vector<9x64xf32>
    %5 = arith.truncf %3 : vector<16x9xf32> to vector<16x9xbf16>
    %6 = arith.truncf %4 : vector<9x64xf32> to vector<9x64xbf16>
    %cst = arith.constant dense<0.000000e+00> : vector<16x64xf32>
    %7 = tpu.matmul %5, %6, %cst {dimension_numbers = #tpu.dot_dimension_numbers<[1], [0], [0], [1], [0, 0, 1, 1], [], []>} : vector<16x9xbf16>, vector<9x64xbf16>, vector<16x64xf32> -> vector<16x64xf32>
    %c0_7 = arith.constant 0 : index
    %c0_8 = arith.constant 0 : index
    %8 = vector.load %arg4[%c0_7, %c0_8] : memref<1x64xf32, #tpu.memory_space<vmem>>, vector<1x64xf32>
    %9 = vector.broadcast %8 : vector<1x64xf32> to vector<16x64xf32>
    %10 = arith.addf %7, %9 : vector<16x64xf32>
    %cst_9 = arith.constant 0.000000e+00 : f32
    %11 = vector.broadcast %cst_9 : f32 to vector<16x64xf32>
    %12 = arith.maximumf %10, %11 : vector<16x64xf32>
    %c0_10 = arith.constant 0 : index
    %c0_11 = arith.constant 0 : index
    %13 = vector.load %arg5[%c0_10, %c0_11] : memref<64x64xf32, #tpu.memory_space<vmem>>, vector<64x64xf32>
    %14 = arith.truncf %12 : vector<16x64xf32> to vector<16x64xbf16>
    %15 = arith.truncf %13 : vector<64x64xf32> to vector<64x64xbf16>
    %cst_12 = arith.constant dense<0.000000e+00> : vector<16x64xf32>
    %16 = tpu.matmul %14, %15, %cst_12 {dimension_numbers = #tpu.dot_dimension_numbers<[1], [0], [0], [1], [0, 0, 1, 1], [], []>} : vector<16x64xbf16>, vector<64x64xbf16>, vector<16x64xf32> -> vector<16x64xf32>
    %c0_13 = arith.constant 0 : index
    %c0_14 = arith.constant 0 : index
    %17 = vector.load %arg6[%c0_13, %c0_14] : memref<1x64xf32, #tpu.memory_space<vmem>>, vector<1x64xf32>
    %18 = vector.broadcast %17 : vector<1x64xf32> to vector<16x64xf32>
    %19 = arith.addf %16, %18 : vector<16x64xf32>
    %20 = vector.extract_strided_slice %19 {offsets = [0, 0], sizes = [16, 32], strides = [1, 1]} : vector<16x64xf32> to vector<16x32xf32>
    %21 = arith.addf %1, %20 : vector<16x32xf32>
    %22 = vector.extract_strided_slice %19 {offsets = [0, 32], sizes = [16, 32], strides = [1, 1]} : vector<16x64xf32> to vector<16x32xf32>
    %23 = arith.addf %1, %22 : vector<16x32xf32>
    %c0_15 = arith.constant 0 : index
    %c0_16 = arith.constant 0 : index
    %24 = vector.load %arg7[%c0_15, %c0_16] : memref<32x32xf32, #tpu.memory_space<vmem>>, vector<32x32xf32>
    %25 = arith.truncf %21 : vector<16x32xf32> to vector<16x32xbf16>
    %26 = arith.truncf %24 : vector<32x32xf32> to vector<32x32xbf16>
    %cst_17 = arith.constant dense<0.000000e+00> : vector<16x32xf32>
    %27 = tpu.matmul %25, %26, %cst_17 {dimension_numbers = #tpu.dot_dimension_numbers<[1], [0], [0], [1], [0, 0, 1, 1], [], []>} : vector<16x32xbf16>, vector<32x32xbf16>, vector<16x32xf32> -> vector<16x32xf32>
    %c0_18 = arith.constant 0 : index
    %c0_19 = arith.constant 0 : index
    %28 = vector.load %arg8[%c0_18, %c0_19] : memref<1x32xf32, #tpu.memory_space<vmem>>, vector<1x32xf32>
    %29 = vector.broadcast %28 : vector<1x32xf32> to vector<16x32xf32>
    %30 = arith.addf %27, %29 : vector<16x32xf32>
    %c0_20 = arith.constant 0 : index
    %c0_21 = arith.constant 0 : index
    %31 = vector.load %arg9[%c0_20, %c0_21] : memref<32x64xf32, #tpu.memory_space<vmem>>, vector<32x64xf32>
    %32 = arith.truncf %23 : vector<16x32xf32> to vector<16x32xbf16>
    %33 = arith.truncf %31 : vector<32x64xf32> to vector<32x64xbf16>
    %cst_22 = arith.constant dense<0.000000e+00> : vector<16x64xf32>
    %34 = tpu.matmul %32, %33, %cst_22 {dimension_numbers = #tpu.dot_dimension_numbers<[1], [0], [0], [1], [0, 0, 1, 1], [], []>} : vector<16x32xbf16>, vector<32x64xbf16>, vector<16x64xf32> -> vector<16x64xf32>
    %c0_23 = arith.constant 0 : index
    %c0_24 = arith.constant 0 : index
    %35 = vector.load %arg10[%c0_23, %c0_24] : memref<1x64xf32, #tpu.memory_space<vmem>>, vector<1x64xf32>
    %36 = vector.broadcast %35 : vector<1x64xf32> to vector<16x64xf32>
    %37 = arith.addf %34, %36 : vector<16x64xf32>
    %38 = vector.extract_strided_slice %37 {offsets = [0, 0], sizes = [16, 32], strides = [1, 1]} : vector<16x64xf32> to vector<16x32xf32>
    %39 = vector.extract_strided_slice %37 {offsets = [0, 32], sizes = [16, 32], strides = [1, 1]} : vector<16x64xf32> to vector<16x32xf32>
    %c0_25 = arith.constant 0 : index
    %c0_26 = arith.constant 0 : index
    %40 = vector.load %arg11[%c0_25, %c0_26] : memref<32x32xf32, #tpu.memory_space<vmem>>, vector<32x32xf32>
    %41 = vector.extract_strided_slice %30 {offsets = [0, 0], sizes = [16, 8], strides = [1, 1]} : vector<16x32xf32> to vector<16x8xf32>
    %42 = arith.truncf %41 : vector<16x8xf32> to vector<16x8xbf16>
    %43 = vector.extract_strided_slice %38 {offsets = [0, 0], sizes = [16, 8], strides = [1, 1]} : vector<16x32xf32> to vector<16x8xf32>
    %44 = arith.truncf %43 : vector<16x8xf32> to vector<16x8xbf16>
    %cst_27 = arith.constant dense<0.000000e+00> : vector<16x16xf32>
    %45 = tpu.matmul %42, %44, %cst_27 {dimension_numbers = #tpu.dot_dimension_numbers<[1], [1], [0], [0], [0, 0, 1, 0], [], []>} : vector<16x8xbf16>, vector<16x8xbf16>, vector<16x16xf32> -> vector<16x16xf32>
    %cst_28 = arith.constant 0.353553385 : f32
    %46 = vector.broadcast %cst_28 : f32 to vector<16x16xf32>
    %47 = arith.mulf %45, %46 : vector<16x16xf32>
    %cst_29 = arith.constant dense<0xFF800000> : vector<16xf32>
    %48 = vector.multi_reduction <maximumf>, %47, %cst_29 [1] : vector<16x16xf32> to vector<16xf32>
    %49 = vector.shape_cast %48 : vector<16xf32> to vector<16x1xf32>
    %50 = vector.broadcast %49 : vector<16x1xf32> to vector<16x16xf32>
    %51 = arith.subf %47, %50 : vector<16x16xf32>
    %52 = math.exp %51 : vector<16x16xf32>
    %cst_30 = arith.constant dense<0.000000e+00> : vector<16xf32>
    %53 = vector.multi_reduction <add>, %52, %cst_30 [1] : vector<16x16xf32> to vector<16xf32>
    %54 = vector.shape_cast %53 : vector<16xf32> to vector<16x1xf32>
    %55 = tpu.reciprocal %54 {approx = true} : vector<16x1xf32> -> vector<16x1xf32>
    %56 = vector.broadcast %55 : vector<16x1xf32> to vector<16x16xf32>
    %57 = arith.mulf %52, %56 : vector<16x16xf32>
    %58 = vector.extract_strided_slice %39 {offsets = [0, 0], sizes = [16, 8], strides = [1, 1]} : vector<16x32xf32> to vector<16x8xf32>
    %59 = arith.truncf %57 : vector<16x16xf32> to vector<16x16xbf16>
    %60 = arith.truncf %58 : vector<16x8xf32> to vector<16x8xbf16>
    %cst_31 = arith.constant dense<0.000000e+00> : vector<16x8xf32>
    %61 = tpu.matmul %59, %60, %cst_31 {dimension_numbers = #tpu.dot_dimension_numbers<[1], [0], [0], [1], [0, 0, 1, 1], [], []>} : vector<16x16xbf16>, vector<16x8xbf16>, vector<16x8xf32> -> vector<16x8xf32>
    %62 = vector.extract_strided_slice %40 {offsets = [0, 0], sizes = [8, 32], strides = [1, 1]} : vector<32x32xf32> to vector<8x32xf32>
    %63 = arith.truncf %61 : vector<16x8xf32> to vector<16x8xbf16>
    %64 = arith.truncf %62 : vector<8x32xf32> to vector<8x32xbf16>
    %cst_32 = arith.constant dense<0.000000e+00> : vector<16x32xf32>
    %65 = tpu.matmul %63, %64, %cst_32 {dimension_numbers = #tpu.dot_dimension_numbers<[1], [0], [0], [1], [0, 0, 1, 1], [], []>} : vector<16x8xbf16>, vector<8x32xbf16>, vector<16x32xf32> -> vector<16x32xf32>
    %66 = vector.extract_strided_slice %30 {offsets = [0, 8], sizes = [16, 8], strides = [1, 1]} : vector<16x32xf32> to vector<16x8xf32>
    %67 = arith.truncf %66 : vector<16x8xf32> to vector<16x8xbf16>
    %68 = vector.extract_strided_slice %38 {offsets = [0, 8], sizes = [16, 8], strides = [1, 1]} : vector<16x32xf32> to vector<16x8xf32>
    %69 = arith.truncf %68 : vector<16x8xf32> to vector<16x8xbf16>
    %cst_33 = arith.constant dense<0.000000e+00> : vector<16x16xf32>
    %70 = tpu.matmul %67, %69, %cst_33 {dimension_numbers = #tpu.dot_dimension_numbers<[1], [1], [0], [0], [0, 0, 1, 0], [], []>} : vector<16x8xbf16>, vector<16x8xbf16>, vector<16x16xf32> -> vector<16x16xf32>
    %cst_34 = arith.constant 0.353553385 : f32
    %71 = vector.broadcast %cst_34 : f32 to vector<16x16xf32>
    %72 = arith.mulf %70, %71 : vector<16x16xf32>
    %cst_35 = arith.constant dense<0xFF800000> : vector<16xf32>
    %73 = vector.multi_reduction <maximumf>, %72, %cst_35 [1] : vector<16x16xf32> to vector<16xf32>
    %74 = vector.shape_cast %73 : vector<16xf32> to vector<16x1xf32>
    %75 = vector.broadcast %74 : vector<16x1xf32> to vector<16x16xf32>
    %76 = arith.subf %72, %75 : vector<16x16xf32>
    %77 = math.exp %76 : vector<16x16xf32>
    %cst_36 = arith.constant dense<0.000000e+00> : vector<16xf32>
    %78 = vector.multi_reduction <add>, %77, %cst_36 [1] : vector<16x16xf32> to vector<16xf32>
    %79 = vector.shape_cast %78 : vector<16xf32> to vector<16x1xf32>
    %80 = tpu.reciprocal %79 {approx = true} : vector<16x1xf32> -> vector<16x1xf32>
    %81 = vector.broadcast %80 : vector<16x1xf32> to vector<16x16xf32>
    %82 = arith.mulf %77, %81 : vector<16x16xf32>
    %83 = vector.extract_strided_slice %39 {offsets = [0, 8], sizes = [16, 8], strides = [1, 1]} : vector<16x32xf32> to vector<16x8xf32>
    %84 = arith.truncf %82 : vector<16x16xf32> to vector<16x16xbf16>
    %85 = arith.truncf %83 : vector<16x8xf32> to vector<16x8xbf16>
    %cst_37 = arith.constant dense<0.000000e+00> : vector<16x8xf32>
    %86 = tpu.matmul %84, %85, %cst_37 {dimension_numbers = #tpu.dot_dimension_numbers<[1], [0], [0], [1], [0, 0, 1, 1], [], []>} : vector<16x16xbf16>, vector<16x8xbf16>, vector<16x8xf32> -> vector<16x8xf32>
    %87 = vector.extract_strided_slice %40 {offsets = [8, 0], sizes = [8, 32], strides = [1, 1]} : vector<32x32xf32> to vector<8x32xf32>
    %88 = arith.truncf %86 : vector<16x8xf32> to vector<16x8xbf16>
    %89 = arith.truncf %87 : vector<8x32xf32> to vector<8x32xbf16>
    %cst_38 = arith.constant dense<0.000000e+00> : vector<16x32xf32>
    %90 = tpu.matmul %88, %89, %cst_38 {dimension_numbers = #tpu.dot_dimension_numbers<[1], [0], [0], [1], [0, 0, 1, 1], [], []>} : vector<16x8xbf16>, vector<8x32xbf16>, vector<16x32xf32> -> vector<16x32xf32>
    %91 = arith.addf %65, %90 : vector<16x32xf32>
    %92 = vector.extract_strided_slice %30 {offsets = [0, 16], sizes = [16, 8], strides = [1, 1]} : vector<16x32xf32> to vector<16x8xf32>
    %93 = arith.truncf %92 : vector<16x8xf32> to vector<16x8xbf16>
    %94 = vector.extract_strided_slice %38 {offsets = [0, 16], sizes = [16, 8], strides = [1, 1]} : vector<16x32xf32> to vector<16x8xf32>
    %95 = arith.truncf %94 : vector<16x8xf32> to vector<16x8xbf16>
    %cst_39 = arith.constant dense<0.000000e+00> : vector<16x16xf32>
    %96 = tpu.matmul %93, %95, %cst_39 {dimension_numbers = #tpu.dot_dimension_numbers<[1], [1], [0], [0], [0, 0, 1, 0], [], []>} : vector<16x8xbf16>, vector<16x8xbf16>, vector<16x16xf32> -> vector<16x16xf32>
    %cst_40 = arith.constant 0.353553385 : f32
    %97 = vector.broadcast %cst_40 : f32 to vector<16x16xf32>
    %98 = arith.mulf %96, %97 : vector<16x16xf32>
    %cst_41 = arith.constant dense<0xFF800000> : vector<16xf32>
    %99 = vector.multi_reduction <maximumf>, %98, %cst_41 [1] : vector<16x16xf32> to vector<16xf32>
    %100 = vector.shape_cast %99 : vector<16xf32> to vector<16x1xf32>
    %101 = vector.broadcast %100 : vector<16x1xf32> to vector<16x16xf32>
    %102 = arith.subf %98, %101 : vector<16x16xf32>
    %103 = math.exp %102 : vector<16x16xf32>
    %cst_42 = arith.constant dense<0.000000e+00> : vector<16xf32>
    %104 = vector.multi_reduction <add>, %103, %cst_42 [1] : vector<16x16xf32> to vector<16xf32>
    %105 = vector.shape_cast %104 : vector<16xf32> to vector<16x1xf32>
    %106 = tpu.reciprocal %105 {approx = true} : vector<16x1xf32> -> vector<16x1xf32>
    %107 = vector.broadcast %106 : vector<16x1xf32> to vector<16x16xf32>
    %108 = arith.mulf %103, %107 : vector<16x16xf32>
    %109 = vector.extract_strided_slice %39 {offsets = [0, 16], sizes = [16, 8], strides = [1, 1]} : vector<16x32xf32> to vector<16x8xf32>
    %110 = arith.truncf %108 : vector<16x16xf32> to vector<16x16xbf16>
    %111 = arith.truncf %109 : vector<16x8xf32> to vector<16x8xbf16>
    %cst_43 = arith.constant dense<0.000000e+00> : vector<16x8xf32>
    %112 = tpu.matmul %110, %111, %cst_43 {dimension_numbers = #tpu.dot_dimension_numbers<[1], [0], [0], [1], [0, 0, 1, 1], [], []>} : vector<16x16xbf16>, vector<16x8xbf16>, vector<16x8xf32> -> vector<16x8xf32>
    %113 = vector.extract_strided_slice %40 {offsets = [16, 0], sizes = [8, 32], strides = [1, 1]} : vector<32x32xf32> to vector<8x32xf32>
    %114 = arith.truncf %112 : vector<16x8xf32> to vector<16x8xbf16>
    %115 = arith.truncf %113 : vector<8x32xf32> to vector<8x32xbf16>
    %cst_44 = arith.constant dense<0.000000e+00> : vector<16x32xf32>
    %116 = tpu.matmul %114, %115, %cst_44 {dimension_numbers = #tpu.dot_dimension_numbers<[1], [0], [0], [1], [0, 0, 1, 1], [], []>} : vector<16x8xbf16>, vector<8x32xbf16>, vector<16x32xf32> -> vector<16x32xf32>
    %117 = arith.addf %91, %116 : vector<16x32xf32>
    %118 = vector.extract_strided_slice %30 {offsets = [0, 24], sizes = [16, 8], strides = [1, 1]} : vector<16x32xf32> to vector<16x8xf32>
    %119 = arith.truncf %118 : vector<16x8xf32> to vector<16x8xbf16>
    %120 = vector.extract_strided_slice %38 {offsets = [0, 24], sizes = [16, 8], strides = [1, 1]} : vector<16x32xf32> to vector<16x8xf32>
    %121 = arith.truncf %120 : vector<16x8xf32> to vector<16x8xbf16>
    %cst_45 = arith.constant dense<0.000000e+00> : vector<16x16xf32>
    %122 = tpu.matmul %119, %121, %cst_45 {dimension_numbers = #tpu.dot_dimension_numbers<[1], [1], [0], [0], [0, 0, 1, 0], [], []>} : vector<16x8xbf16>, vector<16x8xbf16>, vector<16x16xf32> -> vector<16x16xf32>
    %cst_46 = arith.constant 0.353553385 : f32
    %123 = vector.broadcast %cst_46 : f32 to vector<16x16xf32>
    %124 = arith.mulf %122, %123 : vector<16x16xf32>
    %cst_47 = arith.constant dense<0xFF800000> : vector<16xf32>
    %125 = vector.multi_reduction <maximumf>, %124, %cst_47 [1] : vector<16x16xf32> to vector<16xf32>
    %126 = vector.shape_cast %125 : vector<16xf32> to vector<16x1xf32>
    %127 = vector.broadcast %126 : vector<16x1xf32> to vector<16x16xf32>
    %128 = arith.subf %124, %127 : vector<16x16xf32>
    %129 = math.exp %128 : vector<16x16xf32>
    %cst_48 = arith.constant dense<0.000000e+00> : vector<16xf32>
    %130 = vector.multi_reduction <add>, %129, %cst_48 [1] : vector<16x16xf32> to vector<16xf32>
    %131 = vector.shape_cast %130 : vector<16xf32> to vector<16x1xf32>
    %132 = tpu.reciprocal %131 {approx = true} : vector<16x1xf32> -> vector<16x1xf32>
    %133 = vector.broadcast %132 : vector<16x1xf32> to vector<16x16xf32>
    %134 = arith.mulf %129, %133 : vector<16x16xf32>
    %135 = vector.extract_strided_slice %39 {offsets = [0, 24], sizes = [16, 8], strides = [1, 1]} : vector<16x32xf32> to vector<16x8xf32>
    %136 = arith.truncf %134 : vector<16x16xf32> to vector<16x16xbf16>
    %137 = arith.truncf %135 : vector<16x8xf32> to vector<16x8xbf16>
    %cst_49 = arith.constant dense<0.000000e+00> : vector<16x8xf32>
    %138 = tpu.matmul %136, %137, %cst_49 {dimension_numbers = #tpu.dot_dimension_numbers<[1], [0], [0], [1], [0, 0, 1, 1], [], []>} : vector<16x16xbf16>, vector<16x8xbf16>, vector<16x8xf32> -> vector<16x8xf32>
    %139 = vector.extract_strided_slice %40 {offsets = [24, 0], sizes = [8, 32], strides = [1, 1]} : vector<32x32xf32> to vector<8x32xf32>
    %140 = arith.truncf %138 : vector<16x8xf32> to vector<16x8xbf16>
    %141 = arith.truncf %139 : vector<8x32xf32> to vector<8x32xbf16>
    %cst_50 = arith.constant dense<0.000000e+00> : vector<16x32xf32>
    %142 = tpu.matmul %140, %141, %cst_50 {dimension_numbers = #tpu.dot_dimension_numbers<[1], [0], [0], [1], [0, 0, 1, 1], [], []>} : vector<16x8xbf16>, vector<8x32xbf16>, vector<16x32xf32> -> vector<16x32xf32>
    %143 = arith.addf %117, %142 : vector<16x32xf32>
    %c0_51 = arith.constant 0 : index
    %c0_52 = arith.constant 0 : index
    %144 = vector.load %arg12[%c0_51, %c0_52] : memref<1x32xf32, #tpu.memory_space<vmem>>, vector<1x32xf32>
    %145 = vector.broadcast %144 : vector<1x32xf32> to vector<16x32xf32>
    %146 = arith.addf %143, %145 : vector<16x32xf32>
    %147 = arith.addf %1, %146 : vector<16x32xf32>
    %c0_53 = arith.constant 0 : index
    %c0_54 = arith.constant 0 : index
    %148 = vector.load %arg13[%c0_53, %c0_54] : memref<4x32xf32, #tpu.memory_space<vmem>>, vector<1x32xf32>
    %c1 = arith.constant 1 : index
    %c0_55 = arith.constant 0 : index
    %149 = vector.load %arg13[%c1, %c0_55] : memref<4x32xf32, #tpu.memory_space<vmem>>, vector<1x32xf32>
    %cst_56 = arith.constant dense<0.000000e+00> : vector<16xf32>
    %150 = vector.multi_reduction <add>, %147, %cst_56 [1] : vector<16x32xf32> to vector<16xf32>
    %151 = vector.shape_cast %150 : vector<16xf32> to vector<16x1xf32>
    %cst_57 = arith.constant 3.200000e+01 : f32
    %152 = vector.broadcast %cst_57 : f32 to vector<16x1xf32>
    %153 = arith.divf %151, %152 : vector<16x1xf32>
    %154 = vector.broadcast %153 : vector<16x1xf32> to vector<16x32xf32>
    %155 = arith.subf %147, %154 : vector<16x32xf32>
    %156 = arith.mulf %155, %155 : vector<16x32xf32>
    %cst_58 = arith.constant dense<0.000000e+00> : vector<16xf32>
    %157 = vector.multi_reduction <add>, %156, %cst_58 [1] : vector<16x32xf32> to vector<16xf32>
    %158 = vector.shape_cast %157 : vector<16xf32> to vector<16x1xf32>
    %cst_59 = arith.constant 3.200000e+01 : f32
    %159 = vector.broadcast %cst_59 : f32 to vector<16x1xf32>
    %160 = arith.divf %158, %159 : vector<16x1xf32>
    %cst_60 = arith.constant 9.99999974E-6 : f32
    %161 = vector.broadcast %cst_60 : f32 to vector<16x1xf32>
    %162 = arith.addf %160, %161 : vector<16x1xf32>
    %163 = math.rsqrt %162 : vector<16x1xf32>
    %164 = vector.broadcast %163 : vector<16x1xf32> to vector<16x32xf32>
    %165 = arith.mulf %155, %164 : vector<16x32xf32>
    %166 = vector.broadcast %148 : vector<1x32xf32> to vector<16x32xf32>
    %167 = arith.mulf %165, %166 : vector<16x32xf32>
    %168 = vector.broadcast %149 : vector<1x32xf32> to vector<16x32xf32>
    %169 = arith.addf %167, %168 : vector<16x32xf32>
    %c0_61 = arith.constant 0 : index
    %c0_62 = arith.constant 0 : index
    %170 = vector.load %arg14[%c0_61, %c0_62] : memref<32x64xf32, #tpu.memory_space<vmem>>, vector<32x64xf32>
    %171 = arith.truncf %169 : vector<16x32xf32> to vector<16x32xbf16>
    %172 = arith.truncf %170 : vector<32x64xf32> to vector<32x64xbf16>
    %cst_63 = arith.constant dense<0.000000e+00> : vector<16x64xf32>
    %173 = tpu.matmul %171, %172, %cst_63 {dimension_numbers = #tpu.dot_dimension_numbers<[1], [0], [0], [1], [0, 0, 1, 1], [], []>} : vector<16x32xbf16>, vector<32x64xbf16>, vector<16x64xf32> -> vector<16x64xf32>
    %c0_64 = arith.constant 0 : index
    %c0_65 = arith.constant 0 : index
    %174 = vector.load %arg15[%c0_64, %c0_65] : memref<1x64xf32, #tpu.memory_space<vmem>>, vector<1x64xf32>
    %175 = vector.broadcast %174 : vector<1x64xf32> to vector<16x64xf32>
    %176 = arith.addf %173, %175 : vector<16x64xf32>
    %cst_66 = arith.constant 0.000000e+00 : f32
    %177 = vector.broadcast %cst_66 : f32 to vector<16x64xf32>
    %178 = arith.maximumf %176, %177 : vector<16x64xf32>
    %c0_67 = arith.constant 0 : index
    %c0_68 = arith.constant 0 : index
    %179 = vector.load %arg16[%c0_67, %c0_68] : memref<64x32xf32, #tpu.memory_space<vmem>>, vector<64x32xf32>
    %180 = arith.truncf %178 : vector<16x64xf32> to vector<16x64xbf16>
    %181 = arith.truncf %179 : vector<64x32xf32> to vector<64x32xbf16>
    %cst_69 = arith.constant dense<0.000000e+00> : vector<16x32xf32>
    %182 = tpu.matmul %180, %181, %cst_69 {dimension_numbers = #tpu.dot_dimension_numbers<[1], [0], [0], [1], [0, 0, 1, 1], [], []>} : vector<16x64xbf16>, vector<64x32xbf16>, vector<16x32xf32> -> vector<16x32xf32>
    %c0_70 = arith.constant 0 : index
    %c0_71 = arith.constant 0 : index
    %183 = vector.load %arg17[%c0_70, %c0_71] : memref<1x32xf32, #tpu.memory_space<vmem>>, vector<1x32xf32>
    %184 = vector.broadcast %183 : vector<1x32xf32> to vector<16x32xf32>
    %185 = arith.addf %182, %184 : vector<16x32xf32>
    %186 = arith.addf %169, %185 : vector<16x32xf32>
    %c2 = arith.constant 2 : index
    %c0_72 = arith.constant 0 : index
    %187 = vector.load %arg13[%c2, %c0_72] : memref<4x32xf32, #tpu.memory_space<vmem>>, vector<1x32xf32>
    %c3 = arith.constant 3 : index
    %c0_73 = arith.constant 0 : index
    %188 = vector.load %arg13[%c3, %c0_73] : memref<4x32xf32, #tpu.memory_space<vmem>>, vector<1x32xf32>
    %cst_74 = arith.constant dense<0.000000e+00> : vector<16xf32>
    %189 = vector.multi_reduction <add>, %186, %cst_74 [1] : vector<16x32xf32> to vector<16xf32>
    %190 = vector.shape_cast %189 : vector<16xf32> to vector<16x1xf32>
    %cst_75 = arith.constant 3.200000e+01 : f32
    %191 = vector.broadcast %cst_75 : f32 to vector<16x1xf32>
    %192 = arith.divf %190, %191 : vector<16x1xf32>
    %193 = vector.broadcast %192 : vector<16x1xf32> to vector<16x32xf32>
    %194 = arith.subf %186, %193 : vector<16x32xf32>
    %195 = arith.mulf %194, %194 : vector<16x32xf32>
    %cst_76 = arith.constant dense<0.000000e+00> : vector<16xf32>
    %196 = vector.multi_reduction <add>, %195, %cst_76 [1] : vector<16x32xf32> to vector<16xf32>
    %197 = vector.shape_cast %196 : vector<16xf32> to vector<16x1xf32>
    %cst_77 = arith.constant 3.200000e+01 : f32
    %198 = vector.broadcast %cst_77 : f32 to vector<16x1xf32>
    %199 = arith.divf %197, %198 : vector<16x1xf32>
    %cst_78 = arith.constant 9.99999974E-6 : f32
    %200 = vector.broadcast %cst_78 : f32 to vector<16x1xf32>
    %201 = arith.addf %199, %200 : vector<16x1xf32>
    %202 = math.rsqrt %201 : vector<16x1xf32>
    %203 = vector.broadcast %202 : vector<16x1xf32> to vector<16x32xf32>
    %204 = arith.mulf %194, %203 : vector<16x32xf32>
    %205 = vector.broadcast %187 : vector<1x32xf32> to vector<16x32xf32>
    %206 = arith.mulf %204, %205 : vector<16x32xf32>
    %207 = vector.broadcast %188 : vector<1x32xf32> to vector<16x32xf32>
    %208 = arith.addf %206, %207 : vector<16x32xf32>
    %c0_79 = arith.constant 0 : index
    %c0_80 = arith.constant 0 : index
    %c0_81 = arith.constant 0 : index
    %209 = vector.load %arg18[%c0_79, %c0_80, %c0_81] : memref<1x16x32xf32, #tpu.memory_space<vmem>>, vector<1x16x32xf32>
    %210 = vector.shape_cast %209 : vector<1x16x32xf32> to vector<16x32xf32>
    %211 = vector.shape_cast %208 : vector<16x32xf32> to vector<1x16x32xf32>
    tpu.vector_store %arg18[%c0_79, %c0_80, %c0_81], %211 {strides = array<i32>} : memref<1x16x32xf32, #tpu.memory_space<vmem>>, vector<1x16x32xf32>,
    return
  }
  func.func @transform_0(%arg0: i32) -> (i32, i32, i32) {
    %c0_i32 = arith.constant 0 : i32
    %c0_i32_0 = arith.constant 0 : i32
    %c0_i32_1 = arith.constant 0 : i32
    return %arg0, %c0_i32, %c0_i32_0 : i32, i32, i32
  }
  func.func @transform_1(%arg0: i32) -> (i32, i32, i32) {
    %c0_i32 = arith.constant 0 : i32
    %c0_i32_0 = arith.constant 0 : i32
    %c0_i32_1 = arith.constant 0 : i32
    return %arg0, %c0_i32, %c0_i32_0 : i32, i32, i32
  }
  func.func @transform_2(%arg0: i32) -> (i32, i32) {
    %c0_i32 = arith.constant 0 : i32
    %c0_i32_0 = arith.constant 0 : i32
    %c0_i32_1 = arith.constant 0 : i32
    return %c0_i32, %c0_i32_0 : i32, i32
  }
  func.func @transform_3(%arg0: i32) -> (i32, i32) {
    %c0_i32 = arith.constant 0 : i32
    %c0_i32_0 = arith.constant 0 : i32
    %c0_i32_1 = arith.constant 0 : i32
    return %c0_i32, %c0_i32_0 : i32, i32
  }
  func.func @transform_4(%arg0: i32) -> (i32, i32) {
    %c0_i32 = arith.constant 0 : i32
    %c0_i32_0 = arith.constant 0 : i32
    %c0_i32_1 = arith.constant 0 : i32
    return %c0_i32, %c0_i32_0 : i32, i32
  }
  func.func @transform_5(%arg0: i32) -> (i32, i32) {
    %c0_i32 = arith.constant 0 : i32
    %c0_i32_0 = arith.constant 0 : i32
    %c0_i32_1 = arith.constant 0 : i32
    return %c0_i32, %c0_i32_0 : i32, i32
  }
  func.func @transform_6(%arg0: i32) -> (i32, i32) {
    %c0_i32 = arith.constant 0 : i32
    %c0_i32_0 = arith.constant 0 : i32
    %c0_i32_1 = arith.constant 0 : i32
    return %c0_i32, %c0_i32_0 : i32, i32
  }
  func.func @transform_7(%arg0: i32) -> (i32, i32) {
    %c0_i32 = arith.constant 0 : i32
    %c0_i32_0 = arith.constant 0 : i32
    %c0_i32_1 = arith.constant 0 : i32
    return %c0_i32, %c0_i32_0 : i32, i32
  }
  func.func @transform_8(%arg0: i32) -> (i32, i32) {
    %c0_i32 = arith.constant 0 : i32
    %c0_i32_0 = arith.constant 0 : i32
    %c0_i32_1 = arith.constant 0 : i32
    return %c0_i32, %c0_i32_0 : i32, i32
  }
  func.func @transform_9(%arg0: i32) -> (i32, i32) {
    %c0_i32 = arith.constant 0 : i32
    %c0_i32_0 = arith.constant 0 : i32
    %c0_i32_1 = arith.constant 0 : i32
    return %c0_i32, %c0_i32_0 : i32, i32
  }
  func.func @transform_10(%arg0: i32) -> (i32, i32) {
    %c0_i32 = arith.constant 0 : i32
    %c0_i32_0 = arith.constant 0 : i32
    %c0_i32_1 = arith.constant 0 : i32
    return %c0_i32, %c0_i32_0 : i32, i32
  }
  func.func @transform_11(%arg0: i32) -> (i32, i32) {
    %c0_i32 = arith.constant 0 : i32
    %c0_i32_0 = arith.constant 0 : i32
    %c0_i32_1 = arith.constant 0 : i32
    return %c0_i32, %c0_i32_0 : i32, i32
  }
  func.func @transform_12(%arg0: i32) -> (i32, i32) {
    %c0_i32 = arith.constant 0 : i32
    %c0_i32_0 = arith.constant 0 : i32
    %c0_i32_1 = arith.constant 0 : i32
    return %c0_i32, %c0_i32_0 : i32, i32
  }
  func.func @transform_13(%arg0: i32) -> (i32, i32) {
    %c0_i32 = arith.constant 0 : i32
    %c0_i32_0 = arith.constant 0 : i32
    %c0_i32_1 = arith.constant 0 : i32
    return %c0_i32, %c0_i32_0 : i32, i32
  }
  func.func @transform_14(%arg0: i32) -> (i32, i32) {
    %c0_i32 = arith.constant 0 : i32
    %c0_i32_0 = arith.constant 0 : i32
    %c0_i32_1 = arith.constant 0 : i32
    return %c0_i32, %c0_i32_0 : i32, i32
  }
  func.func @transform_15(%arg0: i32) -> (i32, i32) {
    %c0_i32 = arith.constant 0 : i32
    %c0_i32_0 = arith.constant 0 : i32
    %c0_i32_1 = arith.constant 0 : i32
    return %c0_i32, %c0_i32_0 : i32, i32
  }
  func.func @transform_16(%arg0: i32) -> (i32, i32) {
    %c0_i32 = arith.constant 0 : i32
    %c0_i32_0 = arith.constant 0 : i32
    %c0_i32_1 = arith.constant 0 : i32
    return %c0_i32, %c0_i32_0 : i32, i32
  }
  func.func @transform_17(%arg0: i32) -> (i32, i32, i32) {
    %c0_i32 = arith.constant 0 : i32
    %c0_i32_0 = arith.constant 0 : i32
    %c0_i32_1 = arith.constant 0 : i32
    return %arg0, %c0_i32, %c0_i32_0 : i32, i32, i32
  }
}

</mosaic_0001>

<llo_original>
// kernel: view_transformer_forward.5
$region0: #{view_transformer_forward.5}
  #allocation0 [shape = 'u32[]', space=smem, size = 0x4, offset = 0x4, fixed_abs, tag = 'smem constant byte address 0x4 - core index']
  #allocation1 [shape = 'u32[144,128]{1,0:T(1,128)}', space=vmem, size = 0x12000, scoped, tag = 'internal scratch']
  %s0 = inlined_call_operand.vmem [shape: f32[2,16,32], index: 0, kind: input, shape index: {}]
  %s1 = inlined_call_operand.vmem [shape: f32[32,160], index: 1, kind: input, shape index: {}]
  %s2 = inlined_call_operand.vmem [shape: f32[1,160], index: 2, kind: input, shape index: {}]
  %s3 = inlined_call_operand.vmem [shape: f32[160,10], index: 3, kind: input, shape index: {}]
  %s4 = inlined_call_operand.vmem [shape: f32[1,10], index: 4, kind: input, shape index: {}]
  %s5 = inlined_call_operand.vmem [shape: f32[2,16,10], index: 5, kind: output, shape index: {}]
  %s6 = sld [smem:[#allocation0]]
  $region53: #{view_transformer_forward.5} parent=0
    _
  %s8 = ssub.s32 1, %s6
  %s9 = scalar_select 0, %s8, %s6
  loop: start=0, step=1, limit=4
  $region2: #{view_transformer_forward.5} parent=0 // loop_pre_header
    _
  $region3: #{view_transformer_forward.5} parent=0 // loop_header
    %s11 = sphi 0, %s15
    %p12 = scmp.ge.s32.totalorder %s11, 4
    %s21 = sphi 0, %s23
    %s24 = sphi 0, %s21
    %s25 = sphi 0, %s24
    %s41 = sphi 0, %s25
    %s45 = sphi 0, %s45
    %s47 = sphi 0, %s45
    %s48 = sphi 0, %s47
    %s62 = sphi 0, %s48
    %s66 = sphi 0, %s66
    %s68 = sphi 0, %s66
    %s69 = sphi 0, %s68
    %s83 = sphi 0, %s69
    %s87 = sphi 0, %s87
    %s89 = sphi 0, %s87
    %s90 = sphi 0, %s89
    %s104 = sphi 0, %s90
    %s108 = sphi 0, %s108
    %s110 = sphi 0, %s108
    %s111 = sphi 0, %s110
    %s125 = sphi 0, %s111
    %s131 = sphi 0, %s133
    %s134 = sphi 0, %s131
    %s135 = sphi 0, %s134
    %s151 = sphi 0, %s135
  $region4: #{view_transformer_forward.5} parent=0 // loop_header_branch
    %14 = sbr.rel (%p12) target = $region8
  $region5: #{view_transformer_forward.5} parent=0 // loop_body
    %s16 = ssub.s32 %s11, 1
    %s17 = ssub.s32 %s11, 2
    %s18 = sadd.s32 %s11, 1
    %s19 = ssub.s32 %s11, %s18
    %p20 = scmp.eq.s32.totalorder %s19, 0
    %s22 = sadd.s32 %s21, 1
    %s23 = scalar_select %p20, %s21, %s22
    %p26 = pneg %p20
    %p27 = scmp.eq.s32.totalorder %s11, 1
    %p28 = por %p26, %p27
    %p29 = scmp.ne.s32.totalorder %s21, %s24
    %p30 = scmp.eq.s32.totalorder %s11, 0
    %p31 = por %p29, %p30
    %p32 = scmp.ne.s32.totalorder %s21, %s24
    %p33 = scmp.eq.s32.totalorder %s16, 1
    %p34 = por %p32, %p33
    %p35 = scmp.ne.s32.totalorder %s24, %s25
    %p36 = scmp.eq.s32.totalorder %s16, 0
    %p37 = por %p35, %p36
    %p38 = scmp.ne.s32.totalorder %s24, %s25
    %p39 = scmp.eq.s32.totalorder %s17, 1
    %p40 = por %p38, %p39
    %p42 = scmp.ne.s32.totalorder %s25, %s41
    %p43 = scmp.eq.s32.totalorder %s17, 0
    %p44 = por %p42, %p43
    %s46 = sadd.s32 %s45, 1
    %p49 = scmp.eq.s32.totalorder %s11, 1
    %p50 = scmp.ne.s32.totalorder %s45, %s47
    %p51 = scmp.eq.s32.totalorder %s11, 0
    %p52 = por %p50, %p51
    %p53 = scmp.ne.s32.totalorder %s45, %s47
    %p54 = scmp.eq.s32.totalorder %s16, 1
    %p55 = por %p53, %p54
    %p56 = scmp.ne.s32.totalorder %s47, %s48
    %p57 = scmp.eq.s32.totalorder %s16, 0
    %p58 = por %p56, %p57
    %p59 = scmp.ne.s32.totalorder %s47, %s48
    %p60 = scmp.eq.s32.totalorder %s17, 1
    %p61 = por %p59, %p60
    %p63 = scmp.ne.s32.totalorder %s48, %s62
    %p64 = scmp.eq.s32.totalorder %s17, 0
    %p65 = por %p63, %p64
    %s67 = sadd.s32 %s66, 1
    %p70 = scmp.eq.s32.totalorder %s11, 1
    %p71 = scmp.ne.s32.totalorder %s66, %s68
    %p72 = scmp.eq.s32.totalorder %s11, 0
    %p73 = por %p71, %p72
    %p74 = scmp.ne.s32.totalorder %s66, %s68
    %p75 = scmp.eq.s32.totalorder %s16, 1
    %p76 = por %p74, %p75
    %p77 = scmp.ne.s32.totalorder %s68, %s69
    %p78 = scmp.eq.s32.totalorder %s16, 0
    %p79 = por %p77, %p78
    %p80 = scmp.ne.s32.totalorder %s68, %s69
    %p81 = scmp.eq.s32.totalorder %s17, 1
    %p82 = por %p80, %p81
    %p84 = scmp.ne.s32.totalorder %s69, %s83
    %p85 = scmp.eq.s32.totalorder %s17, 0
    %p86 = por %p84, %p85
    %s88 = sadd.s32 %s87, 1
    %p91 = scmp.eq.s32.totalorder %s11, 1
    %p92 = scmp.ne.s32.totalorder %s87, %s89
    %p93 = scmp.eq.s32.totalorder %s11, 0
    %p94 = por %p92, %p93
    %p95 = scmp.ne.s32.totalorder %s87, %s89
    %p96 = scmp.eq.s32.totalorder %s16, 1
    %p97 = por %p95, %p96
    %p98 = scmp.ne.s32.totalorder %s89, %s90
    %p99 = scmp.eq.s32.totalorder %s16, 0
    %p100 = por %p98, %p99
    %p101 = scmp.ne.s32.totalorder %s89, %s90
    %p102 = scmp.eq.s32.totalorder %s17, 1
    %p103 = por %p101, %p102
    %p105 = scmp.ne.s32.totalorder %s90, %s104
    %p106 = scmp.eq.s32.totalorder %s17, 0
    %p107 = por %p105, %p106
    %s109 = sadd.s32 %s108, 1
    %p112 = scmp.eq.s32.totalorder %s11, 1
    %p113 = scmp.ne.s32.totalorder %s108, %s110
    %p114 = scmp.eq.s32.totalorder %s11, 0
    %p115 = por %p113, %p114
    %p116 = scmp.ne.s32.totalorder %s108, %s110
    %p117 = scmp.eq.s32.totalorder %s16, 1
    %p118 = por %p116, %p117
    %p119 = scmp.ne.s32.totalorder %s110, %s111
    %p120 = scmp.eq.s32.totalorder %s16, 0
    %p121 = por %p119, %p120
    %p122 = scmp.ne.s32.totalorder %s110, %s111
    %p123 = scmp.eq.s32.totalorder %s17, 1
    %p124 = por %p122, %p123
    %p126 = scmp.ne.s32.totalorder %s111, %s125
    %p127 = scmp.eq.s32.totalorder %s17, 0
    %p128 = por %p126, %p127
    %s129 = ssub.s32 %s11, %s18
    %p130 = scmp.eq.s32.totalorder %s129, 0
    %s132 = sadd.s32 %s131, 1
    %s133 = scalar_select %p130, %s131, %s132
    %p136 = pneg %p130
    %p137 = scmp.eq.s32.totalorder %s11, 1
    %p138 = por %p136, %p137
    %p139 = scmp.ne.s32.totalorder %s131, %s134
    %p140 = scmp.eq.s32.totalorder %s11, 0
    %p141 = por %p139, %p140
    %p142 = scmp.ne.s32.totalorder %s131, %s134
    %p143 = scmp.eq.s32.totalorder %s16, 1
    %p144 = por %p142, %p143
    %p145 = scmp.ne.s32.totalorder %s134, %s135
    %p146 = scmp.eq.s32.totalorder %s16, 0
    %p147 = por %p145, %p146
    %p148 = scmp.ne.s32.totalorder %s134, %s135
    %p149 = scmp.eq.s32.totalorder %s17, 1
    %p150 = por %p148, %p149
    %p152 = scmp.ne.s32.totalorder %s135, %s151
    %p153 = scmp.eq.s32.totalorder %s17, 0
    %p154 = por %p152, %p153
    %p155 = scmp.le.s32.totalorder 1, %s11
    %p156 = scmp.lt.s32.totalorder %s11, 3
    %p157 = pnand %p155, %p156
    %p158 = pneg %p157
    // Predicated region
    $region9: #{view_transformer_forward.5} parent=5 // pred_check
      _
    $region10: #{view_transformer_forward.5} parent=5 // pred_check_branch
      %160 = sbr.rel (%p157) target = $region12
    $region11: #{view_transformer_forward.5} parent=5 // pred_region
      %s161 = ssub.s32 %s11, 1
      // Predicated region
      $region13: #{view_transformer_forward.5} parent=11 // pred_check
        %p162 = pneg %p58
      $region14: #{view_transformer_forward.5} parent=11 // pred_check_branch
        %164 = sbr.rel (%p162) target = $region16
      $region15: #{view_transformer_forward.5} parent=11 // pred_region
        _
      $region16: #{view_transformer_forward.5} parent=11 // pred_fallthru
        _
      // Predicated region
      $region17: #{view_transformer_forward.5} parent=11 // pred_check
        %p165 = pneg %p79
      $region18: #{view_transformer_forward.5} parent=11 // pred_check_branch
        %167 = sbr.rel (%p165) target = $region20
      $region19: #{view_transformer_forward.5} parent=11 // pred_region
        _
      $region20: #{view_transformer_forward.5} parent=11 // pred_fallthru
        _
      // Predicated region
      $region21: #{view_transformer_forward.5} parent=11 // pred_check
        %p168 = pneg %p100
      $region22: #{view_transformer_forward.5} parent=11 // pred_check_branch
        %170 = sbr.rel (%p168) target = $region24
      $region23: #{view_transformer_forward.5} parent=11 // pred_region
        _
      $region24: #{view_transformer_forward.5} parent=11 // pred_fallthru
        _
      // Predicated region
      $region25: #{view_transformer_forward.5} parent=11 // pred_check
        %p171 = pneg %p121
      $region26: #{view_transformer_forward.5} parent=11 // pred_check_branch
        %173 = sbr.rel (%p171) target = $region28
      $region27: #{view_transformer_forward.5} parent=11 // pred_region
        _
      $region28: #{view_transformer_forward.5} parent=11 // pred_fallthru
        _
    $region12: #{view_transformer_forward.5} parent=5 // pred_fallthru
      _
    %p174 = scmp.lt.s32.totalorder %s11, 2
    // Predicated region
    $region29: #{view_transformer_forward.5} parent=5 // pred_check
      %p175 = pneg %p174
    $region30: #{view_transformer_forward.5} parent=5 // pred_check_branch
      %177 = sbr.rel (%p175) target = $region32
    $region31: #{view_transformer_forward.5} parent=5 // pred_region
      // Predicated region
      $region33: #{view_transformer_forward.5} parent=31 // pred_check
        %p178 = pneg %p31
      $region34: #{view_transformer_forward.5} parent=31 // pred_check_branch
        %180 = sbr.rel (%p178) target = $region36
      $region35: #{view_transformer_forward.5} parent=31 // pred_region
        %p181 = scmp.lt.s32.totalorder %s11, 1
        %s182 = scalar_select %p181, %s11, 1
        %s183 = smul.addr %s182, 2
        %s184 = smul.addr %s183, 8
        %s185 = scalar_lea.vmem %s0, %s184
      $region36: #{view_transformer_forward.5} parent=31 // pred_fallthru
        _
    $region32: #{view_transformer_forward.5} parent=5 // pred_fallthru
      _
    %p186 = scmp.le.s32.totalorder 1, %s11
    %p187 = scmp.lt.s32.totalorder %s11, 3
    %p188 = pnand %p186, %p187
    %p189 = pneg %p188
    // Predicated region
    $region37: #{view_transformer_forward.5} parent=5 // pred_check
      _
    $region38: #{view_transformer_forward.5} parent=5 // pred_check_branch
      %191 = sbr.rel (%p188) target = $region40
    $region39: #{view_transformer_forward.5} parent=5 // pred_region
      %s192 = ssub.s32 %s11, 1
      %p193 = scmp.lt.s32.totalorder %s16, 1
      %s194 = scalar_select %p193, %s16, 1
      %s195 = smul.addr %s194, 2
      %s196 = smul.addr %s195, 8
      %s197 = scalar_lea.vmem %s0, %s196
      %p198 = pneg %p37
      %p199 = pneg %p34
      %p200 = pneg %p58
      %p201 = pneg %p55
      %p202 = pneg %p79
      %p203 = pneg %p76
      %p204 = pneg %p100
      %p205 = pneg %p97
      %p206 = pneg %p121
      %p207 = pneg %p118
      %p208 = pneg %p147
      %p209 = pneg %p144
      %p210 = scmp.lt.s32.totalorder %s16, 1
      %s211 = scalar_select %p210, %s16, 1
      %s212 = smul.addr %s211, 2
      %s213 = smul.addr %s212, 8
      %s214 = scalar_lea.vmem %s5, %s213
      %p215 = scmp.lt.s32.totalorder %s16, 1
      %s216 = scalar_select %p215, %s16, 1
      %s217 = smul.addr %s216, 2
      %s218 = smul.addr %s217, 8
      %s219 = scalar_lea.vmem %s0, %s218
      %p220 = scmp.lt.s32.totalorder %s16, 1
      %s221 = scalar_select %p220, %s16, 1
      %s222 = smul.addr %s221, 2
      %s223 = smul.addr %s222, 8
      %s224 = scalar_lea.vmem %s5, %s223
      %v226 = vld [vmem:[%s219] sm:$0xff]
      %v227 = vld [vmem:[%s219 + $0x8] sm:$0xff]
      %v228 = vld [vmem:[%s1] sm:$0xff]
      %v229 = vld [vmem:[%s1 + $0x8] sm:$0xff]
      %v230 = vld [vmem:[%s1 + $0x10] sm:$0xff]
      %v231 = vld [vmem:[%s1 + $0x18] sm:$0xff]
      %v232 = vld [vmem:[%s1 + $0x20] sm:$0xff]
      %v233 = vld [vmem:[%s1 + $0x28] sm:$0xff]
      %v234 = vld [vmem:[%s1 + $0x30] sm:$0xff]
      %v235 = vld [vmem:[%s1 + $0x38] sm:$0xff]
      %v236 = vpack.c.bf16 %v227, %v226
      %v237 = vpack.c.bf16 %v230, %v228
      %v238 = vpack.c.bf16 %v231, %v229
      %v239 = vpack.c.bf16 %v234, %v232
      %v240 = vpack.c.bf16 %v235, %v233
      %v241 = vld [vmem:[%s2] sm:$0x3]
      %v243 = vlaneseq
      %v244 = vshrl.u32 %v243, 7
      %v245 = vsub.s32 0, %v244
      %v246 = vrot.slane %v241, %v245
      %v247 = vlaneseq
      %v248 = vshrl.u32 %v247, 7
      %v249 = vsub.s32 1, %v248
      %v250 = vrot.slane %v241, %v249
      %vm253 = vcmask 261120
      %v255 = vsel %vm253, %v236, 0
      %257 = vmatprep.subr.bf16.mxu0 0
      %258 = vmatpush1.bf16.msra.mxu0 0
      %259 = vmatprep.subr.bf16.mxu0 0
      %260 = vmatpush1.bf16.msra.mxu0 0
      %261 = vmatprep.subr.bf16.mxu0 0
      %262 = vmatpush1.bf16.msra.mxu0 0
      %263 = vmatprep.subr.bf16.mxu0 0
      %264 = vmatpush1.bf16.msra.mxu0 0
      %265 = vmatprep.subr.bf16.mxu0 0
      %266 = vmatpush1.bf16.msra.mxu0 0
      %267 = vmatprep.subr.bf16.mxu0 0
      %268 = vmatpush1.bf16.msra.mxu0 0
      %269 = vmatprep.subr.bf16.mxu0 %v240
      %270 = vmatpush1.bf16.msra.mxu0 %v239
      %271 = vmatprep.subr.bf16.mxu0 %v238
      %272 = vmatpush1.bf16.msra.mxu0 %v237
      %273 = vmatprep.subr.bf16.mxu0 0
      %274 = vmatpush2.bf16.msra.mxu0 0
      %275 = vmatprep.subr.bf16.mxu0 0
      %276 = vmatpush2.bf16.msra.mxu0 0
      %277 = vmatprep.subr.bf16.mxu0 0
      %278 = vmatpush2.bf16.msra.mxu0 0
      %279 = vmatprep.subr.bf16.mxu0 0
      %280 = vmatpush2.bf16.msra.mxu0 0
      %281 = vmatprep.subr.bf16.mxu0 0
      %282 = vmatpush2.bf16.msra.mxu0 0
      %283 = vmatprep.subr.bf16.mxu0 0
      %284 = vmatpush2.bf16.msra.mxu0 0
      %285 = vmatprep.subr.bf16.mxu0 0
      %286 = vmatpush2.bf16.msra.mxu0 0
      %287 = vmatprep.subr.bf16.mxu0 0
      %288 = vmatpush2.bf16.msra.mxu0 0
      %289 = vmatprep.mubr.bf16.mxu0 0
      %290 = vmatmul.mubr.bf16.gmra.mxu0 %v255
      %v291 = vpop.f32.mrf.mxu0
      %v292 = vadd.f32 %v246, %v291
      %v293 = vpop.f32.mrf.mxu0
      %v294 = vadd.f32 %v250, %v293
      %v295 = vpop.f32.mrf.mxu0
      %v296 = vadd.f32 %v246, %v295
      %v297 = vpop.f32.mrf.mxu0
      %v298 = vadd.f32 %v250, %v297
      %299 = vdwg.mxu0
      %v300 = vmax.f32 %v292, 0.0
      %v301 = vmax.f32 %v294, 0.0
      %v302 = vmax.f32 %v296, 0.0
      %v303 = vmax.f32 %v298, 0.0
      %v304 = vld [vmem:[%s3] sm:$0xff]
      %v305 = vld [vmem:[%s3 + $0x8] sm:$0xff]
      %v306 = vld [vmem:[%s3 + $0x10] sm:$0xff]
      %v307 = vld [vmem:[%s3 + $0x18] sm:$0xff]
      %v308 = vld [vmem:[%s3 + $0x20] sm:$0xff]
      %v309 = vld [vmem:[%s3 + $0x28] sm:$0xff]
      %v310 = vld [vmem:[%s3 + $0x30] sm:$0xff]
      %v311 = vld [vmem:[%s3 + $0x38] sm:$0xff]
      %v312 = vld [vmem:[%s3 + $0x40] sm:$0xff]
      %v313 = vld [vmem:[%s3 + $0x48] sm:$0xff]
      %v314 = vld [vmem:[%s3 + $0x50] sm:$0xff]
      %v315 = vld [vmem:[%s3 + $0x58] sm:$0xff]
      %v316 = vld [vmem:[%s3 + $0x60] sm:$0xff]
      %v317 = vld [vmem:[%s3 + $0x68] sm:$0xff]
      %v318 = vld [vmem:[%s3 + $0x70] sm:$0xff]
      %v319 = vld [vmem:[%s3 + $0x78] sm:$0xff]
      %v320 = vld [vmem:[%s3 + $0x80] sm:$0xff]
      %v321 = vld [vmem:[%s3 + $0x88] sm:$0xff]
      %v322 = vld [vmem:[%s3 + $0x90] sm:$0xff]
      %v323 = vld [vmem:[%s3 + $0x98] sm:$0xff]
      %v324 = vpack.c.bf16 %v302, %v300
      %v325 = vpack.c.bf16 %v303, %v301
      %v326 = vpack.c.bf16 %v305, %v304
      %v327 = vpack.c.bf16 %v307, %v306
      %v328 = vpack.c.bf16 %v309, %v308
      %v329 = vpack.c.bf16 %v311, %v310
      %v330 = vpack.c.bf16 %v313, %v312
      %v331 = vpack.c.bf16 %v315, %v314
      %v332 = vpack.c.bf16 %v317, %v316
      %v333 = vpack.c.bf16 %v319, %v318
      %v334 = vpack.c.bf16 %v321, %v320
      %v335 = vpack.c.bf16 %v323, %v322
      %v336 = vld [vmem:[%s4] sm:$0x1]
      %v338 = vlaneseq
      %v339 = vshrl.u32 %v338, 7
      %v340 = vsub.s32 0, %v339
      %v341 = vrot.slane %v336, %v340
      %v344 = vsel %vm253, %v325, 0
      %346 = vmatprep.subr.bf16.mxu0 0
      %347 = vmatpush1.bf16.msra.mxu0 %v333
      %348 = vmatprep.subr.bf16.mxu0 0
      %349 = vmatpush1.bf16.msra.mxu0 %v332
      %350 = vmatprep.subr.bf16.mxu0 0
      %351 = vmatpush1.bf16.msra.mxu0 %v331
      %352 = vmatprep.subr.bf16.mxu0 0
      %353 = vmatpush1.bf16.msra.mxu0 %v330
      %354 = vmatprep.subr.bf16.mxu0 0
      %355 = vmatpush1.bf16.msra.mxu0 %v329
      %356 = vmatprep.subr.bf16.mxu0 0
      %357 = vmatpush1.bf16.msra.mxu0 %v328
      %358 = vmatprep.subr.bf16.mxu0 0
      %359 = vmatpush1.bf16.msra.mxu0 %v327
      %360 = vmatprep.subr.bf16.mxu0 0
      %361 = vmatpush1.bf16.msra.mxu0 %v326
      %362 = vmatprep.subr.bf16.mxu0 0
      %363 = vmatpush2.bf16.msra.mxu0 0
      %364 = vmatprep.subr.bf16.mxu0 0
      %365 = vmatpush2.bf16.msra.mxu0 0
      %366 = vmatprep.subr.bf16.mxu0 0
      %367 = vmatpush2.bf16.msra.mxu0 0
      %368 = vmatprep.subr.bf16.mxu0 0
      %369 = vmatpush2.bf16.msra.mxu0 0
      %370 = vmatprep.subr.bf16.mxu0 0
      %371 = vmatpush2.bf16.msra.mxu0 0
      %372 = vmatprep.subr.bf16.mxu0 0
      %373 = vmatpush2.bf16.msra.mxu0 0
      %374 = vmatprep.subr.bf16.mxu0 0
      %375 = vmatpush2.bf16.msra.mxu0 %v335
      %376 = vmatprep.subr.bf16.mxu0 0
      %377 = vmatpush2.bf16.msra.mxu0 %v334
      %378 = vmatprep.mubr.bf16.mxu0 %v344
      %379 = vmatmul.mubr.bf16.gmra.mxu0 %v324
      %v380 = vpop.f32.mrf.mxu0
      %v381 = vadd.f32 %v341, %v380
      %v382 = vpop.f32.mrf.mxu0
      %v383 = vpop.f32.mrf.mxu0
      %v384 = vadd.f32 %v341, %v383
      %v385 = vpop.f32.mrf.mxu0
      %386 = vdwg.mxu0
      %vm387 = vcmask 80896
      %388 = vst.msk [vmem:[%s224] sm:$0xff] %vm387, %v381
      %389 = vst.msk [vmem:[%s224 + $0x8] sm:$0xff] %vm387, %v384
      %p390 = scmp.lt.s32.totalorder %s16, 1
      %s391 = scalar_select %p390, %s16, 1
      %s392 = smul.addr %s391, 2
      %s393 = smul.addr %s392, 8
      %s394 = scalar_lea.vmem %s5, %s393
      // Predicated region
      $region41: #{view_transformer_forward.5} parent=39 // pred_check
        %p395 = pneg %p144
      $region42: #{view_transformer_forward.5} parent=39 // pred_check_branch
        %397 = sbr.rel (%p395) target = $region44
      $region43: #{view_transformer_forward.5} parent=39 // pred_region
        _
      $region44: #{view_transformer_forward.5} parent=39 // pred_fallthru
        _
    $region40: #{view_transformer_forward.5} parent=5 // pred_fallthru
      _
    %p398 = scmp.le.s32.totalorder 2, %s11
    // Predicated region
    $region45: #{view_transformer_forward.5} parent=5 // pred_check
      %p399 = pneg %p398
    $region46: #{view_transformer_forward.5} parent=5 // pred_check_branch
      %401 = sbr.rel (%p399) target = $region48
    $region47: #{view_transformer_forward.5} parent=5 // pred_region
      %s402 = ssub.s32 %s11, 2
      // Predicated region
      $region49: #{view_transformer_forward.5} parent=47 // pred_check
        %p403 = pneg %p150
      $region50: #{view_transformer_forward.5} parent=47 // pred_check_branch
        %405 = sbr.rel (%p403) target = $region52
      $region51: #{view_transformer_forward.5} parent=47 // pred_region
        %p406 = scmp.lt.s32.totalorder %s17, 1
        %s407 = scalar_select %p406, %s17, 1
        %s408 = smul.addr %s407, 2
        %s409 = smul.addr %s408, 8
        %s410 = scalar_lea.vmem %s5, %s409
      $region52: #{view_transformer_forward.5} parent=47 // pred_fallthru
        _
    $region48: #{view_transformer_forward.5} parent=5 // pred_fallthru
      _
  $region6: #{view_transformer_forward.5} parent=0 // loop_footer
    %s15 = sadd.s32 1, %s11
  $region7: #{view_transformer_forward.5} parent=0 // loop_footer_branch
    %10 = sbr.rel target = $region3
  $region8: #{view_transformer_forward.5} parent=0 // loop_exit
    _

// kernel: view_transformer_forward.3
$region0: #{view_transformer_forward.3}
  #allocation0 [shape = 'u32[]', space=smem, size = 0x4, offset = 0x4, fixed_abs, tag = 'smem constant byte address 0x4 - core index']
  #allocation1 [shape = 'u32[144,128]{1,0:T(1,128)}', space=vmem, size = 0x12000, scoped, tag = 'internal scratch']
  %s0 = inlined_call_operand.vmem [shape: f32[2,16,32], index: 0, kind: input, shape index: {}]
  %s1 = inlined_call_operand.vmem [shape: f32[2,16,16], index: 1, kind: input, shape index: {}]
  %s2 = inlined_call_operand.vmem [shape: f32[4,16], index: 2, kind: input, shape index: {}]
  %s3 = inlined_call_operand.vmem [shape: f32[16,32], index: 3, kind: input, shape index: {}]
  %s4 = inlined_call_operand.vmem [shape: f32[1,32], index: 4, kind: input, shape index: {}]
  %s5 = inlined_call_operand.vmem [shape: f32[32,32], index: 5, kind: input, shape index: {}]
  %s6 = inlined_call_operand.vmem [shape: f32[1,32], index: 6, kind: input, shape index: {}]
  %s7 = inlined_call_operand.vmem [shape: f32[32,32], index: 7, kind: input, shape index: {}]
  %s8 = inlined_call_operand.vmem [shape: f32[1,32], index: 8, kind: input, shape index: {}]
  %s9 = inlined_call_operand.vmem [shape: f32[32,32], index: 9, kind: input, shape index: {}]
  %s10 = inlined_call_operand.vmem [shape: f32[1,32], index: 10, kind: input, shape index: {}]
  %s11 = inlined_call_operand.vmem [shape: f32[2,16,32], index: 11, kind: output, shape index: {}]
  %s12 = sld [smem:[#allocation0]]
  $region77: #{view_transformer_forward.3} parent=0
    _
  %s14 = ssub.s32 1, %s12
  %s15 = scalar_select 0, %s14, %s12
  loop: start=0, step=1, limit=4
  $region2: #{view_transformer_forward.3} parent=0 // loop_pre_header
    _
  $region3: #{view_transformer_forward.3} parent=0 // loop_header
    %s17 = sphi 0, %s21
    %p18 = scmp.ge.s32.totalorder %s17, 4
    %s27 = sphi 0, %s29
    %s30 = sphi 0, %s27
    %s31 = sphi 0, %s30
    %s47 = sphi 0, %s31
    %s53 = sphi 0, %s55
    %s56 = sphi 0, %s53
    %s57 = sphi 0, %s56
    %s73 = sphi 0, %s57
    %s77 = sphi 0, %s77
    %s79 = sphi 0, %s77
    %s80 = sphi 0, %s79
    %s94 = sphi 0, %s80
    %s98 = sphi 0, %s98
    %s100 = sphi 0, %s98
    %s101 = sphi 0, %s100
    %s115 = sphi 0, %s101
    %s119 = sphi 0, %s119
    %s121 = sphi 0, %s119
    %s122 = sphi 0, %s121
    %s136 = sphi 0, %s122
    %s140 = sphi 0, %s140
    %s142 = sphi 0, %s140
    %s143 = sphi 0, %s142
    %s157 = sphi 0, %s143
    %s161 = sphi 0, %s161
    %s163 = sphi 0, %s161
    %s164 = sphi 0, %s163
    %s178 = sphi 0, %s164
    %s182 = sphi 0, %s182
    %s184 = sphi 0, %s182
    %s185 = sphi 0, %s184
    %s199 = sphi 0, %s185
    %s203 = sphi 0, %s203
    %s205 = sphi 0, %s203
    %s206 = sphi 0, %s205
    %s220 = sphi 0, %s206
    %s224 = sphi 0, %s224
    %s226 = sphi 0, %s224
    %s227 = sphi 0, %s226
    %s241 = sphi 0, %s227
    %s245 = sphi 0, %s245
    %s247 = sphi 0, %s245
    %s248 = sphi 0, %s247
    %s262 = sphi 0, %s248
    %s268 = sphi 0, %s270
    %s271 = sphi 0, %s268
    %s272 = sphi 0, %s271
    %s288 = sphi 0, %s272
  $region4: #{view_transformer_forward.3} parent=0 // loop_header_branch
    %20 = sbr.rel (%p18) target = $region8
  $region5: #{view_transformer_forward.3} parent=0 // loop_body
    %s22 = ssub.s32 %s17, 1
    %s23 = ssub.s32 %s17, 2
    %s24 = sadd.s32 %s17, 1
    %s25 = ssub.s32 %s17, %s24
    %p26 = scmp.eq.s32.totalorder %s25, 0
    %s28 = sadd.s32 %s27, 1
    %s29 = scalar_select %p26, %s27, %s28
    %p32 = pneg %p26
    %p33 = scmp.eq.s32.totalorder %s17, 1
    %p34 = por %p32, %p33
    %p35 = scmp.ne.s32.totalorder %s27, %s30
    %p36 = scmp.eq.s32.totalorder %s17, 0
    %p37 = por %p35, %p36
    %p38 = scmp.ne.s32.totalorder %s27, %s30
    %p39 = scmp.eq.s32.totalorder %s22, 1
    %p40 = por %p38, %p39
    %p41 = scmp.ne.s32.totalorder %s30, %s31
    %p42 = scmp.eq.s32.totalorder %s22, 0
    %p43 = por %p41, %p42
    %p44 = scmp.ne.s32.totalorder %s30, %s31
    %p45 = scmp.eq.s32.totalorder %s23, 1
    %p46 = por %p44, %p45
    %p48 = scmp.ne.s32.totalorder %s31, %s47
    %p49 = scmp.eq.s32.totalorder %s23, 0
    %p50 = por %p48, %p49
    %s51 = ssub.s32 %s17, %s24
    %p52 = scmp.eq.s32.totalorder %s51, 0
    %s54 = sadd.s32 %s53, 1
    %s55 = scalar_select %p52, %s53, %s54
    %p58 = pneg %p52
    %p59 = scmp.eq.s32.totalorder %s17, 1
    %p60 = por %p58, %p59
    %p61 = scmp.ne.s32.totalorder %s53, %s56
    %p62 = scmp.eq.s32.totalorder %s17, 0
    %p63 = por %p61, %p62
    %p64 = scmp.ne.s32.totalorder %s53, %s56
    %p65 = scmp.eq.s32.totalorder %s22, 1
    %p66 = por %p64, %p65
    %p67 = scmp.ne.s32.totalorder %s56, %s57
    %p68 = scmp.eq.s32.totalorder %s22, 0
    %p69 = por %p67, %p68
    %p70 = scmp.ne.s32.totalorder %s56, %s57
    %p71 = scmp.eq.s32.totalorder %s23, 1
    %p72 = por %p70, %p71
    %p74 = scmp.ne.s32.totalorder %s57, %s73
    %p75 = scmp.eq.s32.totalorder %s23, 0
    %p76 = por %p74, %p75
    %s78 = sadd.s32 %s77, 1
    %p81 = scmp.eq.s32.totalorder %s17, 1
    %p82 = scmp.ne.s32.totalorder %s77, %s79
    %p83 = scmp.eq.s32.totalorder %s17, 0
    %p84 = por %p82, %p83
    %p85 = scmp.ne.s32.totalorder %s77, %s79
    %p86 = scmp.eq.s32.totalorder %s22, 1
    %p87 = por %p85, %p86
    %p88 = scmp.ne.s32.totalorder %s79, %s80
    %p89 = scmp.eq.s32.totalorder %s22, 0
    %p90 = por %p88, %p89
    %p91 = scmp.ne.s32.totalorder %s79, %s80
    %p92 = scmp.eq.s32.totalorder %s23, 1
    %p93 = por %p91, %p92
    %p95 = scmp.ne.s32.totalorder %s80, %s94
    %p96 = scmp.eq.s32.totalorder %s23, 0
    %p97 = por %p95, %p96
    %s99 = sadd.s32 %s98, 1
    %p102 = scmp.eq.s32.totalorder %s17, 1
    %p103 = scmp.ne.s32.totalorder %s98, %s100
    %p104 = scmp.eq.s32.totalorder %s17, 0
    %p105 = por %p103, %p104
    %p106 = scmp.ne.s32.totalorder %s98, %s100
    %p107 = scmp.eq.s32.totalorder %s22, 1
    %p108 = por %p106, %p107
    %p109 = scmp.ne.s32.totalorder %s100, %s101
    %p110 = scmp.eq.s32.totalorder %s22, 0
    %p111 = por %p109, %p110
    %p112 = scmp.ne.s32.totalorder %s100, %s101
    %p113 = scmp.eq.s32.totalorder %s23, 1
    %p114 = por %p112, %p113
    %p116 = scmp.ne.s32.totalorder %s101, %s115
    %p117 = scmp.eq.s32.totalorder %s23, 0
    %p118 = por %p116, %p117
    %s120 = sadd.s32 %s119, 1
    %p123 = scmp.eq.s32.totalorder %s17, 1
    %p124 = scmp.ne.s32.totalorder %s119, %s121
    %p125 = scmp.eq.s32.totalorder %s17, 0
    %p126 = por %p124, %p125
    %p127 = scmp.ne.s32.totalorder %s119, %s121
    %p128 = scmp.eq.s32.totalorder %s22, 1
    %p129 = por %p127, %p128
    %p130 = scmp.ne.s32.totalorder %s121, %s122
    %p131 = scmp.eq.s32.totalorder %s22, 0
    %p132 = por %p130, %p131
    %p133 = scmp.ne.s32.totalorder %s121, %s122
    %p134 = scmp.eq.s32.totalorder %s23, 1
    %p135 = por %p133, %p134
    %p137 = scmp.ne.s32.totalorder %s122, %s136
    %p138 = scmp.eq.s32.totalorder %s23, 0
    %p139 = por %p137, %p138
    %s141 = sadd.s32 %s140, 1
    %p144 = scmp.eq.s32.totalorder %s17, 1
    %p145 = scmp.ne.s32.totalorder %s140, %s142
    %p146 = scmp.eq.s32.totalorder %s17, 0
    %p147 = por %p145, %p146
    %p148 = scmp.ne.s32.totalorder %s140, %s142
    %p149 = scmp.eq.s32.totalorder %s22, 1
    %p150 = por %p148, %p149
    %p151 = scmp.ne.s32.totalorder %s142, %s143
    %p152 = scmp.eq.s32.totalorder %s22, 0
    %p153 = por %p151, %p152
    %p154 = scmp.ne.s32.totalorder %s142, %s143
    %p155 = scmp.eq.s32.totalorder %s23, 1
    %p156 = por %p154, %p155
    %p158 = scmp.ne.s32.totalorder %s143, %s157
    %p159 = scmp.eq.s32.totalorder %s23, 0
    %p160 = por %p158, %p159
    %s162 = sadd.s32 %s161, 1
    %p165 = scmp.eq.s32.totalorder %s17, 1
    %p166 = scmp.ne.s32.totalorder %s161, %s163
    %p167 = scmp.eq.s32.totalorder %s17, 0
    %p168 = por %p166, %p167
    %p169 = scmp.ne.s32.totalorder %s161, %s163
    %p170 = scmp.eq.s32.totalorder %s22, 1
    %p171 = por %p169, %p170
    %p172 = scmp.ne.s32.totalorder %s163, %s164
    %p173 = scmp.eq.s32.totalorder %s22, 0
    %p174 = por %p172, %p173
    %p175 = scmp.ne.s32.totalorder %s163, %s164
    %p176 = scmp.eq.s32.totalorder %s23, 1
    %p177 = por %p175, %p176
    %p179 = scmp.ne.s32.totalorder %s164, %s178
    %p180 = scmp.eq.s32.totalorder %s23, 0
    %p181 = por %p179, %p180
    %s183 = sadd.s32 %s182, 1
    %p186 = scmp.eq.s32.totalorder %s17, 1
    %p187 = scmp.ne.s32.totalorder %s182, %s184
    %p188 = scmp.eq.s32.totalorder %s17, 0
    %p189 = por %p187, %p188
    %p190 = scmp.ne.s32.totalorder %s182, %s184
    %p191 = scmp.eq.s32.totalorder %s22, 1
    %p192 = por %p190, %p191
    %p193 = scmp.ne.s32.totalorder %s184, %s185
    %p194 = scmp.eq.s32.totalorder %s22, 0
    %p195 = por %p193, %p194
    %p196 = scmp.ne.s32.totalorder %s184, %s185
    %p197 = scmp.eq.s32.totalorder %s23, 1
    %p198 = por %p196, %p197
    %p200 = scmp.ne.s32.totalorder %s185, %s199
    %p201 = scmp.eq.s32.totalorder %s23, 0
    %p202 = por %p200, %p201
    %s204 = sadd.s32 %s203, 1
    %p207 = scmp.eq.s32.totalorder %s17, 1
    %p208 = scmp.ne.s32.totalorder %s203, %s205
    %p209 = scmp.eq.s32.totalorder %s17, 0
    %p210 = por %p208, %p209
    %p211 = scmp.ne.s32.totalorder %s203, %s205
    %p212 = scmp.eq.s32.totalorder %s22, 1
    %p213 = por %p211, %p212
    %p214 = scmp.ne.s32.totalorder %s205, %s206
    %p215 = scmp.eq.s32.totalorder %s22, 0
    %p216 = por %p214, %p215
    %p217 = scmp.ne.s32.totalorder %s205, %s206
    %p218 = scmp.eq.s32.totalorder %s23, 1
    %p219 = por %p217, %p218
    %p221 = scmp.ne.s32.totalorder %s206, %s220
    %p222 = scmp.eq.s32.totalorder %s23, 0
    %p223 = por %p221, %p222
    %s225 = sadd.s32 %s224, 1
    %p228 = scmp.eq.s32.totalorder %s17, 1
    %p229 = scmp.ne.s32.totalorder %s224, %s226
    %p230 = scmp.eq.s32.totalorder %s17, 0
    %p231 = por %p229, %p230
    %p232 = scmp.ne.s32.totalorder %s224, %s226
    %p233 = scmp.eq.s32.totalorder %s22, 1
    %p234 = por %p232, %p233
    %p235 = scmp.ne.s32.totalorder %s226, %s227
    %p236 = scmp.eq.s32.totalorder %s22, 0
    %p237 = por %p235, %p236
    %p238 = scmp.ne.s32.totalorder %s226, %s227
    %p239 = scmp.eq.s32.totalorder %s23, 1
    %p240 = por %p238, %p239
    %p242 = scmp.ne.s32.totalorder %s227, %s241
    %p243 = scmp.eq.s32.totalorder %s23, 0
    %p244 = por %p242, %p243
    %s246 = sadd.s32 %s245, 1
    %p249 = scmp.eq.s32.totalorder %s17, 1
    %p250 = scmp.ne.s32.totalorder %s245, %s247
    %p251 = scmp.eq.s32.totalorder %s17, 0
    %p252 = por %p250, %p251
    %p253 = scmp.ne.s32.totalorder %s245, %s247
    %p254 = scmp.eq.s32.totalorder %s22, 1
    %p255 = por %p253, %p254
    %p256 = scmp.ne.s32.totalorder %s247, %s248
    %p257 = scmp.eq.s32.totalorder %s22, 0
    %p258 = por %p256, %p257
    %p259 = scmp.ne.s32.totalorder %s247, %s248
    %p260 = scmp.eq.s32.totalorder %s23, 1
    %p261 = por %p259, %p260
    %p263 = scmp.ne.s32.totalorder %s248, %s262
    %p264 = scmp.eq.s32.totalorder %s23, 0
    %p265 = por %p263, %p264
    %s266 = ssub.s32 %s17, %s24
    %p267 = scmp.eq.s32.totalorder %s266, 0
    %s269 = sadd.s32 %s268, 1
    %s270 = scalar_select %p267, %s268, %s269
    %p273 = pneg %p267
    %p274 = scmp.eq.s32.totalorder %s17, 1
    %p275 = por %p273, %p274
    %p276 = scmp.ne.s32.totalorder %s268, %s271
    %p277 = scmp.eq.s32.totalorder %s17, 0
    %p278 = por %p276, %p277
    %p279 = scmp.ne.s32.totalorder %s268, %s271
    %p280 = scmp.eq.s32.totalorder %s22, 1
    %p281 = por %p279, %p280
    %p282 = scmp.ne.s32.totalorder %s271, %s272
    %p283 = scmp.eq.s32.totalorder %s22, 0
    %p284 = por %p282, %p283
    %p285 = scmp.ne.s32.totalorder %s271, %s272
    %p286 = scmp.eq.s32.totalorder %s23, 1
    %p287 = por %p285, %p286
    %p289 = scmp.ne.s32.totalorder %s272, %s288
    %p290 = scmp.eq.s32.totalorder %s23, 0
    %p291 = por %p289, %p290
    %p292 = scmp.le.s32.totalorder 1, %s17
    %p293 = scmp.lt.s32.totalorder %s17, 3
    %p294 = pnand %p292, %p293
    %p295 = pneg %p294
    // Predicated region
    $region9: #{view_transformer_forward.3} parent=5 // pred_check
      _
    $region10: #{view_transformer_forward.3} parent=5 // pred_check_branch
      %297 = sbr.rel (%p294) target = $region12
    $region11: #{view_transformer_forward.3} parent=5 // pred_region
      %s298 = ssub.s32 %s17, 1
      // Predicated region
      $region13: #{view_transformer_forward.3} parent=11 // pred_check
        %p299 = pneg %p90
      $region14: #{view_transformer_forward.3} parent=11 // pred_check_branch
        %301 = sbr.rel (%p299) target = $region16
      $region15: #{view_transformer_forward.3} parent=11 // pred_region
        _
      $region16: #{view_transformer_forward.3} parent=11 // pred_fallthru
        _
      // Predicated region
      $region17: #{view_transformer_forward.3} parent=11 // pred_check
        %p302 = pneg %p111
      $region18: #{view_transformer_forward.3} parent=11 // pred_check_branch
        %304 = sbr.rel (%p302) target = $region20
      $region19: #{view_transformer_forward.3} parent=11 // pred_region
        _
      $region20: #{view_transformer_forward.3} parent=11 // pred_fallthru
        _
      // Predicated region
      $region21: #{view_transformer_forward.3} parent=11 // pred_check
        %p305 = pneg %p132
      $region22: #{view_transformer_forward.3} parent=11 // pred_check_branch
        %307 = sbr.rel (%p305) target = $region24
      $region23: #{view_transformer_forward.3} parent=11 // pred_region
        _
      $region24: #{view_transformer_forward.3} parent=11 // pred_fallthru
        _
      // Predicated region
      $region25: #{view_transformer_forward.3} parent=11 // pred_check
        %p308 = pneg %p153
      $region26: #{view_transformer_forward.3} parent=11 // pred_check_branch
        %310 = sbr.rel (%p308) target = $region28
      $region27: #{view_transformer_forward.3} parent=11 // pred_region
        _
      $region28: #{view_transformer_forward.3} parent=11 // pred_fallthru
        _
      // Predicated region
      $region29: #{view_transformer_forward.3} parent=11 // pred_check
        %p311 = pneg %p174
      $region30: #{view_transformer_forward.3} parent=11 // pred_check_branch
        %313 = sbr.rel (%p311) target = $region32
      $region31: #{view_transformer_forward.3} parent=11 // pred_region
        _
      $region32: #{view_transformer_forward.3} parent=11 // pred_fallthru
        _
      // Predicated region
      $region33: #{view_transformer_forward.3} parent=11 // pred_check
        %p314 = pneg %p195
      $region34: #{view_transformer_forward.3} parent=11 // pred_check_branch
        %316 = sbr.rel (%p314) target = $region36
      $region35: #{view_transformer_forward.3} parent=11 // pred_region
        _
      $region36: #{view_transformer_forward.3} parent=11 // pred_fallthru
        _
      // Predicated region
      $region37: #{view_transformer_forward.3} parent=11 // pred_check
        %p317 = pneg %p216
      $region38: #{view_transformer_forward.3} parent=11 // pred_check_branch
        %319 = sbr.rel (%p317) target = $region40
      $region39: #{view_transformer_forward.3} parent=11 // pred_region
        _
      $region40: #{view_transformer_forward.3} parent=11 // pred_fallthru
        _
      // Predicated region
      $region41: #{view_transformer_forward.3} parent=11 // pred_check
        %p320 = pneg %p237
      $region42: #{view_transformer_forward.3} parent=11 // pred_check_branch
        %322 = sbr.rel (%p320) target = $region44
      $region43: #{view_transformer_forward.3} parent=11 // pred_region
        _
      $region44: #{view_transformer_forward.3} parent=11 // pred_fallthru
        _
      // Predicated region
      $region45: #{view_transformer_forward.3} parent=11 // pred_check
        %p323 = pneg %p258
      $region46: #{view_transformer_forward.3} parent=11 // pred_check_branch
        %325 = sbr.rel (%p323) target = $region48
      $region47: #{view_transformer_forward.3} parent=11 // pred_region
        _
      $region48: #{view_transformer_forward.3} parent=11 // pred_fallthru
        _
    $region12: #{view_transformer_forward.3} parent=5 // pred_fallthru
      _
    %p326 = scmp.lt.s32.totalorder %s17, 2
    // Predicated region
    $region49: #{view_transformer_forward.3} parent=5 // pred_check
      %p327 = pneg %p326
    $region50: #{view_transformer_forward.3} parent=5 // pred_check_branch
      %329 = sbr.rel (%p327) target = $region52
    $region51: #{view_transformer_forward.3} parent=5 // pred_region
      // Predicated region
      $region53: #{view_transformer_forward.3} parent=51 // pred_check
        %p330 = pneg %p37
      $region54: #{view_transformer_forward.3} parent=51 // pred_check_branch
        %332 = sbr.rel (%p330) target = $region56
      $region55: #{view_transformer_forward.3} parent=51 // pred_region
        %p333 = scmp.lt.s32.totalorder %s17, 1
        %s334 = scalar_select %p333, %s17, 1
        %s335 = smul.addr %s334, 2
        %s336 = smul.addr %s335, 8
        %s337 = scalar_lea.vmem %s0, %s336
      $region56: #{view_transformer_forward.3} parent=51 // pred_fallthru
        _
      // Predicated region
      $region57: #{view_transformer_forward.3} parent=51 // pred_check
        %p338 = pneg %p63
      $region58: #{view_transformer_forward.3} parent=51 // pred_check_branch
        %340 = sbr.rel (%p338) target = $region60
      $region59: #{view_transformer_forward.3} parent=51 // pred_region
        %p341 = scmp.lt.s32.totalorder %s17, 1
        %s342 = scalar_select %p341, %s17, 1
        %s343 = smul.addr %s342, 2
        %s344 = smul.addr %s343, 8
        %s345 = scalar_lea.vmem %s1, %s344
      $region60: #{view_transformer_forward.3} parent=51 // pred_fallthru
        _
    $region52: #{view_transformer_forward.3} parent=5 // pred_fallthru
      _
    %p346 = scmp.le.s32.totalorder 1, %s17
    %p347 = scmp.lt.s32.totalorder %s17, 3
    %p348 = pnand %p346, %p347
    %p349 = pneg %p348
    // Predicated region
    $region61: #{view_transformer_forward.3} parent=5 // pred_check
      _
    $region62: #{view_transformer_forward.3} parent=5 // pred_check_branch
      %351 = sbr.rel (%p348) target = $region64
    $region63: #{view_transformer_forward.3} parent=5 // pred_region
      %s352 = ssub.s32 %s17, 1
      %p353 = scmp.lt.s32.totalorder %s22, 1
      %s354 = scalar_select %p353, %s22, 1
      %s355 = smul.addr %s354, 2
      %s356 = smul.addr %s355, 8
      %s357 = scalar_lea.vmem %s0, %s356
      %p358 = pneg %p43
      %p359 = pneg %p40
      %p360 = scmp.lt.s32.totalorder %s22, 1
      %s361 = scalar_select %p360, %s22, 1
      %s362 = smul.addr %s361, 2
      %s363 = smul.addr %s362, 8
      %s364 = scalar_lea.vmem %s1, %s363
      %p365 = pneg %p69
      %p366 = pneg %p66
      %p367 = pneg %p90
      %p368 = pneg %p87
      %p369 = pneg %p111
      %p370 = pneg %p108
      %p371 = pneg %p132
      %p372 = pneg %p129
      %p373 = pneg %p153
      %p374 = pneg %p150
      %p375 = pneg %p174
      %p376 = pneg %p171
      %p377 = pneg %p195
      %p378 = pneg %p192
      %p379 = pneg %p216
      %p380 = pneg %p213
      %p381 = pneg %p237
      %p382 = pneg %p234
      %p383 = pneg %p258
      %p384 = pneg %p255
      %p385 = pneg %p284
      %p386 = pneg %p281
      %p387 = scmp.lt.s32.totalorder %s22, 1
      %s388 = scalar_select %p387, %s22, 1
      %s389 = smul.addr %s388, 2
      %s390 = smul.addr %s389, 8
      %s391 = scalar_lea.vmem %s11, %s390
      %p392 = scmp.lt.s32.totalorder %s22, 1
      %s393 = scalar_select %p392, %s22, 1
      %s394 = smul.addr %s393, 2
      %s395 = smul.addr %s394, 8
      %s396 = scalar_lea.vmem %s0, %s395
      %p397 = scmp.lt.s32.totalorder %s22, 1
      %s398 = scalar_select %p397, %s22, 1
      %s399 = smul.addr %s398, 2
      %s400 = smul.addr %s399, 8
      %s401 = scalar_lea.vmem %s1, %s400
      %p402 = scmp.lt.s32.totalorder %s22, 1
      %s403 = scalar_select %p402, %s22, 1
      %s404 = smul.addr %s403, 2
      %s405 = smul.addr %s404, 8
      %s406 = scalar_lea.vmem %s11, %s405
      %v408 = vld [vmem:[%s396] sm:$0xff]
      %v409 = vld [vmem:[%s396 + $0x8] sm:$0xff]
      %v410 = vld [vmem:[%s401] sm:$0xff]
      %v411 = vld [vmem:[%s401 + $0x8] sm:$0xff]
      %v412 = vld [vmem:[%s2] sm:$0x1]
      %v413 = vld [vmem:[%s2 + $0x1] sm:$0x1]
      %v414 = vld [vmem:[%s2 + $0x2] sm:$0x1]
      %v415 = vld [vmem:[%s2 + $0x3] sm:$0x1]
      %v416 = vlaneseq
      %v417 = vshrl.u32 %v416, 7
      %v418 = vsub.s32 0, %v417
      %v419 = vrot.slane %v412, %v418
      %v420 = vsub.f32 %v410, %v419
      %v421 = vsub.f32 %v411, %v419
      %v422 = vadd.f32 %v413, 1e-05
      %v423 = vrsqrt.pop %v422
      %v424 = vlaneseq
      %v425 = vshrl.u32 %v424, 7
      %v426 = vsub.s32 0, %v425
      %v427 = vrot.slane %v423, %v426
      %v428 = vmul.f32 %v420, %v427
      %v429 = vmul.f32 %v421, %v427
      %v430 = vlaneseq
      %v431 = vshrl.u32 %v430, 7
      %v432 = vsub.s32 0, %v431
      %v433 = vrot.slane %v414, %v432
      %v434 = vmul.f32 %v428, %v433
      %v435 = vmul.f32 %v429, %v433
      %v436 = vlaneseq
      %v437 = vshrl.u32 %v436, 7
      %v438 = vsub.s32 0, %v437
      %v439 = vrot.slane %v415, %v438
      %v440 = vadd.f32 %v434, %v439
      %v441 = vadd.f32 %v435, %v439
      %v442 = vld [vmem:[%s3] sm:$0xff]
      %v443 = vld [vmem:[%s3 + $0x8] sm:$0xff]
      %v444 = vpack.c.bf16 %v441, %v440
      %v445 = vpack.c.bf16 %v443, %v442
      %v446 = vld [vmem:[%s4] sm:$0x1]
      %v448 = vlaneseq
      %v449 = vshrl.u32 %v448, 7
      %v450 = vsub.s32 0, %v449
      %v451 = vrot.slane %v446, %v450
      %vm453 = vcmask 130048
      %v455 = vsel %vm453, %v444, 0
      %457 = vmatprep.subr.bf16.mxu0 0
      %458 = vmatpush1.bf16.msra.mxu0 0
      %459 = vmatprep.subr.bf16.mxu0 0
      %460 = vmatpush1.bf16.msra.mxu0 0
      %461 = vmatprep.subr.bf16.mxu0 0
      %462 = vmatpush1.bf16.msra.mxu0 0
      %463 = vmatprep.subr.bf16.mxu0 0
      %464 = vmatpush1.bf16.msra.mxu0 0
      %465 = vmatprep.subr.bf16.mxu0 0
      %466 = vmatpush1.bf16.msra.mxu0 0
      %467 = vmatprep.subr.bf16.mxu0 0
      %468 = vmatpush1.bf16.msra.mxu0 0
      %469 = vmatprep.subr.bf16.mxu0 0
      %470 = vmatpush1.bf16.msra.mxu0 0
      %471 = vmatprep.subr.bf16.mxu0 0
      %472 = vmatpush1.bf16.msra.mxu0 %v445
      %473 = vmatprep.subr.bf16.mxu0 0
      %474 = vmatpush2.bf16.msra.mxu0 0
      %475 = vmatprep.subr.bf16.mxu0 0
      %476 = vmatpush2.bf16.msra.mxu0 0
      %477 = vmatprep.subr.bf16.mxu0 0
      %478 = vmatpush2.bf16.msra.mxu0 0
      %479 = vmatprep.subr.bf16.mxu0 0
      %480 = vmatpush2.bf16.msra.mxu0 0
      %481 = vmatprep.subr.bf16.mxu0 0
      %482 = vmatpush2.bf16.msra.mxu0 0
      %483 = vmatprep.subr.bf16.mxu0 0
      %484 = vmatpush2.bf16.msra.mxu0 0
      %485 = vmatprep.subr.bf16.mxu0 0
      %486 = vmatpush2.bf16.msra.mxu0 0
      %487 = vmatprep.subr.bf16.mxu0 0
      %488 = vmatpush2.bf16.msra.mxu0 0
      %489 = vmatprep.mubr.bf16.mxu0 0
      %490 = vmatmul.mubr.bf16.gmra.mxu0 %v455
      %v491 = vpop.f32.mrf.mxu0
      %v492 = vadd.f32 %v451, %v491
      %v493 = vpop.f32.mrf.mxu0
      %v494 = vpop.f32.mrf.mxu0
      %v495 = vadd.f32 %v451, %v494
      %v496 = vpop.f32.mrf.mxu0
      %497 = vdwg.mxu0
      %v498 = vmax.f32 %v492, 0.0
      %v499 = vmax.f32 %v495, 0.0
      %v500 = vld [vmem:[%s5] sm:$0xff]
      %v501 = vld [vmem:[%s5 + $0x8] sm:$0xff]
      %v502 = vld [vmem:[%s5 + $0x10] sm:$0xff]
      %v503 = vld [vmem:[%s5 + $0x18] sm:$0xff]
      %v504 = vpack.c.bf16 %v499, %v498
      %v505 = vpack.c.bf16 %v501, %v500
      %v506 = vpack.c.bf16 %v503, %v502
      %v507 = vld [vmem:[%s6] sm:$0x1]
      %v509 = vlaneseq
      %v510 = vshrl.u32 %v509, 7
      %v511 = vsub.s32 0, %v510
      %v512 = vrot.slane %v507, %v511
      %vm514 = vcmask 261120
      %v516 = vsel %vm514, %v504, 0
      %518 = vmatprep.subr.bf16.mxu0 0
      %519 = vmatpush1.bf16.msra.mxu0 0
      %520 = vmatprep.subr.bf16.mxu0 0
      %521 = vmatpush1.bf16.msra.mxu0 0
      %522 = vmatprep.subr.bf16.mxu0 0
      %523 = vmatpush1.bf16.msra.mxu0 0
      %524 = vmatprep.subr.bf16.mxu0 0
      %525 = vmatpush1.bf16.msra.mxu0 0
      %526 = vmatprep.subr.bf16.mxu0 0
      %527 = vmatpush1.bf16.msra.mxu0 0
      %528 = vmatprep.subr.bf16.mxu0 0
      %529 = vmatpush1.bf16.msra.mxu0 0
      %530 = vmatprep.subr.bf16.mxu0 0
      %531 = vmatpush1.bf16.msra.mxu0 %v506
      %532 = vmatprep.subr.bf16.mxu0 0
      %533 = vmatpush1.bf16.msra.mxu0 %v505
      %534 = vmatprep.subr.bf16.mxu0 0
      %535 = vmatpush2.bf16.msra.mxu0 0
      %536 = vmatprep.subr.bf16.mxu0 0
      %537 = vmatpush2.bf16.msra.mxu0 0
      %538 = vmatprep.subr.bf16.mxu0 0
      %539 = vmatpush2.bf16.msra.mxu0 0
      %540 = vmatprep.subr.bf16.mxu0 0
      %541 = vmatpush2.bf16.msra.mxu0 0
      %542 = vmatprep.subr.bf16.mxu0 0
      %543 = vmatpush2.bf16.msra.mxu0 0
      %544 = vmatprep.subr.bf16.mxu0 0
      %545 = vmatpush2.bf16.msra.mxu0 0
      %546 = vmatprep.subr.bf16.mxu0 0
      %547 = vmatpush2.bf16.msra.mxu0 0
      %548 = vmatprep.subr.bf16.mxu0 0
      %549 = vmatpush2.bf16.msra.mxu0 0
      %550 = vmatprep.mubr.bf16.mxu0 0
      %551 = vmatmul.mubr.bf16.gmra.mxu0 %v516
      %v552 = vpop.f32.mrf.mxu0
      %v553 = vadd.f32 %v512, %v552
      %v554 = vpop.f32.mrf.mxu0
      %v555 = vpop.f32.mrf.mxu0
      %v556 = vadd.f32 %v512, %v555
      %v557 = vpop.f32.mrf.mxu0
      %558 = vdwg.mxu0
      %v559 = vmax.f32 %v553, 0.0
      %v560 = vmax.f32 %v556, 0.0
      %v561 = vld [vmem:[%s7] sm:$0xff]
      %v562 = vld [vmem:[%s7 + $0x8] sm:$0xff]
      %v563 = vld [vmem:[%s7 + $0x10] sm:$0xff]
      %v564 = vld [vmem:[%s7 + $0x18] sm:$0xff]
      %v565 = vpack.c.bf16 %v560, %v559
      %v566 = vpack.c.bf16 %v562, %v561
      %v567 = vpack.c.bf16 %v564, %v563
      %v568 = vld [vmem:[%s8] sm:$0x1]
      %v570 = vlaneseq
      %v571 = vshrl.u32 %v570, 7
      %v572 = vsub.s32 0, %v571
      %v573 = vrot.slane %v568, %v572
      %v576 = vsel %vm514, %v565, 0
      %578 = vmatprep.subr.bf16.mxu0 0
      %579 = vmatpush1.bf16.msra.mxu0 0
      %580 = vmatprep.subr.bf16.mxu0 0
      %581 = vmatpush1.bf16.msra.mxu0 0
      %582 = vmatprep.subr.bf16.mxu0 0
      %583 = vmatpush1.bf16.msra.mxu0 0
      %584 = vmatprep.subr.bf16.mxu0 0
      %585 = vmatpush1.bf16.msra.mxu0 0
      %586 = vmatprep.subr.bf16.mxu0 0
      %587 = vmatpush1.bf16.msra.mxu0 0
      %588 = vmatprep.subr.bf16.mxu0 0
      %589 = vmatpush1.bf16.msra.mxu0 0
      %590 = vmatprep.subr.bf16.mxu0 0
      %591 = vmatpush1.bf16.msra.mxu0 %v567
      %592 = vmatprep.subr.bf16.mxu0 0
      %593 = vmatpush1.bf16.msra.mxu0 %v566
      %594 = vmatprep.subr.bf16.mxu0 0
      %595 = vmatpush2.bf16.msra.mxu0 0
      %596 = vmatprep.subr.bf16.mxu0 0
      %597 = vmatpush2.bf16.msra.mxu0 0
      %598 = vmatprep.subr.bf16.mxu0 0
      %599 = vmatpush2.bf16.msra.mxu0 0
      %600 = vmatprep.subr.bf16.mxu0 0
      %601 = vmatpush2.bf16.msra.mxu0 0
      %602 = vmatprep.subr.bf16.mxu0 0
      %603 = vmatpush2.bf16.msra.mxu0 0
      %604 = vmatprep.subr.bf16.mxu0 0
      %605 = vmatpush2.bf16.msra.mxu0 0
      %606 = vmatprep.subr.bf16.mxu0 0
      %607 = vmatpush2.bf16.msra.mxu0 0
      %608 = vmatprep.subr.bf16.mxu0 0
      %609 = vmatpush2.bf16.msra.mxu0 0
      %610 = vmatprep.mubr.bf16.mxu0 0
      %611 = vmatmul.mubr.bf16.gmra.mxu0 %v576
      %v612 = vpop.f32.mrf.mxu0
      %v613 = vadd.f32 %v573, %v612
      %v614 = vpop.f32.mrf.mxu0
      %v615 = vpop.f32.mrf.mxu0
      %v616 = vadd.f32 %v573, %v615
      %v617 = vpop.f32.mrf.mxu0
      %618 = vdwg.mxu0
      %v619 = vxor.u32 %v613, 2147483648
      %v620 = vxor.u32 %v616, 2147483648
      %v621 = vmul.f32 %v619, 1.442695
      %v622 = vpow.pop %v621
      %v623 = vmul.f32 %v620, 1.442695
      %v624 = vpow.pop %v623
      %v625 = vadd.f32 %v622, 1.0
      %v626 = vadd.f32 %v624, 1.0
      %v627 = vrcp.pop %v625
      %v628 = vmul.f32 1.0, %v627
      %v629 = vrcp.pop %v626
      %v630 = vmul.f32 1.0, %v629
      %v631 = vmul.f32 %v408, %v628
      %v632 = vmul.f32 %v409, %v630
      %v633 = vld [vmem:[%s9] sm:$0xff]
      %v634 = vld [vmem:[%s9 + $0x8] sm:$0xff]
      %v635 = vld [vmem:[%s9 + $0x10] sm:$0xff]
      %v636 = vld [vmem:[%s9 + $0x18] sm:$0xff]
      %v637 = vpack.c.bf16 %v632, %v631
      %v638 = vpack.c.bf16 %v634, %v633
      %v639 = vpack.c.bf16 %v636, %v635
      %v640 = vld [vmem:[%s10] sm:$0x1]
      %v642 = vlaneseq
      %v643 = vshrl.u32 %v642, 7
      %v644 = vsub.s32 0, %v643
      %v645 = vrot.slane %v640, %v644
      %v648 = vsel %vm514, %v637, 0
      %650 = vmatprep.subr.bf16.mxu0 0
      %651 = vmatpush1.bf16.msra.mxu0 0
      %652 = vmatprep.subr.bf16.mxu0 0
      %653 = vmatpush1.bf16.msra.mxu0 0
      %654 = vmatprep.subr.bf16.mxu0 0
      %655 = vmatpush1.bf16.msra.mxu0 0
      %656 = vmatprep.subr.bf16.mxu0 0
      %657 = vmatpush1.bf16.msra.mxu0 0
      %658 = vmatprep.subr.bf16.mxu0 0
      %659 = vmatpush1.bf16.msra.mxu0 0
      %660 = vmatprep.subr.bf16.mxu0 0
      %661 = vmatpush1.bf16.msra.mxu0 0
      %662 = vmatprep.subr.bf16.mxu0 0
      %663 = vmatpush1.bf16.msra.mxu0 %v639
      %664 = vmatprep.subr.bf16.mxu0 0
      %665 = vmatpush1.bf16.msra.mxu0 %v638
      %666 = vmatprep.subr.bf16.mxu0 0
      %667 = vmatpush2.bf16.msra.mxu0 0
      %668 = vmatprep.subr.bf16.mxu0 0
      %669 = vmatpush2.bf16.msra.mxu0 0
      %670 = vmatprep.subr.bf16.mxu0 0
      %671 = vmatpush2.bf16.msra.mxu0 0
      %672 = vmatprep.subr.bf16.mxu0 0
      %673 = vmatpush2.bf16.msra.mxu0 0
      %674 = vmatprep.subr.bf16.mxu0 0
      %675 = vmatpush2.bf16.msra.mxu0 0
      %676 = vmatprep.subr.bf16.mxu0 0
      %677 = vmatpush2.bf16.msra.mxu0 0
      %678 = vmatprep.subr.bf16.mxu0 0
      %679 = vmatpush2.bf16.msra.mxu0 0
      %680 = vmatprep.subr.bf16.mxu0 0
      %681 = vmatpush2.bf16.msra.mxu0 0
      %682 = vmatprep.mubr.bf16.mxu0 0
      %683 = vmatmul.mubr.bf16.gmra.mxu0 %v648
      %v684 = vpop.f32.mrf.mxu0
      %v685 = vadd.f32 %v645, %v684
      %v686 = vpop.f32.mrf.mxu0
      %v687 = vpop.f32.mrf.mxu0
      %v688 = vadd.f32 %v645, %v687
      %v689 = vpop.f32.mrf.mxu0
      %690 = vdwg.mxu0
      %691 = vst.msk [vmem:[%s406] sm:$0xff] %vm514, %v685
      %692 = vst.msk [vmem:[%s406 + $0x8] sm:$0xff] %vm514, %v688
      %p693 = scmp.lt.s32.totalorder %s22, 1
      %s694 = scalar_select %p693, %s22, 1
      %s695 = smul.addr %s694, 2
      %s696 = smul.addr %s695, 8
      %s697 = scalar_lea.vmem %s11, %s696
      // Predicated region
      $region65: #{view_transformer_forward.3} parent=63 // pred_check
        %p698 = pneg %p281
      $region66: #{view_transformer_forward.3} parent=63 // pred_check_branch
        %700 = sbr.rel (%p698) target = $region68
      $region67: #{view_transformer_forward.3} parent=63 // pred_region
        _
      $region68: #{view_transformer_forward.3} parent=63 // pred_fallthru
        _
    $region64: #{view_transformer_forward.3} parent=5 // pred_fallthru
      _
    %p701 = scmp.le.s32.totalorder 2, %s17
    // Predicated region
    $region69: #{view_transformer_forward.3} parent=5 // pred_check
      %p702 = pneg %p701
    $region70: #{view_transformer_forward.3} parent=5 // pred_check_branch
      %704 = sbr.rel (%p702) target = $region72
    $region71: #{view_transformer_forward.3} parent=5 // pred_region
      %s705 = ssub.s32 %s17, 2
      // Predicated region
      $region73: #{view_transformer_forward.3} parent=71 // pred_check
        %p706 = pneg %p287
      $region74: #{view_transformer_forward.3} parent=71 // pred_check_branch
        %708 = sbr.rel (%p706) target = $region76
      $region75: #{view_transformer_forward.3} parent=71 // pred_region
        %p709 = scmp.lt.s32.totalorder %s23, 1
        %s710 = scalar_select %p709, %s23, 1
        %s711 = smul.addr %s710, 2
        %s712 = smul.addr %s711, 8
        %s713 = scalar_lea.vmem %s11, %s712
      $region76: #{view_transformer_forward.3} parent=71 // pred_fallthru
        _
    $region72: #{view_transformer_forward.3} parent=5 // pred_fallthru
      _
  $region6: #{view_transformer_forward.3} parent=0 // loop_footer
    %s21 = sadd.s32 1, %s17
  $region7: #{view_transformer_forward.3} parent=0 // loop_footer_branch
    %16 = sbr.rel target = $region3
  $region8: #{view_transformer_forward.3} parent=0 // loop_exit
    _

// kernel: view_transformer_forward.4
$region0: #{view_transformer_forward.4}
  #allocation0 [shape = 'u32[]', space=smem, size = 0x4, offset = 0x4, fixed_abs, tag = 'smem constant byte address 0x4 - core index']
  #allocation1 [shape = 'u32[144,128]{1,0:T(1,128)}', space=vmem, size = 0x12000, scoped, tag = 'internal scratch']
  %s0 = inlined_call_operand.vmem [shape: f32[2,16,32], index: 0, kind: input, shape index: {}]
  %s1 = inlined_call_operand.vmem [shape: f32[2,16,9], index: 1, kind: input, shape index: {}]
  %s2 = inlined_call_operand.vmem [shape: f32[9,64], index: 2, kind: input, shape index: {}]
  %s3 = inlined_call_operand.vmem [shape: f32[1,64], index: 3, kind: input, shape index: {}]
  %s4 = inlined_call_operand.vmem [shape: f32[64,64], index: 4, kind: input, shape index: {}]
  %s5 = inlined_call_operand.vmem [shape: f32[1,64], index: 5, kind: input, shape index: {}]
  %s6 = inlined_call_operand.vmem [shape: f32[32,32], index: 6, kind: input, shape index: {}]
  %s7 = inlined_call_operand.vmem [shape: f32[1,32], index: 7, kind: input, shape index: {}]
  %s8 = inlined_call_operand.vmem [shape: f32[32,64], index: 8, kind: input, shape index: {}]
  %s9 = inlined_call_operand.vmem [shape: f32[1,64], index: 9, kind: input, shape index: {}]
  %s10 = inlined_call_operand.vmem [shape: f32[32,32], index: 10, kind: input, shape index: {}]
  %s11 = inlined_call_operand.vmem [shape: f32[1,32], index: 11, kind: input, shape index: {}]
  %s12 = inlined_call_operand.vmem [shape: f32[4,32], index: 12, kind: input, shape index: {}]
  %s13 = inlined_call_operand.vmem [shape: f32[32,64], index: 13, kind: input, shape index: {}]
  %s14 = inlined_call_operand.vmem [shape: f32[1,64], index: 14, kind: input, shape index: {}]
  %s15 = inlined_call_operand.vmem [shape: f32[64,32], index: 15, kind: input, shape index: {}]
  %s16 = inlined_call_operand.vmem [shape: f32[1,32], index: 16, kind: input, shape index: {}]
  %s17 = inlined_call_operand.vmem [shape: f32[2,16,32], index: 17, kind: output, shape index: {}]
  %s18 = sld [smem:[#allocation0]]
  $region101: #{view_transformer_forward.4} parent=0
    _
  %s20 = ssub.s32 1, %s18
  %s21 = scalar_select 0, %s20, %s18
  loop: start=0, step=1, limit=4
  $region2: #{view_transformer_forward.4} parent=0 // loop_pre_header
    _
  $region3: #{view_transformer_forward.4} parent=0 // loop_header
    %s23 = sphi 0, %s27
    %p24 = scmp.ge.s32.totalorder %s23, 4
    %s33 = sphi 0, %s35
    %s36 = sphi 0, %s33
    %s37 = sphi 0, %s36
    %s53 = sphi 0, %s37
    %s59 = sphi 0, %s61
    %s62 = sphi 0, %s59
    %s63 = sphi 0, %s62
    %s79 = sphi 0, %s63
    %s83 = sphi 0, %s83
    %s85 = sphi 0, %s83
    %s86 = sphi 0, %s85
    %s100 = sphi 0, %s86
    %s104 = sphi 0, %s104
    %s106 = sphi 0, %s104
    %s107 = sphi 0, %s106
    %s121 = sphi 0, %s107
    %s125 = sphi 0, %s125
    %s127 = sphi 0, %s125
    %s128 = sphi 0, %s127
    %s142 = sphi 0, %s128
    %s146 = sphi 0, %s146
    %s148 = sphi 0, %s146
    %s149 = sphi 0, %s148
    %s163 = sphi 0, %s149
    %s167 = sphi 0, %s167
    %s169 = sphi 0, %s167
    %s170 = sphi 0, %s169
    %s184 = sphi 0, %s170
    %s188 = sphi 0, %s188
    %s190 = sphi 0, %s188
    %s191 = sphi 0, %s190
    %s205 = sphi 0, %s191
    %s209 = sphi 0, %s209
    %s211 = sphi 0, %s209
    %s212 = sphi 0, %s211
    %s226 = sphi 0, %s212
    %s230 = sphi 0, %s230
    %s232 = sphi 0, %s230
    %s233 = sphi 0, %s232
    %s247 = sphi 0, %s233
    %s251 = sphi 0, %s251
    %s253 = sphi 0, %s251
    %s254 = sphi 0, %s253
    %s268 = sphi 0, %s254
    %s272 = sphi 0, %s272
    %s274 = sphi 0, %s272
    %s275 = sphi 0, %s274
    %s289 = sphi 0, %s275
    %s293 = sphi 0, %s293
    %s295 = sphi 0, %s293
    %s296 = sphi 0, %s295
    %s310 = sphi 0, %s296
    %s314 = sphi 0, %s314
    %s316 = sphi 0, %s314
    %s317 = sphi 0, %s316
    %s331 = sphi 0, %s317
    %s335 = sphi 0, %s335
    %s337 = sphi 0, %s335
    %s338 = sphi 0, %s337
    %s352 = sphi 0, %s338
    %s356 = sphi 0, %s356
    %s358 = sphi 0, %s356
    %s359 = sphi 0, %s358
    %s373 = sphi 0, %s359
    %s377 = sphi 0, %s377
    %s379 = sphi 0, %s377
    %s380 = sphi 0, %s379
    %s394 = sphi 0, %s380
    %s400 = sphi 0, %s402
    %s403 = sphi 0, %s400
    %s404 = sphi 0, %s403
    %s420 = sphi 0, %s404
  $region4: #{view_transformer_forward.4} parent=0 // loop_header_branch
    %26 = sbr.rel (%p24) target = $region8
  $region5: #{view_transformer_forward.4} parent=0 // loop_body
    %s28 = ssub.s32 %s23, 1
    %s29 = ssub.s32 %s23, 2
    %s30 = sadd.s32 %s23, 1
    %s31 = ssub.s32 %s23, %s30
    %p32 = scmp.eq.s32.totalorder %s31, 0
    %s34 = sadd.s32 %s33, 1
    %s35 = scalar_select %p32, %s33, %s34
    %p38 = pneg %p32
    %p39 = scmp.eq.s32.totalorder %s23, 1
    %p40 = por %p38, %p39
    %p41 = scmp.ne.s32.totalorder %s33, %s36
    %p42 = scmp.eq.s32.totalorder %s23, 0
    %p43 = por %p41, %p42
    %p44 = scmp.ne.s32.totalorder %s33, %s36
    %p45 = scmp.eq.s32.totalorder %s28, 1
    %p46 = por %p44, %p45
    %p47 = scmp.ne.s32.totalorder %s36, %s37
    %p48 = scmp.eq.s32.totalorder %s28, 0
    %p49 = por %p47, %p48
    %p50 = scmp.ne.s32.totalorder %s36, %s37
    %p51 = scmp.eq.s32.totalorder %s29, 1
    %p52 = por %p50, %p51
    %p54 = scmp.ne.s32.totalorder %s37, %s53
    %p55 = scmp.eq.s32.totalorder %s29, 0
    %p56 = por %p54, %p55
    %s57 = ssub.s32 %s23, %s30
    %p58 = scmp.eq.s32.totalorder %s57, 0
    %s60 = sadd.s32 %s59, 1
    %s61 = scalar_select %p58, %s59, %s60
    %p64 = pneg %p58
    %p65 = scmp.eq.s32.totalorder %s23, 1
    %p66 = por %p64, %p65
    %p67 = scmp.ne.s32.totalorder %s59, %s62
    %p68 = scmp.eq.s32.totalorder %s23, 0
    %p69 = por %p67, %p68
    %p70 = scmp.ne.s32.totalorder %s59, %s62
    %p71 = scmp.eq.s32.totalorder %s28, 1
    %p72 = por %p70, %p71
    %p73 = scmp.ne.s32.totalorder %s62, %s63
    %p74 = scmp.eq.s32.totalorder %s28, 0
    %p75 = por %p73, %p74
    %p76 = scmp.ne.s32.totalorder %s62, %s63
    %p77 = scmp.eq.s32.totalorder %s29, 1
    %p78 = por %p76, %p77
    %p80 = scmp.ne.s32.totalorder %s63, %s79
    %p81 = scmp.eq.s32.totalorder %s29, 0
    %p82 = por %p80, %p81
    %s84 = sadd.s32 %s83, 1
    %p87 = scmp.eq.s32.totalorder %s23, 1
    %p88 = scmp.ne.s32.totalorder %s83, %s85
    %p89 = scmp.eq.s32.totalorder %s23, 0
    %p90 = por %p88, %p89
    %p91 = scmp.ne.s32.totalorder %s83, %s85
    %p92 = scmp.eq.s32.totalorder %s28, 1
    %p93 = por %p91, %p92
    %p94 = scmp.ne.s32.totalorder %s85, %s86
    %p95 = scmp.eq.s32.totalorder %s28, 0
    %p96 = por %p94, %p95
    %p97 = scmp.ne.s32.totalorder %s85, %s86
    %p98 = scmp.eq.s32.totalorder %s29, 1
    %p99 = por %p97, %p98
    %p101 = scmp.ne.s32.totalorder %s86, %s100
    %p102 = scmp.eq.s32.totalorder %s29, 0
    %p103 = por %p101, %p102
    %s105 = sadd.s32 %s104, 1
    %p108 = scmp.eq.s32.totalorder %s23, 1
    %p109 = scmp.ne.s32.totalorder %s104, %s106
    %p110 = scmp.eq.s32.totalorder %s23, 0
    %p111 = por %p109, %p110
    %p112 = scmp.ne.s32.totalorder %s104, %s106
    %p113 = scmp.eq.s32.totalorder %s28, 1
    %p114 = por %p112, %p113
    %p115 = scmp.ne.s32.totalorder %s106, %s107
    %p116 = scmp.eq.s32.totalorder %s28, 0
    %p117 = por %p115, %p116
    %p118 = scmp.ne.s32.totalorder %s106, %s107
    %p119 = scmp.eq.s32.totalorder %s29, 1
    %p120 = por %p118, %p119
    %p122 = scmp.ne.s32.totalorder %s107, %s121
    %p123 = scmp.eq.s32.totalorder %s29, 0
    %p124 = por %p122, %p123
    %s126 = sadd.s32 %s125, 1
    %p129 = scmp.eq.s32.totalorder %s23, 1
    %p130 = scmp.ne.s32.totalorder %s125, %s127
    %p131 = scmp.eq.s32.totalorder %s23, 0
    %p132 = por %p130, %p131
    %p133 = scmp.ne.s32.totalorder %s125, %s127
    %p134 = scmp.eq.s32.totalorder %s28, 1
    %p135 = por %p133, %p134
    %p136 = scmp.ne.s32.totalorder %s127, %s128
    %p137 = scmp.eq.s32.totalorder %s28, 0
    %p138 = por %p136, %p137
    %p139 = scmp.ne.s32.totalorder %s127, %s128
    %p140 = scmp.eq.s32.totalorder %s29, 1
    %p141 = por %p139, %p140
    %p143 = scmp.ne.s32.totalorder %s128, %s142
    %p144 = scmp.eq.s32.totalorder %s29, 0
    %p145 = por %p143, %p144
    %s147 = sadd.s32 %s146, 1
    %p150 = scmp.eq.s32.totalorder %s23, 1
    %p151 = scmp.ne.s32.totalorder %s146, %s148
    %p152 = scmp.eq.s32.totalorder %s23, 0
    %p153 = por %p151, %p152
    %p154 = scmp.ne.s32.totalorder %s146, %s148
    %p155 = scmp.eq.s32.totalorder %s28, 1
    %p156 = por %p154, %p155
    %p157 = scmp.ne.s32.totalorder %s148, %s149
    %p158 = scmp.eq.s32.totalorder %s28, 0
    %p159 = por %p157, %p158
    %p160 = scmp.ne.s32.totalorder %s148, %s149
    %p161 = scmp.eq.s32.totalorder %s29, 1
    %p162 = por %p160, %p161
    %p164 = scmp.ne.s32.totalorder %s149, %s163
    %p165 = scmp.eq.s32.totalorder %s29, 0
    %p166 = por %p164, %p165
    %s168 = sadd.s32 %s167, 1
    %p171 = scmp.eq.s32.totalorder %s23, 1
    %p172 = scmp.ne.s32.totalorder %s167, %s169
    %p173 = scmp.eq.s32.totalorder %s23, 0
    %p174 = por %p172, %p173
    %p175 = scmp.ne.s32.totalorder %s167, %s169
    %p176 = scmp.eq.s32.totalorder %s28, 1
    %p177 = por %p175, %p176
    %p178 = scmp.ne.s32.totalorder %s169, %s170
    %p179 = scmp.eq.s32.totalorder %s28, 0
    %p180 = por %p178, %p179
    %p181 = scmp.ne.s32.totalorder %s169, %s170
    %p182 = scmp.eq.s32.totalorder %s29, 1
    %p183 = por %p181, %p182
    %p185 = scmp.ne.s32.totalorder %s170, %s184
    %p186 = scmp.eq.s32.totalorder %s29, 0
    %p187 = por %p185, %p186
    %s189 = sadd.s32 %s188, 1
    %p192 = scmp.eq.s32.totalorder %s23, 1
    %p193 = scmp.ne.s32.totalorder %s188, %s190
    %p194 = scmp.eq.s32.totalorder %s23, 0
    %p195 = por %p193, %p194
    %p196 = scmp.ne.s32.totalorder %s188, %s190
    %p197 = scmp.eq.s32.totalorder %s28, 1
    %p198 = por %p196, %p197
    %p199 = scmp.ne.s32.totalorder %s190, %s191
    %p200 = scmp.eq.s32.totalorder %s28, 0
    %p201 = por %p199, %p200
    %p202 = scmp.ne.s32.totalorder %s190, %s191
    %p203 = scmp.eq.s32.totalorder %s29, 1
    %p204 = por %p202, %p203
    %p206 = scmp.ne.s32.totalorder %s191, %s205
    %p207 = scmp.eq.s32.totalorder %s29, 0
    %p208 = por %p206, %p207
    %s210 = sadd.s32 %s209, 1
    %p213 = scmp.eq.s32.totalorder %s23, 1
    %p214 = scmp.ne.s32.totalorder %s209, %s211
    %p215 = scmp.eq.s32.totalorder %s23, 0
    %p216 = por %p214, %p215
    %p217 = scmp.ne.s32.totalorder %s209, %s211
    %p218 = scmp.eq.s32.totalorder %s28, 1
    %p219 = por %p217, %p218
    %p220 = scmp.ne.s32.totalorder %s211, %s212
    %p221 = scmp.eq.s32.totalorder %s28, 0
    %p222 = por %p220, %p221
    %p223 = scmp.ne.s32.totalorder %s211, %s212
    %p224 = scmp.eq.s32.totalorder %s29, 1
    %p225 = por %p223, %p224
    %p227 = scmp.ne.s32.totalorder %s212, %s226
    %p228 = scmp.eq.s32.totalorder %s29, 0
    %p229 = por %p227, %p228
    %s231 = sadd.s32 %s230, 1
    %p234 = scmp.eq.s32.totalorder %s23, 1
    %p235 = scmp.ne.s32.totalorder %s230, %s232
    %p236 = scmp.eq.s32.totalorder %s23, 0
    %p237 = por %p235, %p236
    %p238 = scmp.ne.s32.totalorder %s230, %s232
    %p239 = scmp.eq.s32.totalorder %s28, 1
    %p240 = por %p238, %p239
    %p241 = scmp.ne.s32.totalorder %s232, %s233
    %p242 = scmp.eq.s32.totalorder %s28, 0
    %p243 = por %p241, %p242
    %p244 = scmp.ne.s32.totalorder %s232, %s233
    %p245 = scmp.eq.s32.totalorder %s29, 1
    %p246 = por %p244, %p245
    %p248 = scmp.ne.s32.totalorder %s233, %s247
    %p249 = scmp.eq.s32.totalorder %s29, 0
    %p250 = por %p248, %p249
    %s252 = sadd.s32 %s251, 1
    %p255 = scmp.eq.s32.totalorder %s23, 1
    %p256 = scmp.ne.s32.totalorder %s251, %s253
    %p257 = scmp.eq.s32.totalorder %s23, 0
    %p258 = por %p256, %p257
    %p259 = scmp.ne.s32.totalorder %s251, %s253
    %p260 = scmp.eq.s32.totalorder %s28, 1
    %p261 = por %p259, %p260
    %p262 = scmp.ne.s32.totalorder %s253, %s254
    %p263 = scmp.eq.s32.totalorder %s28, 0
    %p264 = por %p262, %p263
    %p265 = scmp.ne.s32.totalorder %s253, %s254
    %p266 = scmp.eq.s32.totalorder %s29, 1
    %p267 = por %p265, %p266
    %p269 = scmp.ne.s32.totalorder %s254, %s268
    %p270 = scmp.eq.s32.totalorder %s29, 0
    %p271 = por %p269, %p270
    %s273 = sadd.s32 %s272, 1
    %p276 = scmp.eq.s32.totalorder %s23, 1
    %p277 = scmp.ne.s32.totalorder %s272, %s274
    %p278 = scmp.eq.s32.totalorder %s23, 0
    %p279 = por %p277, %p278
    %p280 = scmp.ne.s32.totalorder %s272, %s274
    %p281 = scmp.eq.s32.totalorder %s28, 1
    %p282 = por %p280, %p281
    %p283 = scmp.ne.s32.totalorder %s274, %s275
    %p284 = scmp.eq.s32.totalorder %s28, 0
    %p285 = por %p283, %p284
    %p286 = scmp.ne.s32.totalorder %s274, %s275
    %p287 = scmp.eq.s32.totalorder %s29, 1
    %p288 = por %p286, %p287
    %p290 = scmp.ne.s32.totalorder %s275, %s289
    %p291 = scmp.eq.s32.totalorder %s29, 0
    %p292 = por %p290, %p291
    %s294 = sadd.s32 %s293, 1
    %p297 = scmp.eq.s32.totalorder %s23, 1
    %p298 = scmp.ne.s32.totalorder %s293, %s295
    %p299 = scmp.eq.s32.totalorder %s23, 0
    %p300 = por %p298, %p299
    %p301 = scmp.ne.s32.totalorder %s293, %s295
    %p302 = scmp.eq.s32.totalorder %s28, 1
    %p303 = por %p301, %p302
    %p304 = scmp.ne.s32.totalorder %s295, %s296
    %p305 = scmp.eq.s32.totalorder %s28, 0
    %p306 = por %p304, %p305
    %p307 = scmp.ne.s32.totalorder %s295, %s296
    %p308 = scmp.eq.s32.totalorder %s29, 1
    %p309 = por %p307, %p308
    %p311 = scmp.ne.s32.totalorder %s296, %s310
    %p312 = scmp.eq.s32.totalorder %s29, 0
    %p313 = por %p311, %p312
    %s315 = sadd.s32 %s314, 1
    %p318 = scmp.eq.s32.totalorder %s23, 1
    %p319 = scmp.ne.s32.totalorder %s314, %s316
    %p320 = scmp.eq.s32.totalorder %s23, 0
    %p321 = por %p319, %p320
    %p322 = scmp.ne.s32.totalorder %s314, %s316
    %p323 = scmp.eq.s32.totalorder %s28, 1
    %p324 = por %p322, %p323
    %p325 = scmp.ne.s32.totalorder %s316, %s317
    %p326 = scmp.eq.s32.totalorder %s28, 0
    %p327 = por %p325, %p326
    %p328 = scmp.ne.s32.totalorder %s316, %s317
    %p329 = scmp.eq.s32.totalorder %s29, 1
    %p330 = por %p328, %p329
    %p332 = scmp.ne.s32.totalorder %s317, %s331
    %p333 = scmp.eq.s32.totalorder %s29, 0
    %p334 = por %p332, %p333
    %s336 = sadd.s32 %s335, 1
    %p339 = scmp.eq.s32.totalorder %s23, 1
    %p340 = scmp.ne.s32.totalorder %s335, %s337
    %p341 = scmp.eq.s32.totalorder %s23, 0
    %p342 = por %p340, %p341
    %p343 = scmp.ne.s32.totalorder %s335, %s337
    %p344 = scmp.eq.s32.totalorder %s28, 1
    %p345 = por %p343, %p344
    %p346 = scmp.ne.s32.totalorder %s337, %s338
    %p347 = scmp.eq.s32.totalorder %s28, 0
    %p348 = por %p346, %p347
    %p349 = scmp.ne.s32.totalorder %s337, %s338
    %p350 = scmp.eq.s32.totalorder %s29, 1
    %p351 = por %p349, %p350
    %p353 = scmp.ne.s32.totalorder %s338, %s352
    %p354 = scmp.eq.s32.totalorder %s29, 0
    %p355 = por %p353, %p354
    %s357 = sadd.s32 %s356, 1
    %p360 = scmp.eq.s32.totalorder %s23, 1
    %p361 = scmp.ne.s32.totalorder %s356, %s358
    %p362 = scmp.eq.s32.totalorder %s23, 0
    %p363 = por %p361, %p362
    %p364 = scmp.ne.s32.totalorder %s356, %s358
    %p365 = scmp.eq.s32.totalorder %s28, 1
    %p366 = por %p364, %p365
    %p367 = scmp.ne.s32.totalorder %s358, %s359
    %p368 = scmp.eq.s32.totalorder %s28, 0
    %p369 = por %p367, %p368
    %p370 = scmp.ne.s32.totalorder %s358, %s359
    %p371 = scmp.eq.s32.totalorder %s29, 1
    %p372 = por %p370, %p371
    %p374 = scmp.ne.s32.totalorder %s359, %s373
    %p375 = scmp.eq.s32.totalorder %s29, 0
    %p376 = por %p374, %p375
    %s378 = sadd.s32 %s377, 1
    %p381 = scmp.eq.s32.totalorder %s23, 1
    %p382 = scmp.ne.s32.totalorder %s377, %s379
    %p383 = scmp.eq.s32.totalorder %s23, 0
    %p384 = por %p382, %p383
    %p385 = scmp.ne.s32.totalorder %s377, %s379
    %p386 = scmp.eq.s32.totalorder %s28, 1
    %p387 = por %p385, %p386
    %p388 = scmp.ne.s32.totalorder %s379, %s380
    %p389 = scmp.eq.s32.totalorder %s28, 0
    %p390 = por %p388, %p389
    %p391 = scmp.ne.s32.totalorder %s379, %s380
    %p392 = scmp.eq.s32.totalorder %s29, 1
    %p393 = por %p391, %p392
    %p395 = scmp.ne.s32.totalorder %s380, %s394
    %p396 = scmp.eq.s32.totalorder %s29, 0
    %p397 = por %p395, %p396
    %s398 = ssub.s32 %s23, %s30
    %p399 = scmp.eq.s32.totalorder %s398, 0
    %s401 = sadd.s32 %s400, 1
    %s402 = scalar_select %p399, %s400, %s401
    %p405 = pneg %p399
    %p406 = scmp.eq.s32.totalorder %s23, 1
    %p407 = por %p405, %p406
    %p408 = scmp.ne.s32.totalorder %s400, %s403
    %p409 = scmp.eq.s32.totalorder %s23, 0
    %p410 = por %p408, %p409
    %p411 = scmp.ne.s32.totalorder %s400, %s403
    %p412 = scmp.eq.s32.totalorder %s28, 1
    %p413 = por %p411, %p412
    %p414 = scmp.ne.s32.totalorder %s403, %s404
    %p415 = scmp.eq.s32.totalorder %s28, 0
    %p416 = por %p414, %p415
    %p417 = scmp.ne.s32.totalorder %s403, %s404
    %p418 = scmp.eq.s32.totalorder %s29, 1
    %p419 = por %p417, %p418
    %p421 = scmp.ne.s32.totalorder %s404, %s420
    %p422 = scmp.eq.s32.totalorder %s29, 0
    %p423 = por %p421, %p422
    %p424 = scmp.le.s32.totalorder 1, %s23
    %p425 = scmp.lt.s32.totalorder %s23, 3
    %p426 = pnand %p424, %p425
    %p427 = pneg %p426
    // Predicated region
    $region9: #{view_transformer_forward.4} parent=5 // pred_check
      _
    $region10: #{view_transformer_forward.4} parent=5 // pred_check_branch
      %429 = sbr.rel (%p426) target = $region12
    $region11: #{view_transformer_forward.4} parent=5 // pred_region
      %s430 = ssub.s32 %s23, 1
      // Predicated region
      $region13: #{view_transformer_forward.4} parent=11 // pred_check
        %p431 = pneg %p96
      $region14: #{view_transformer_forward.4} parent=11 // pred_check_branch
        %433 = sbr.rel (%p431) target = $region16
      $region15: #{view_transformer_forward.4} parent=11 // pred_region
        _
      $region16: #{view_transformer_forward.4} parent=11 // pred_fallthru
        _
      // Predicated region
      $region17: #{view_transformer_forward.4} parent=11 // pred_check
        %p434 = pneg %p117
      $region18: #{view_transformer_forward.4} parent=11 // pred_check_branch
        %436 = sbr.rel (%p434) target = $region20
      $region19: #{view_transformer_forward.4} parent=11 // pred_region
        _
      $region20: #{view_transformer_forward.4} parent=11 // pred_fallthru
        _
      // Predicated region
      $region21: #{view_transformer_forward.4} parent=11 // pred_check
        %p437 = pneg %p138
      $region22: #{view_transformer_forward.4} parent=11 // pred_check_branch
        %439 = sbr.rel (%p437) target = $region24
      $region23: #{view_transformer_forward.4} parent=11 // pred_region
        _
      $region24: #{view_transformer_forward.4} parent=11 // pred_fallthru
        _
      // Predicated region
      $region25: #{view_transformer_forward.4} parent=11 // pred_check
        %p440 = pneg %p159
      $region26: #{view_transformer_forward.4} parent=11 // pred_check_branch
        %442 = sbr.rel (%p440) target = $region28
      $region27: #{view_transformer_forward.4} parent=11 // pred_region
        _
      $region28: #{view_transformer_forward.4} parent=11 // pred_fallthru
        _
      // Predicated region
      $region29: #{view_transformer_forward.4} parent=11 // pred_check
        %p443 = pneg %p180
      $region30: #{view_transformer_forward.4} parent=11 // pred_check_branch
        %445 = sbr.rel (%p443) target = $region32
      $region31: #{view_transformer_forward.4} parent=11 // pred_region
        _
      $region32: #{view_transformer_forward.4} parent=11 // pred_fallthru
        _
      // Predicated region
      $region33: #{view_transformer_forward.4} parent=11 // pred_check
        %p446 = pneg %p201
      $region34: #{view_transformer_forward.4} parent=11 // pred_check_branch
        %448 = sbr.rel (%p446) target = $region36
      $region35: #{view_transformer_forward.4} parent=11 // pred_region
        _
      $region36: #{view_transformer_forward.4} parent=11 // pred_fallthru
        _
      // Predicated region
      $region37: #{view_transformer_forward.4} parent=11 // pred_check
        %p449 = pneg %p222
      $region38: #{view_transformer_forward.4} parent=11 // pred_check_branch
        %451 = sbr.rel (%p449) target = $region40
      $region39: #{view_transformer_forward.4} parent=11 // pred_region
        _
      $region40: #{view_transformer_forward.4} parent=11 // pred_fallthru
        _
      // Predicated region
      $region41: #{view_transformer_forward.4} parent=11 // pred_check
        %p452 = pneg %p243
      $region42: #{view_transformer_forward.4} parent=11 // pred_check_branch
        %454 = sbr.rel (%p452) target = $region44
      $region43: #{view_transformer_forward.4} parent=11 // pred_region
        _
      $region44: #{view_transformer_forward.4} parent=11 // pred_fallthru
        _
      // Predicated region
      $region45: #{view_transformer_forward.4} parent=11 // pred_check
        %p455 = pneg %p264
      $region46: #{view_transformer_forward.4} parent=11 // pred_check_branch
        %457 = sbr.rel (%p455) target = $region48
      $region47: #{view_transformer_forward.4} parent=11 // pred_region
        _
      $region48: #{view_transformer_forward.4} parent=11 // pred_fallthru
        _
      // Predicated region
      $region49: #{view_transformer_forward.4} parent=11 // pred_check
        %p458 = pneg %p285
      $region50: #{view_transformer_forward.4} parent=11 // pred_check_branch
        %460 = sbr.rel (%p458) target = $region52
      $region51: #{view_transformer_forward.4} parent=11 // pred_region
        _
      $region52: #{view_transformer_forward.4} parent=11 // pred_fallthru
        _
      // Predicated region
      $region53: #{view_transformer_forward.4} parent=11 // pred_check
        %p461 = pneg %p306
      $region54: #{view_transformer_forward.4} parent=11 // pred_check_branch
        %463 = sbr.rel (%p461) target = $region56
      $region55: #{view_transformer_forward.4} parent=11 // pred_region
        _
      $region56: #{view_transformer_forward.4} parent=11 // pred_fallthru
        _
      // Predicated region
      $region57: #{view_transformer_forward.4} parent=11 // pred_check
        %p464 = pneg %p327
      $region58: #{view_transformer_forward.4} parent=11 // pred_check_branch
        %466 = sbr.rel (%p464) target = $region60
      $region59: #{view_transformer_forward.4} parent=11 // pred_region
        _
      $region60: #{view_transformer_forward.4} parent=11 // pred_fallthru
        _
      // Predicated region
      $region61: #{view_transformer_forward.4} parent=11 // pred_check
        %p467 = pneg %p348
      $region62: #{view_transformer_forward.4} parent=11 // pred_check_branch
        %469 = sbr.rel (%p467) target = $region64
      $region63: #{view_transformer_forward.4} parent=11 // pred_region
        _
      $region64: #{view_transformer_forward.4} parent=11 // pred_fallthru
        _
      // Predicated region
      $region65: #{view_transformer_forward.4} parent=11 // pred_check
        %p470 = pneg %p369
      $region66: #{view_transformer_forward.4} parent=11 // pred_check_branch
        %472 = sbr.rel (%p470) target = $region68
      $region67: #{view_transformer_forward.4} parent=11 // pred_region
        _
      $region68: #{view_transformer_forward.4} parent=11 // pred_fallthru
        _
      // Predicated region
      $region69: #{view_transformer_forward.4} parent=11 // pred_check
        %p473 = pneg %p390
      $region70: #{view_transformer_forward.4} parent=11 // pred_check_branch
        %475 = sbr.rel (%p473) target = $region72
      $region71: #{view_transformer_forward.4} parent=11 // pred_region
        _
      $region72: #{view_transformer_forward.4} parent=11 // pred_fallthru
        _
    $region12: #{view_transformer_forward.4} parent=5 // pred_fallthru
      _
    %p476 = scmp.lt.s32.totalorder %s23, 2
    // Predicated region
    $region73: #{view_transformer_forward.4} parent=5 // pred_check
      %p477 = pneg %p476
    $region74: #{view_transformer_forward.4} parent=5 // pred_check_branch
      %479 = sbr.rel (%p477) target = $region76
    $region75: #{view_transformer_forward.4} parent=5 // pred_region
      // Predicated region
      $region77: #{view_transformer_forward.4} parent=75 // pred_check
        %p480 = pneg %p43
      $region78: #{view_transformer_forward.4} parent=75 // pred_check_branch
        %482 = sbr.rel (%p480) target = $region80
      $region79: #{view_transformer_forward.4} parent=75 // pred_region
        %p483 = scmp.lt.s32.totalorder %s23, 1
        %s484 = scalar_select %p483, %s23, 1
        %s485 = smul.addr %s484, 2
        %s486 = smul.addr %s485, 8
        %s487 = scalar_lea.vmem %s0, %s486
      $region80: #{view_transformer_forward.4} parent=75 // pred_fallthru
        _
      // Predicated region
      $region81: #{view_transformer_forward.4} parent=75 // pred_check
        %p488 = pneg %p69
      $region82: #{view_transformer_forward.4} parent=75 // pred_check_branch
        %490 = sbr.rel (%p488) target = $region84
      $region83: #{view_transformer_forward.4} parent=75 // pred_region
        %p491 = scmp.lt.s32.totalorder %s23, 1
        %s492 = scalar_select %p491, %s23, 1
        %s493 = smul.addr %s492, 2
        %s494 = smul.addr %s493, 8
        %s495 = scalar_lea.vmem %s1, %s494
      $region84: #{view_transformer_forward.4} parent=75 // pred_fallthru
        _
    $region76: #{view_transformer_forward.4} parent=5 // pred_fallthru
      _
    %p496 = scmp.le.s32.totalorder 1, %s23
    %p497 = scmp.lt.s32.totalorder %s23, 3
    %p498 = pnand %p496, %p497
    %p499 = pneg %p498
    // Predicated region
    $region85: #{view_transformer_forward.4} parent=5 // pred_check
      _
    $region86: #{view_transformer_forward.4} parent=5 // pred_check_branch
      %501 = sbr.rel (%p498) target = $region88
    $region87: #{view_transformer_forward.4} parent=5 // pred_region
      %s502 = ssub.s32 %s23, 1
      %p503 = scmp.lt.s32.totalorder %s28, 1
      %s504 = scalar_select %p503, %s28, 1
      %s505 = smul.addr %s504, 2
      %s506 = smul.addr %s505, 8
      %s507 = scalar_lea.vmem %s0, %s506
      %p508 = pneg %p49
      %p509 = pneg %p46
      %p510 = scmp.lt.s32.totalorder %s28, 1
      %s511 = scalar_select %p510, %s28, 1
      %s512 = smul.addr %s511, 2
      %s513 = smul.addr %s512, 8
      %s514 = scalar_lea.vmem %s1, %s513
      %p515 = pneg %p75
      %p516 = pneg %p72
      %p517 = pneg %p96
      %p518 = pneg %p93
      %p519 = pneg %p117
      %p520 = pneg %p114
      %p521 = pneg %p138
      %p522 = pneg %p135
      %p523 = pneg %p159
      %p524 = pneg %p156
      %p525 = pneg %p180
      %p526 = pneg %p177
      %p527 = pneg %p201
      %p528 = pneg %p198
      %p529 = pneg %p222
      %p530 = pneg %p219
      %p531 = pneg %p243
      %p532 = pneg %p240
      %p533 = pneg %p264
      %p534 = pneg %p261
      %p535 = pneg %p285
      %p536 = pneg %p282
      %p537 = pneg %p306
      %p538 = pneg %p303
      %p539 = pneg %p327
      %p540 = pneg %p324
      %p541 = pneg %p348
      %p542 = pneg %p345
      %p543 = pneg %p369
      %p544 = pneg %p366
      %p545 = pneg %p390
      %p546 = pneg %p387
      %p547 = pneg %p416
      %p548 = pneg %p413
      %p549 = scmp.lt.s32.totalorder %s28, 1
      %s550 = scalar_select %p549, %s28, 1
      %s551 = smul.addr %s550, 2
      %s552 = smul.addr %s551, 8
      %s553 = scalar_lea.vmem %s17, %s552
      %p554 = scmp.lt.s32.totalorder %s28, 1
      %s555 = scalar_select %p554, %s28, 1
      %s556 = smul.addr %s555, 2
      %s557 = smul.addr %s556, 8
      %s558 = scalar_lea.vmem %s0, %s557
      %p559 = scmp.lt.s32.totalorder %s28, 1
      %s560 = scalar_select %p559, %s28, 1
      %s561 = smul.addr %s560, 2
      %s562 = smul.addr %s561, 8
      %s563 = scalar_lea.vmem %s1, %s562
      %p564 = scmp.lt.s32.totalorder %s28, 1
      %s565 = scalar_select %p564, %s28, 1
      %s566 = smul.addr %s565, 2
      %s567 = smul.addr %s566, 8
      %s568 = scalar_lea.vmem %s17, %s567
      %v570 = vld [vmem:[%s558] sm:$0xff]
      %v571 = vld [vmem:[%s558 + $0x8] sm:$0xff]
      %v572 = vld [vmem:[%s563] sm:$0xff]
      %v573 = vld [vmem:[%s563 + $0x8] sm:$0xff]
      %v574 = vld [vmem:[%s2] sm:$0xff]
      %v575 = vld [vmem:[%s2 + $0x8] sm:$0x1]
      %v576 = vpack.c.bf16 %v573, %v572
      %v577 = vpack.c.bf16 %v575, %v574
      %v578 = vld [vmem:[%s3] sm:$0x1]
      %v580 = vlaneseq
      %v581 = vshrl.u32 %v580, 7
      %v582 = vsub.s32 0, %v581
      %v583 = vrot.slane %v578, %v582
      %vm585 = vcmask 72704
      %v587 = vsel %vm585, %v576, 0
      %vm589 = vcmask 1043456
      %vm590 = vcmask 1044480
      %v591 = vsel %vm589, 4294967295, 65535
      %v592 = vsel %vm590, %v591, 0
      %v594 = vand.u32 %v577, %v592
      %596 = vmatprep.subr.bf16.mxu0 0
      %597 = vmatpush1.bf16.msra.mxu0 0
      %598 = vmatprep.subr.bf16.mxu0 0
      %599 = vmatpush1.bf16.msra.mxu0 0
      %600 = vmatprep.subr.bf16.mxu0 0
      %601 = vmatpush1.bf16.msra.mxu0 0
      %602 = vmatprep.subr.bf16.mxu0 0
      %603 = vmatpush1.bf16.msra.mxu0 0
      %604 = vmatprep.subr.bf16.mxu0 0
      %605 = vmatpush1.bf16.msra.mxu0 0
      %606 = vmatprep.subr.bf16.mxu0 0
      %607 = vmatpush1.bf16.msra.mxu0 0
      %608 = vmatprep.subr.bf16.mxu0 0
      %609 = vmatpush1.bf16.msra.mxu0 0
      %610 = vmatprep.subr.bf16.mxu0 0
      %611 = vmatpush1.bf16.msra.mxu0 %v594
      %612 = vmatprep.subr.bf16.mxu0 0
      %613 = vmatpush2.bf16.msra.mxu0 0
      %614 = vmatprep.subr.bf16.mxu0 0
      %615 = vmatpush2.bf16.msra.mxu0 0
      %616 = vmatprep.subr.bf16.mxu0 0
      %617 = vmatpush2.bf16.msra.mxu0 0
      %618 = vmatprep.subr.bf16.mxu0 0
      %619 = vmatpush2.bf16.msra.mxu0 0
      %620 = vmatprep.subr.bf16.mxu0 0
      %621 = vmatpush2.bf16.msra.mxu0 0
      %622 = vmatprep.subr.bf16.mxu0 0
      %623 = vmatpush2.bf16.msra.mxu0 0
      %624 = vmatprep.subr.bf16.mxu0 0
      %625 = vmatpush2.bf16.msra.mxu0 0
      %626 = vmatprep.subr.bf16.mxu0 0
      %627 = vmatpush2.bf16.msra.mxu0 0
      %628 = vmatprep.mubr.bf16.mxu0 0
      %629 = vmatmul.mubr.bf16.gmra.mxu0 %v587
      %v630 = vpop.f32.mrf.mxu0
      %v631 = vadd.f32 %v583, %v630
      %v632 = vpop.f32.mrf.mxu0
      %v633 = vpop.f32.mrf.mxu0
      %v634 = vadd.f32 %v583, %v633
      %v635 = vpop.f32.mrf.mxu0
      %636 = vdwg.mxu0
      %v637 = vmax.f32 %v631, 0.0
      %v638 = vmax.f32 %v634, 0.0
      %v639 = vld [vmem:[%s4] sm:$0xff]
      %v640 = vld [vmem:[%s4 + $0x8] sm:$0xff]
      %v641 = vld [vmem:[%s4 + $0x10] sm:$0xff]
      %v642 = vld [vmem:[%s4 + $0x18] sm:$0xff]
      %v643 = vld [vmem:[%s4 + $0x20] sm:$0xff]
      %v644 = vld [vmem:[%s4 + $0x28] sm:$0xff]
      %v645 = vld [vmem:[%s4 + $0x30] sm:$0xff]
      %v646 = vld [vmem:[%s4 + $0x38] sm:$0xff]
      %v647 = vpack.c.bf16 %v638, %v637
      %v648 = vpack.c.bf16 %v640, %v639
      %v649 = vpack.c.bf16 %v642, %v641
      %v650 = vpack.c.bf16 %v644, %v643
      %v651 = vpack.c.bf16 %v646, %v645
      %v652 = vld [vmem:[%s5] sm:$0x1]
      %v654 = vlaneseq
      %v655 = vshrl.u32 %v654, 7
      %v656 = vsub.s32 0, %v655
      %v657 = vrot.slane %v652, %v656
      %vm659 = vcmask 523264
      %v661 = vsel %vm659, %v647, 0
      %663 = vmatprep.subr.bf16.mxu0 0
      %664 = vmatpush1.bf16.msra.mxu0 0
      %665 = vmatprep.subr.bf16.mxu0 0
      %666 = vmatpush1.bf16.msra.mxu0 0
      %667 = vmatprep.subr.bf16.mxu0 0
      %668 = vmatpush1.bf16.msra.mxu0 0
      %669 = vmatprep.subr.bf16.mxu0 0
      %670 = vmatpush1.bf16.msra.mxu0 0
      %671 = vmatprep.subr.bf16.mxu0 0
      %672 = vmatpush1.bf16.msra.mxu0 %v651
      %673 = vmatprep.subr.bf16.mxu0 0
      %674 = vmatpush1.bf16.msra.mxu0 %v650
      %675 = vmatprep.subr.bf16.mxu0 0
      %676 = vmatpush1.bf16.msra.mxu0 %v649
      %677 = vmatprep.subr.bf16.mxu0 0
      %678 = vmatpush1.bf16.msra.mxu0 %v648
      %679 = vmatprep.subr.bf16.mxu0 0
      %680 = vmatpush2.bf16.msra.mxu0 0
      %681 = vmatprep.subr.bf16.mxu0 0
      %682 = vmatpush2.bf16.msra.mxu0 0
      %683 = vmatprep.subr.bf16.mxu0 0
      %684 = vmatpush2.bf16.msra.mxu0 0
      %685 = vmatprep.subr.bf16.mxu0 0
      %686 = vmatpush2.bf16.msra.mxu0 0
      %687 = vmatprep.subr.bf16.mxu0 0
      %688 = vmatpush2.bf16.msra.mxu0 0
      %689 = vmatprep.subr.bf16.mxu0 0
      %690 = vmatpush2.bf16.msra.mxu0 0
      %691 = vmatprep.subr.bf16.mxu0 0
      %692 = vmatpush2.bf16.msra.mxu0 0
      %693 = vmatprep.subr.bf16.mxu0 0
      %694 = vmatpush2.bf16.msra.mxu0 0
      %695 = vmatprep.mubr.bf16.mxu0 0
      %696 = vmatmul.mubr.bf16.gmra.mxu0 %v661
      %v697 = vpop.f32.mrf.mxu0
      %v698 = vadd.f32 %v657, %v697
      %v699 = vpop.f32.mrf.mxu0
      %v700 = vpop.f32.mrf.mxu0
      %v701 = vadd.f32 %v657, %v700
      %v702 = vpop.f32.mrf.mxu0
      %703 = vdwg.mxu0
      %v704 = vadd.f32 %v570, %v698
      %v705 = vadd.f32 %v571, %v701
      %708 = vrot.lane.b32.xlu0 %v698, 96
      %v709 = vpop.permute.xlu0 %708
      %710 = vrot.lane.b32.xlu0 %v701, 96
      %v711 = vpop.permute.xlu0 %710
      %v714 = vadd.f32 %v570, %v709
      %v715 = vadd.f32 %v571, %v711
      %v716 = vld [vmem:[%s6] sm:$0xff]
      %v717 = vld [vmem:[%s6 + $0x8] sm:$0xff]
      %v718 = vld [vmem:[%s6 + $0x10] sm:$0xff]
      %v719 = vld [vmem:[%s6 + $0x18] sm:$0xff]
      %v720 = vpack.c.bf16 %v705, %v704
      %v721 = vpack.c.bf16 %v717, %v716
      %v722 = vpack.c.bf16 %v719, %v718
      %v723 = vld [vmem:[%s7] sm:$0x1]
      %v725 = vlaneseq
      %v726 = vshrl.u32 %v725, 7
      %v727 = vsub.s32 0, %v726
      %v728 = vrot.slane %v723, %v727
      %vm730 = vcmask 261120
      %v732 = vsel %vm730, %v720, 0
      %734 = vmatprep.subr.bf16.mxu0 0
      %735 = vmatpush1.bf16.msra.mxu0 0
      %736 = vmatprep.subr.bf16.mxu0 0
      %737 = vmatpush1.bf16.msra.mxu0 0
      %738 = vmatprep.subr.bf16.mxu0 0
      %739 = vmatpush1.bf16.msra.mxu0 0
      %740 = vmatprep.subr.bf16.mxu0 0
      %741 = vmatpush1.bf16.msra.mxu0 0
      %742 = vmatprep.subr.bf16.mxu0 0
      %743 = vmatpush1.bf16.msra.mxu0 0
      %744 = vmatprep.subr.bf16.mxu0 0
      %745 = vmatpush1.bf16.msra.mxu0 0
      %746 = vmatprep.subr.bf16.mxu0 0
      %747 = vmatpush1.bf16.msra.mxu0 %v722
      %748 = vmatprep.subr.bf16.mxu0 0
      %749 = vmatpush1.bf16.msra.mxu0 %v721
      %750 = vmatprep.subr.bf16.mxu0 0
      %751 = vmatpush2.bf16.msra.mxu0 0
      %752 = vmatprep.subr.bf16.mxu0 0
      %753 = vmatpush2.bf16.msra.mxu0 0
      %754 = vmatprep.subr.bf16.mxu0 0
      %755 = vmatpush2.bf16.msra.mxu0 0
      %756 = vmatprep.subr.bf16.mxu0 0
      %757 = vmatpush2.bf16.msra.mxu0 0
      %758 = vmatprep.subr.bf16.mxu0 0
      %759 = vmatpush2.bf16.msra.mxu0 0
      %760 = vmatprep.subr.bf16.mxu0 0
      %761 = vmatpush2.bf16.msra.mxu0 0
      %762 = vmatprep.subr.bf16.mxu0 0
      %763 = vmatpush2.bf16.msra.mxu0 0
      %764 = vmatprep.subr.bf16.mxu0 0
      %765 = vmatpush2.bf16.msra.mxu0 0
      %766 = vmatprep.mubr.bf16.mxu0 0
      %767 = vmatmul.mubr.bf16.gmra.mxu0 %v732
      %v768 = vpop.f32.mrf.mxu0
      %v769 = vadd.f32 %v728, %v768
      %v770 = vpop.f32.mrf.mxu0
      %v771 = vpop.f32.mrf.mxu0
      %v772 = vadd.f32 %v728, %v771
      %v773 = vpop.f32.mrf.mxu0
      %774 = vdwg.mxu0
      %v775 = vld [vmem:[%s8] sm:$0xff]
      %v776 = vld [vmem:[%s8 + $0x8] sm:$0xff]
      %v777 = vld [vmem:[%s8 + $0x10] sm:$0xff]
      %v778 = vld [vmem:[%s8 + $0x18] sm:$0xff]
      %v779 = vpack.c.bf16 %v715, %v714
      %v780 = vpack.c.bf16 %v776, %v775
      %v781 = vpack.c.bf16 %v778, %v777
      %v782 = vld [vmem:[%s9] sm:$0x1]
      %v784 = vlaneseq
      %v785 = vshrl.u32 %v784, 7
      %v786 = vsub.s32 0, %v785
      %v787 = vrot.slane %v782, %v786
      %v790 = vsel %vm730, %v779, 0
      %792 = vmatprep.subr.bf16.mxu0 0
      %793 = vmatpush1.bf16.msra.mxu0 0
      %794 = vmatprep.subr.bf16.mxu0 0
      %795 = vmatpush1.bf16.msra.mxu0 0
      %796 = vmatprep.subr.bf16.mxu0 0
      %797 = vmatpush1.bf16.msra.mxu0 0
      %798 = vmatprep.subr.bf16.mxu0 0
      %799 = vmatpush1.bf16.msra.mxu0 0
      %800 = vmatprep.subr.bf16.mxu0 0
      %801 = vmatpush1.bf16.msra.mxu0 0
      %802 = vmatprep.subr.bf16.mxu0 0
      %803 = vmatpush1.bf16.msra.mxu0 0
      %804 = vmatprep.subr.bf16.mxu0 0
      %805 = vmatpush1.bf16.msra.mxu0 %v781
      %806 = vmatprep.subr.bf16.mxu0 0
      %807 = vmatpush1.bf16.msra.mxu0 %v780
      %808 = vmatprep.subr.bf16.mxu0 0
      %809 = vmatpush2.bf16.msra.mxu0 0
      %810 = vmatprep.subr.bf16.mxu0 0
      %811 = vmatpush2.bf16.msra.mxu0 0
      %812 = vmatprep.subr.bf16.mxu0 0
      %813 = vmatpush2.bf16.msra.mxu0 0
      %814 = vmatprep.subr.bf16.mxu0 0
      %815 = vmatpush2.bf16.msra.mxu0 0
      %816 = vmatprep.subr.bf16.mxu0 0
      %817 = vmatpush2.bf16.msra.mxu0 0
      %818 = vmatprep.subr.bf16.mxu0 0
      %819 = vmatpush2.bf16.msra.mxu0 0
      %820 = vmatprep.subr.bf16.mxu0 0
      %821 = vmatpush2.bf16.msra.mxu0 0
      %822 = vmatprep.subr.bf16.mxu0 0
      %823 = vmatpush2.bf16.msra.mxu0 0
      %824 = vmatprep.mubr.bf16.mxu0 0
      %825 = vmatmul.mubr.bf16.gmra.mxu0 %v790
      %v826 = vpop.f32.mrf.mxu0
      %v827 = vadd.f32 %v787, %v826
      %v828 = vpop.f32.mrf.mxu0
      %v829 = vpop.f32.mrf.mxu0
      %v830 = vadd.f32 %v787, %v829
      %v831 = vpop.f32.mrf.mxu0
      %832 = vdwg.mxu0
      %v833 = vld [vmem:[%s10] sm:$0xff]
      %v834 = vld [vmem:[%s10 + $0x8] sm:$0xff]
      %v835 = vld [vmem:[%s10 + $0x10] sm:$0xff]
      %v836 = vld [vmem:[%s10 + $0x18] sm:$0xff]
      %v837 = vpack.c.bf16 %v772, %v769
      %v838 = vpack.c.bf16 %v830, %v827
      %vm839 = vcmask 64512
      %v841 = vsel %vm839, %v837, 0
      %v844 = vsel %vm839, %v838, 0
      %846 = vmatprep.subr.bf16.mxu0 0
      %847 = vmatpush1.bf16.xpose.msra.mxu0 0
      %848 = vmatprep.subr.bf16.mxu0 0
      %849 = vmatpush1.bf16.xpose.msra.mxu0 0
      %850 = vmatprep.subr.bf16.mxu0 0
      %851 = vmatpush1.bf16.xpose.msra.mxu0 0
      %852 = vmatprep.subr.bf16.mxu0 0
      %853 = vmatpush1.bf16.xpose.msra.mxu0 0
      %854 = vmatprep.subr.bf16.mxu0 0
      %855 = vmatpush1.bf16.xpose.msra.mxu0 0
      %856 = vmatprep.subr.bf16.mxu0 0
      %857 = vmatpush1.bf16.xpose.msra.mxu0 0
      %858 = vmatprep.subr.bf16.mxu0 0
      %859 = vmatpush1.bf16.xpose.msra.mxu0 0
      %860 = vmatprep.subr.bf16.mxu0 0
      %861 = vmatpush1.bf16.xpose.msra.mxu0 %v844
      %862 = vmatprep.subr.bf16.mxu0 0
      %863 = vmatpush2.bf16.xpose.msra.mxu0 0
      %864 = vmatprep.subr.bf16.mxu0 0
      %865 = vmatpush2.bf16.xpose.msra.mxu0 0
      %866 = vmatprep.subr.bf16.mxu0 0
      %867 = vmatpush2.bf16.xpose.msra.mxu0 0
      %868 = vmatprep.subr.bf16.mxu0 0
      %869 = vmatpush2.bf16.xpose.msra.mxu0 0
      %870 = vmatprep.subr.bf16.mxu0 0
      %871 = vmatpush2.bf16.xpose.msra.mxu0 0
      %872 = vmatprep.subr.bf16.mxu0 0
      %873 = vmatpush2.bf16.xpose.msra.mxu0 0
      %874 = vmatprep.subr.bf16.mxu0 0
      %875 = vmatpush2.bf16.xpose.msra.mxu0 0
      %876 = vmatprep.subr.bf16.mxu0 0
      %877 = vmatpush2.bf16.xpose.msra.mxu0 0
      %878 = vmatprep.mubr.bf16.mxu0 0
      %879 = vmatmul.mubr.bf16.gmra.mxu0 %v841
      %v880 = vpop.f32.mrf.mxu0
      %v881 = vadd.f32 0.0, %v880
      %v882 = vpop.f32.mrf.mxu0
      %v883 = vpop.f32.mrf.mxu0
      %v884 = vadd.f32 0.0, %v883
      %v885 = vpop.f32.mrf.mxu0
      %886 = vdwg.mxu0
      %v887 = vmul.f32 %v881, 0.35355338
      %v888 = vmul.f32 %v884, 0.35355338
      %vm889 = vcmask 130048
      %v890 = vsel %vm889, %v887, -inf
      %891 = vmax.xlane.f32.xlu0 %v890
      %v892 = vpop.xlane.xlu0 %891
      %v893 = vsel %vm889, %v888, -inf
      %894 = vmax.xlane.f32.xlu0 %v893
      %v895 = vpop.xlane.xlu0 %894
      %v896 = vsub.f32 %v887, %v892
      %v897 = vsub.f32 %v888, %v895
      %v898 = vmul.f32 %v896, 1.442695
      %v899 = vpow.pop %v898
      %v900 = vmul.f32 %v897, 1.442695
      %v901 = vpow.pop %v900
      %v902 = vsel %vm889, %v899, 0.0
      %903 = vadd.xlane.f32.xlu0 %v902
      %v904 = vpop.xlane.xlu0 %903
      %v905 = vsel %vm889, %v901, 0.0
      %906 = vadd.xlane.f32.xlu0 %v905
      %v907 = vpop.xlane.xlu0 %906
      %v908 = vrcp.pop %v904
      %v909 = vrcp.pop %v907
      %v910 = vmul.f32 %v899, %v908
      %v911 = vmul.f32 %v901, %v909
      %v912 = vpack.c.bf16 %v911, %v910
      %914 = vrot.lane.b32.xlu0 %v838, 96
      %v915 = vpop.permute.xlu0 %914
      %v918 = vsel %vm889, %v912, 0
      %920 = vmatprep.subr.bf16.mxu0 0
      %921 = vmatpush1.bf16.msra.mxu0 0
      %922 = vmatprep.subr.bf16.mxu0 0
      %923 = vmatpush1.bf16.msra.mxu0 0
      %924 = vmatprep.subr.bf16.mxu0 0
      %925 = vmatpush1.bf16.msra.mxu0 0
      %926 = vmatprep.subr.bf16.mxu0 0
      %927 = vmatpush1.bf16.msra.mxu0 0
      %928 = vmatprep.subr.bf16.mxu0 0
      %929 = vmatpush1.bf16.msra.mxu0 0
      %930 = vmatprep.subr.bf16.mxu0 0
      %931 = vmatpush1.bf16.msra.mxu0 0
      %932 = vmatprep.subr.bf16.mxu0 0
      %933 = vmatpush1.bf16.msra.mxu0 0
      %934 = vmatprep.subr.bf16.mxu0 0
      %935 = vmatpush1.bf16.msra.mxu0 %v915
      %936 = vmatprep.subr.bf16.mxu0 0
      %937 = vmatpush2.bf16.msra.mxu0 0
      %938 = vmatprep.subr.bf16.mxu0 0
      %939 = vmatpush2.bf16.msra.mxu0 0
      %940 = vmatprep.subr.bf16.mxu0 0
      %941 = vmatpush2.bf16.msra.mxu0 0
      %942 = vmatprep.subr.bf16.mxu0 0
      %943 = vmatpush2.bf16.msra.mxu0 0
      %944 = vmatprep.subr.bf16.mxu0 0
      %945 = vmatpush2.bf16.msra.mxu0 0
      %946 = vmatprep.subr.bf16.mxu0 0
      %947 = vmatpush2.bf16.msra.mxu0 0
      %948 = vmatprep.subr.bf16.mxu0 0
      %949 = vmatpush2.bf16.msra.mxu0 0
      %950 = vmatprep.subr.bf16.mxu0 0
      %951 = vmatpush2.bf16.msra.mxu0 0
      %952 = vmatprep.mubr.bf16.mxu0 0
      %953 = vmatmul.mubr.bf16.gmra.mxu0 %v918
      %v954 = vpop.f32.mrf.mxu0
      %v955 = vadd.f32 0.0, %v954
      %v956 = vpop.f32.mrf.mxu0
      %v957 = vpop.f32.mrf.mxu0
      %v958 = vadd.f32 0.0, %v957
      %v959 = vpop.f32.mrf.mxu0
      %960 = vdwg.mxu0
      %v961 = vpack.c.bf16 %v958, %v955
      %v962 = vpack.c.bf16 %v833, %v833
      %964 = vrot.lane.b32.xlu0 %v837, 120
      %v965 = vpop.permute.xlu0 %964
      %966 = vrot.lane.b32.xlu0 %v838, 120
      %v967 = vpop.permute.xlu0 %966
      %v969 = vsel %vm839, %v965, 0
      %v972 = vsel %vm839, %v967, 0
      %974 = vmatprep.subr.bf16.mxu0 0
      %975 = vmatpush1.bf16.xpose.msra.mxu0 0
      %976 = vmatprep.subr.bf16.mxu0 0
      %977 = vmatpush1.bf16.xpose.msra.mxu0 0
      %978 = vmatprep.subr.bf16.mxu0 0
      %979 = vmatpush1.bf16.xpose.msra.mxu0 0
      %980 = vmatprep.subr.bf16.mxu0 0
      %981 = vmatpush1.bf16.xpose.msra.mxu0 0
      %982 = vmatprep.subr.bf16.mxu0 0
      %983 = vmatpush1.bf16.xpose.msra.mxu0 0
      %984 = vmatprep.subr.bf16.mxu0 0
      %985 = vmatpush1.bf16.xpose.msra.mxu0 0
      %986 = vmatprep.subr.bf16.mxu0 0
      %987 = vmatpush1.bf16.xpose.msra.mxu0 0
      %988 = vmatprep.subr.bf16.mxu0 0
      %989 = vmatpush1.bf16.xpose.msra.mxu0 %v972
      %990 = vmatprep.subr.bf16.mxu0 0
      %991 = vmatpush2.bf16.xpose.msra.mxu0 0
      %992 = vmatprep.subr.bf16.mxu0 0
      %993 = vmatpush2.bf16.xpose.msra.mxu0 0
      %994 = vmatprep.subr.bf16.mxu0 0
      %995 = vmatpush2.bf16.xpose.msra.mxu0 0
      %996 = vmatprep.subr.bf16.mxu0 0
      %997 = vmatpush2.bf16.xpose.msra.mxu0 0
      %998 = vmatprep.subr.bf16.mxu0 0
      %999 = vmatpush2.bf16.xpose.msra.mxu0 0
      %1000 = vmatprep.subr.bf16.mxu0 0
      %1001 = vmatpush2.bf16.xpose.msra.mxu0 0
      %1002 = vmatprep.subr.bf16.mxu0 0
      %1003 = vmatpush2.bf16.xpose.msra.mxu0 0
      %1004 = vmatprep.subr.bf16.mxu0 0
      %1005 = vmatpush2.bf16.xpose.msra.mxu0 0
      %1006 = vmatprep.mubr.bf16.mxu0 0
      %1007 = vmatmul.mubr.bf16.gmra.mxu0 %v969
      %v1008 = vpop.f32.mrf.mxu0
      %v1009 = vadd.f32 0.0, %v1008
      %v1010 = vpop.f32.mrf.mxu0
      %v1011 = vpop.f32.mrf.mxu0
      %v1012 = vadd.f32 0.0, %v1011
      %v1013 = vpop.f32.mrf.mxu0
      %1014 = vdwg.mxu0
      %v1015 = vmul.f32 %v1009, 0.35355338
      %v1016 = vmul.f32 %v1012, 0.35355338
      %v1017 = vsel %vm889, %v1015, -inf
      %1018 = vmax.xlane.f32.xlu0 %v1017
      %v1019 = vpop.xlane.xlu0 %1018
      %v1020 = vsel %vm889, %v1016, -inf
      %1021 = vmax.xlane.f32.xlu0 %v1020
      %v1022 = vpop.xlane.xlu0 %1021
      %v1023 = vsub.f32 %v1015, %v1019
      %v1024 = vsub.f32 %v1016, %v1022
      %v1025 = vmul.f32 %v1023, 1.442695
      %v1026 = vpow.pop %v1025
      %v1027 = vmul.f32 %v1024, 1.442695
      %v1028 = vpow.pop %v1027
      %v1029 = vsel %vm889, %v1026, 0.0
      %1030 = vadd.xlane.f32.xlu0 %v1029
      %v1031 = vpop.xlane.xlu0 %1030
      %v1032 = vsel %vm889, %v1028, 0.0
      %1033 = vadd.xlane.f32.xlu0 %v1032
      %v1034 = vpop.xlane.xlu0 %1033
      %v1035 = vrcp.pop %v1031
      %v1036 = vrcp.pop %v1034
      %v1037 = vmul.f32 %v1026, %v1035
      %v1038 = vmul.f32 %v1028, %v1036
      %v1039 = vpack.c.bf16 %v1038, %v1037
      %1040 = vrot.lane.b32.xlu0 %v838, 88
      %v1041 = vpop.permute.xlu0 %1040
      %v1044 = vsel %vm889, %v1039, 0
      %1046 = vmatprep.subr.bf16.mxu0 0
      %1047 = vmatpush1.bf16.msra.mxu0 0
      %1048 = vmatprep.subr.bf16.mxu0 0
      %1049 = vmatpush1.bf16.msra.mxu0 0
      %1050 = vmatprep.subr.bf16.mxu0 0
      %1051 = vmatpush1.bf16.msra.mxu0 0
      %1052 = vmatprep.subr.bf16.mxu0 0
      %1053 = vmatpush1.bf16.msra.mxu0 0
      %1054 = vmatprep.subr.bf16.mxu0 0
      %1055 = vmatpush1.bf16.msra.mxu0 0
      %1056 = vmatprep.subr.bf16.mxu0 0
      %1057 = vmatpush1.bf16.msra.mxu0 0
      %1058 = vmatprep.subr.bf16.mxu0 0
      %1059 = vmatpush1.bf16.msra.mxu0 0
      %1060 = vmatprep.subr.bf16.mxu0 0
      %1061 = vmatpush1.bf16.msra.mxu0 %v1041
      %1062 = vmatprep.subr.bf16.mxu0 0
      %1063 = vmatpush2.bf16.msra.mxu0 0
      %1064 = vmatprep.subr.bf16.mxu0 0
      %1065 = vmatpush2.bf16.msra.mxu0 0
      %1066 = vmatprep.subr.bf16.mxu0 0
      %1067 = vmatpush2.bf16.msra.mxu0 0
      %1068 = vmatprep.subr.bf16.mxu0 0
      %1069 = vmatpush2.bf16.msra.mxu0 0
      %1070 = vmatprep.subr.bf16.mxu0 0
      %1071 = vmatpush2.bf16.msra.mxu0 0
      %1072 = vmatprep.subr.bf16.mxu0 0
      %1073 = vmatpush2.bf16.msra.mxu0 0
      %1074 = vmatprep.subr.bf16.mxu0 0
      %1075 = vmatpush2.bf16.msra.mxu0 0
      %1076 = vmatprep.subr.bf16.mxu0 0
      %1077 = vmatpush2.bf16.msra.mxu0 0
      %1078 = vmatprep.mubr.bf16.mxu0 0
      %1079 = vmatmul.mubr.bf16.gmra.mxu0 %v1044
      %v1080 = vpop.f32.mrf.mxu0
      %v1081 = vadd.f32 0.0, %v1080
      %v1082 = vpop.f32.mrf.mxu0
      %v1083 = vpop.f32.mrf.mxu0
      %v1084 = vadd.f32 0.0, %v1083
      %v1085 = vpop.f32.mrf.mxu0
      %1086 = vdwg.mxu0
      %v1087 = vpack.c.bf16 %v1084, %v1081
      %v1088 = vpack.c.bf16 %v834, %v834
      %v1090 = vsel %vm839, %v1087, 0
      %v1093 = vsel %vm589, %v1088, 0
      %1095 = vmatprep.subr.bf16.mxu0 0
      %1096 = vmatpush1.bf16.msra.mxu0 0
      %1097 = vmatprep.subr.bf16.mxu0 0
      %1098 = vmatpush1.bf16.msra.mxu0 0
      %1099 = vmatprep.subr.bf16.mxu0 0
      %1100 = vmatpush1.bf16.msra.mxu0 0
      %1101 = vmatprep.subr.bf16.mxu0 0
      %1102 = vmatpush1.bf16.msra.mxu0 0
      %1103 = vmatprep.subr.bf16.mxu0 0
      %1104 = vmatpush1.bf16.msra.mxu0 0
      %1105 = vmatprep.subr.bf16.mxu0 0
      %1106 = vmatpush1.bf16.msra.mxu0 0
      %1107 = vmatprep.subr.bf16.mxu0 0
      %1108 = vmatpush1.bf16.msra.mxu0 0
      %1109 = vmatprep.subr.bf16.mxu0 0
      %1110 = vmatpush1.bf16.msra.mxu0 %v1093
      %1111 = vmatprep.subr.bf16.mxu0 0
      %1112 = vmatpush2.bf16.msra.mxu0 0
      %1113 = vmatprep.subr.bf16.mxu0 0
      %1114 = vmatpush2.bf16.msra.mxu0 0
      %1115 = vmatprep.subr.bf16.mxu0 0
      %1116 = vmatpush2.bf16.msra.mxu0 0
      %1117 = vmatprep.subr.bf16.mxu0 0
      %1118 = vmatpush2.bf16.msra.mxu0 0
      %1119 = vmatprep.subr.bf16.mxu0 0
      %1120 = vmatpush2.bf16.msra.mxu0 0
      %1121 = vmatprep.subr.bf16.mxu0 0
      %1122 = vmatpush2.bf16.msra.mxu0 0
      %1123 = vmatprep.subr.bf16.mxu0 0
      %1124 = vmatpush2.bf16.msra.mxu0 0
      %1125 = vmatprep.subr.bf16.mxu0 0
      %1126 = vmatpush2.bf16.msra.mxu0 0
      %1127 = vmatprep.mubr.bf16.mxu0 0
      %1128 = vmatmul.mubr.bf16.gmra.mxu0 %v1090
      %v1129 = vpop.f32.mrf.mxu0
      %v1130 = vadd.f32 0.0, %v1129
      %v1131 = vpop.f32.mrf.mxu0
      %v1132 = vpop.f32.mrf.mxu0
      %v1133 = vadd.f32 0.0, %v1132
      %v1134 = vpop.f32.mrf.mxu0
      %1135 = vdwg.mxu0
      %v1137 = vsel %vm839, %v961, 0
      %v1140 = vsel %vm589, %v962, 0
      %1142 = vmatprep.subr.bf16.mxu0 0
      %1143 = vmatpush1.bf16.msra.mxu0 0
      %1144 = vmatprep.subr.bf16.mxu0 0
      %1145 = vmatpush1.bf16.msra.mxu0 0
      %1146 = vmatprep.subr.bf16.mxu0 0
      %1147 = vmatpush1.bf16.msra.mxu0 0
      %1148 = vmatprep.subr.bf16.mxu0 0
      %1149 = vmatpush1.bf16.msra.mxu0 0
      %1150 = vmatprep.subr.bf16.mxu0 0
      %1151 = vmatpush1.bf16.msra.mxu0 0
      %1152 = vmatprep.subr.bf16.mxu0 0
      %1153 = vmatpush1.bf16.msra.mxu0 0
      %1154 = vmatprep.subr.bf16.mxu0 0
      %1155 = vmatpush1.bf16.msra.mxu0 0
      %1156 = vmatprep.subr.bf16.mxu0 0
      %1157 = vmatpush1.bf16.msra.mxu0 %v1140
      %1158 = vmatprep.subr.bf16.mxu0 0
      %1159 = vmatpush2.bf16.msra.mxu0 0
      %1160 = vmatprep.subr.bf16.mxu0 0
      %1161 = vmatpush2.bf16.msra.mxu0 0
      %1162 = vmatprep.subr.bf16.mxu0 0
      %1163 = vmatpush2.bf16.msra.mxu0 0
      %1164 = vmatprep.subr.bf16.mxu0 0
      %1165 = vmatpush2.bf16.msra.mxu0 0
      %1166 = vmatprep.subr.bf16.mxu0 0
      %1167 = vmatpush2.bf16.msra.mxu0 0
      %1168 = vmatprep.subr.bf16.mxu0 0
      %1169 = vmatpush2.bf16.msra.mxu0 0
      %1170 = vmatprep.subr.bf16.mxu0 0
      %1171 = vmatpush2.bf16.msra.mxu0 0
      %1172 = vmatprep.subr.bf16.mxu0 0
      %1173 = vmatpush2.bf16.msra.mxu0 0
      %1174 = vmatprep.mubr.bf16.mxu0 0
      %1175 = vmatmul.mubr.bf16.gmra.mxu0 %v1137
      %v1176 = vpop.f32.mrf.mxu0
      %v1177 = vadd.f32 %v1130, %v1176
      %v1178 = vpop.f32.mrf.mxu0
      %v1179 = vpop.f32.mrf.mxu0
      %v1180 = vadd.f32 %v1133, %v1179
      %v1181 = vpop.f32.mrf.mxu0
      %1182 = vdwg.mxu0
      %1183 = vrot.lane.b32.xlu0 %v837, 112
      %v1184 = vpop.permute.xlu0 %1183
      %1185 = vrot.lane.b32.xlu0 %v838, 112
      %v1186 = vpop.permute.xlu0 %1185
      %v1188 = vsel %vm839, %v1184, 0
      %v1191 = vsel %vm839, %v1186, 0
      %1193 = vmatprep.subr.bf16.mxu0 0
      %1194 = vmatpush1.bf16.xpose.msra.mxu0 0
      %1195 = vmatprep.subr.bf16.mxu0 0
      %1196 = vmatpush1.bf16.xpose.msra.mxu0 0
      %1197 = vmatprep.subr.bf16.mxu0 0
      %1198 = vmatpush1.bf16.xpose.msra.mxu0 0
      %1199 = vmatprep.subr.bf16.mxu0 0
      %1200 = vmatpush1.bf16.xpose.msra.mxu0 0
      %1201 = vmatprep.subr.bf16.mxu0 0
      %1202 = vmatpush1.bf16.xpose.msra.mxu0 0
      %1203 = vmatprep.subr.bf16.mxu0 0
      %1204 = vmatpush1.bf16.xpose.msra.mxu0 0
      %1205 = vmatprep.subr.bf16.mxu0 0
      %1206 = vmatpush1.bf16.xpose.msra.mxu0 0
      %1207 = vmatprep.subr.bf16.mxu0 0
      %1208 = vmatpush1.bf16.xpose.msra.mxu0 %v1191
      %1209 = vmatprep.subr.bf16.mxu0 0
      %1210 = vmatpush2.bf16.xpose.msra.mxu0 0
      %1211 = vmatprep.subr.bf16.mxu0 0
      %1212 = vmatpush2.bf16.xpose.msra.mxu0 0
      %1213 = vmatprep.subr.bf16.mxu0 0
      %1214 = vmatpush2.bf16.xpose.msra.mxu0 0
      %1215 = vmatprep.subr.bf16.mxu0 0
      %1216 = vmatpush2.bf16.xpose.msra.mxu0 0
      %1217 = vmatprep.subr.bf16.mxu0 0
      %1218 = vmatpush2.bf16.xpose.msra.mxu0 0
      %1219 = vmatprep.subr.bf16.mxu0 0
      %1220 = vmatpush2.bf16.xpose.msra.mxu0 0
      %1221 = vmatprep.subr.bf16.mxu0 0
      %1222 = vmatpush2.bf16.xpose.msra.mxu0 0
      %1223 = vmatprep.subr.bf16.mxu0 0
      %1224 = vmatpush2.bf16.xpose.msra.mxu0 0
      %1225 = vmatprep.mubr.bf16.mxu0 0
      %1226 = vmatmul.mubr.bf16.gmra.mxu0 %v1188
      %v1227 = vpop.f32.mrf.mxu0
      %v1228 = vadd.f32 0.0, %v1227
      %v1229 = vpop.f32.mrf.mxu0
      %v1230 = vpop.f32.mrf.mxu0
      %v1231 = vadd.f32 0.0, %v1230
      %v1232 = vpop.f32.mrf.mxu0
      %1233 = vdwg.mxu0
      %v1234 = vmul.f32 %v1228, 0.35355338
      %v1235 = vmul.f32 %v1231, 0.35355338
      %v1236 = vsel %vm889, %v1234, -inf
      %1237 = vmax.xlane.f32.xlu0 %v1236
      %v1238 = vpop.xlane.xlu0 %1237
      %v1239 = vsel %vm889, %v1235, -inf
      %1240 = vmax.xlane.f32.xlu0 %v1239
      %v1241 = vpop.xlane.xlu0 %1240
      %v1242 = vsub.f32 %v1234, %v1238
      %v1243 = vsub.f32 %v1235, %v1241
      %v1244 = vmul.f32 %v1242, 1.442695
      %v1245 = vpow.pop %v1244
      %v1246 = vmul.f32 %v1243, 1.442695
      %v1247 = vpow.pop %v1246
      %v1248 = vsel %vm889, %v1245, 0.0
      %1249 = vadd.xlane.f32.xlu0 %v1248
      %v1250 = vpop.xlane.xlu0 %1249
      %v1251 = vsel %vm889, %v1247, 0.0
      %1252 = vadd.xlane.f32.xlu0 %v1251
      %v1253 = vpop.xlane.xlu0 %1252
      %v1254 = vrcp.pop %v1250
      %v1255 = vrcp.pop %v1253
      %v1256 = vmul.f32 %v1245, %v1254
      %v1257 = vmul.f32 %v1247, %v1255
      %v1258 = vpack.c.bf16 %v1257, %v1256
      %1259 = vrot.lane.b32.xlu0 %v838, 80
      %v1260 = vpop.permute.xlu0 %1259
      %v1263 = vsel %vm889, %v1258, 0
      %1265 = vmatprep.subr.bf16.mxu0 0
      %1266 = vmatpush1.bf16.msra.mxu0 0
      %1267 = vmatprep.subr.bf16.mxu0 0
      %1268 = vmatpush1.bf16.msra.mxu0 0
      %1269 = vmatprep.subr.bf16.mxu0 0
      %1270 = vmatpush1.bf16.msra.mxu0 0
      %1271 = vmatprep.subr.bf16.mxu0 0
      %1272 = vmatpush1.bf16.msra.mxu0 0
      %1273 = vmatprep.subr.bf16.mxu0 0
      %1274 = vmatpush1.bf16.msra.mxu0 0
      %1275 = vmatprep.subr.bf16.mxu0 0
      %1276 = vmatpush1.bf16.msra.mxu0 0
      %1277 = vmatprep.subr.bf16.mxu0 0
      %1278 = vmatpush1.bf16.msra.mxu0 0
      %1279 = vmatprep.subr.bf16.mxu0 0
      %1280 = vmatpush1.bf16.msra.mxu0 %v1260
      %1281 = vmatprep.subr.bf16.mxu0 0
      %1282 = vmatpush2.bf16.msra.mxu0 0
      %1283 = vmatprep.subr.bf16.mxu0 0
      %1284 = vmatpush2.bf16.msra.mxu0 0
      %1285 = vmatprep.subr.bf16.mxu0 0
      %1286 = vmatpush2.bf16.msra.mxu0 0
      %1287 = vmatprep.subr.bf16.mxu0 0
      %1288 = vmatpush2.bf16.msra.mxu0 0
      %1289 = vmatprep.subr.bf16.mxu0 0
      %1290 = vmatpush2.bf16.msra.mxu0 0
      %1291 = vmatprep.subr.bf16.mxu0 0
      %1292 = vmatpush2.bf16.msra.mxu0 0
      %1293 = vmatprep.subr.bf16.mxu0 0
      %1294 = vmatpush2.bf16.msra.mxu0 0
      %1295 = vmatprep.subr.bf16.mxu0 0
      %1296 = vmatpush2.bf16.msra.mxu0 0
      %1297 = vmatprep.mubr.bf16.mxu0 0
      %1298 = vmatmul.mubr.bf16.gmra.mxu0 %v1263
      %v1299 = vpop.f32.mrf.mxu0
      %v1300 = vadd.f32 0.0, %v1299
      %v1301 = vpop.f32.mrf.mxu0
      %v1302 = vpop.f32.mrf.mxu0
      %v1303 = vadd.f32 0.0, %v1302
      %v1304 = vpop.f32.mrf.mxu0
      %1305 = vdwg.mxu0
      %v1306 = vpack.c.bf16 %v1303, %v1300
      %v1307 = vpack.c.bf16 %v835, %v835
      %v1309 = vsel %vm839, %v1306, 0
      %v1312 = vsel %vm589, %v1307, 0
      %1314 = vmatprep.subr.bf16.mxu0 0
      %1315 = vmatpush1.bf16.msra.mxu0 0
      %1316 = vmatprep.subr.bf16.mxu0 0
      %1317 = vmatpush1.bf16.msra.mxu0 0
      %1318 = vmatprep.subr.bf16.mxu0 0
      %1319 = vmatpush1.bf16.msra.mxu0 0
      %1320 = vmatprep.subr.bf16.mxu0 0
      %1321 = vmatpush1.bf16.msra.mxu0 0
      %1322 = vmatprep.subr.bf16.mxu0 0
      %1323 = vmatpush1.bf16.msra.mxu0 0
      %1324 = vmatprep.subr.bf16.mxu0 0
      %1325 = vmatpush1.bf16.msra.mxu0 0
      %1326 = vmatprep.subr.bf16.mxu0 0
      %1327 = vmatpush1.bf16.msra.mxu0 0
      %1328 = vmatprep.subr.bf16.mxu0 0
      %1329 = vmatpush1.bf16.msra.mxu0 %v1312
      %1330 = vmatprep.subr.bf16.mxu0 0
      %1331 = vmatpush2.bf16.msra.mxu0 0
      %1332 = vmatprep.subr.bf16.mxu0 0
      %1333 = vmatpush2.bf16.msra.mxu0 0
      %1334 = vmatprep.subr.bf16.mxu0 0
      %1335 = vmatpush2.bf16.msra.mxu0 0
      %1336 = vmatprep.subr.bf16.mxu0 0
      %1337 = vmatpush2.bf16.msra.mxu0 0
      %1338 = vmatprep.subr.bf16.mxu0 0
      %1339 = vmatpush2.bf16.msra.mxu0 0
      %1340 = vmatprep.subr.bf16.mxu0 0
      %1341 = vmatpush2.bf16.msra.mxu0 0
      %1342 = vmatprep.subr.bf16.mxu0 0
      %1343 = vmatpush2.bf16.msra.mxu0 0
      %1344 = vmatprep.subr.bf16.mxu0 0
      %1345 = vmatpush2.bf16.msra.mxu0 0
      %1346 = vmatprep.mubr.bf16.mxu0 0
      %1347 = vmatmul.mubr.bf16.gmra.mxu0 %v1309
      %v1348 = vpop.f32.mrf.mxu0
      %v1349 = vadd.f32 0.0, %v1348
      %v1350 = vpop.f32.mrf.mxu0
      %v1351 = vpop.f32.mrf.mxu0
      %v1352 = vadd.f32 0.0, %v1351
      %v1353 = vpop.f32.mrf.mxu0
      %1354 = vdwg.mxu0
      %v1355 = vadd.f32 %v1177, %v1349
      %v1356 = vadd.f32 %v1180, %v1352
      %1357 = vrot.lane.b32.xlu0 %v837, 104
      %v1358 = vpop.permute.xlu0 %1357
      %1359 = vrot.lane.b32.xlu0 %v838, 104
      %v1360 = vpop.permute.xlu0 %1359
      %v1362 = vsel %vm839, %v1358, 0
      %v1365 = vsel %vm839, %v1360, 0
      %1367 = vmatprep.subr.bf16.mxu0 0
      %1368 = vmatpush1.bf16.xpose.msra.mxu0 0
      %1369 = vmatprep.subr.bf16.mxu0 0
      %1370 = vmatpush1.bf16.xpose.msra.mxu0 0
      %1371 = vmatprep.subr.bf16.mxu0 0
      %1372 = vmatpush1.bf16.xpose.msra.mxu0 0
      %1373 = vmatprep.subr.bf16.mxu0 0
      %1374 = vmatpush1.bf16.xpose.msra.mxu0 0
      %1375 = vmatprep.subr.bf16.mxu0 0
      %1376 = vmatpush1.bf16.xpose.msra.mxu0 0
      %1377 = vmatprep.subr.bf16.mxu0 0
      %1378 = vmatpush1.bf16.xpose.msra.mxu0 0
      %1379 = vmatprep.subr.bf16.mxu0 0
      %1380 = vmatpush1.bf16.xpose.msra.mxu0 0
      %1381 = vmatprep.subr.bf16.mxu0 0
      %1382 = vmatpush1.bf16.xpose.msra.mxu0 %v1365
      %1383 = vmatprep.subr.bf16.mxu0 0
      %1384 = vmatpush2.bf16.xpose.msra.mxu0 0
      %1385 = vmatprep.subr.bf16.mxu0 0
      %1386 = vmatpush2.bf16.xpose.msra.mxu0 0
      %1387 = vmatprep.subr.bf16.mxu0 0
      %1388 = vmatpush2.bf16.xpose.msra.mxu0 0
      %1389 = vmatprep.subr.bf16.mxu0 0
      %1390 = vmatpush2.bf16.xpose.msra.mxu0 0
      %1391 = vmatprep.subr.bf16.mxu0 0
      %1392 = vmatpush2.bf16.xpose.msra.mxu0 0
      %1393 = vmatprep.subr.bf16.mxu0 0
      %1394 = vmatpush2.bf16.xpose.msra.mxu0 0
      %1395 = vmatprep.subr.bf16.mxu0 0
      %1396 = vmatpush2.bf16.xpose.msra.mxu0 0
      %1397 = vmatprep.subr.bf16.mxu0 0
      %1398 = vmatpush2.bf16.xpose.msra.mxu0 0
      %1399 = vmatprep.mubr.bf16.mxu0 0
      %1400 = vmatmul.mubr.bf16.gmra.mxu0 %v1362
      %v1401 = vpop.f32.mrf.mxu0
      %v1402 = vadd.f32 0.0, %v1401
      %v1403 = vpop.f32.mrf.mxu0
      %v1404 = vpop.f32.mrf.mxu0
      %v1405 = vadd.f32 0.0, %v1404
      %v1406 = vpop.f32.mrf.mxu0
      %1407 = vdwg.mxu0
      %v1408 = vmul.f32 %v1402, 0.35355338
      %v1409 = vmul.f32 %v1405, 0.35355338
      %v1410 = vsel %vm889, %v1408, -inf
      %1411 = vmax.xlane.f32.xlu0 %v1410
      %v1412 = vpop.xlane.xlu0 %1411
      %v1413 = vsel %vm889, %v1409, -inf
      %1414 = vmax.xlane.f32.xlu0 %v1413
      %v1415 = vpop.xlane.xlu0 %1414
      %v1416 = vsub.f32 %v1408, %v1412
      %v1417 = vsub.f32 %v1409, %v1415
      %v1418 = vmul.f32 %v1416, 1.442695
      %v1419 = vpow.pop %v1418
      %v1420 = vmul.f32 %v1417, 1.442695
      %v1421 = vpow.pop %v1420
      %v1422 = vsel %vm889, %v1419, 0.0
      %1423 = vadd.xlane.f32.xlu0 %v1422
      %v1424 = vpop.xlane.xlu0 %1423
      %v1425 = vsel %vm889, %v1421, 0.0
      %1426 = vadd.xlane.f32.xlu0 %v1425
      %v1427 = vpop.xlane.xlu0 %1426
      %v1428 = vrcp.pop %v1424
      %v1429 = vrcp.pop %v1427
      %v1430 = vmul.f32 %v1419, %v1428
      %v1431 = vmul.f32 %v1421, %v1429
      %v1432 = vpack.c.bf16 %v1431, %v1430
      %1433 = vrot.lane.b32.xlu0 %v838, 72
      %v1434 = vpop.permute.xlu0 %1433
      %v1437 = vsel %vm889, %v1432, 0
      %1439 = vmatprep.subr.bf16.mxu0 0
      %1440 = vmatpush1.bf16.msra.mxu0 0
      %1441 = vmatprep.subr.bf16.mxu0 0
      %1442 = vmatpush1.bf16.msra.mxu0 0
      %1443 = vmatprep.subr.bf16.mxu0 0
      %1444 = vmatpush1.bf16.msra.mxu0 0
      %1445 = vmatprep.subr.bf16.mxu0 0
      %1446 = vmatpush1.bf16.msra.mxu0 0
      %1447 = vmatprep.subr.bf16.mxu0 0
      %1448 = vmatpush1.bf16.msra.mxu0 0
      %1449 = vmatprep.subr.bf16.mxu0 0
      %1450 = vmatpush1.bf16.msra.mxu0 0
      %1451 = vmatprep.subr.bf16.mxu0 0
      %1452 = vmatpush1.bf16.msra.mxu0 0
      %1453 = vmatprep.subr.bf16.mxu0 0
      %1454 = vmatpush1.bf16.msra.mxu0 %v1434
      %1455 = vmatprep.subr.bf16.mxu0 0
      %1456 = vmatpush2.bf16.msra.mxu0 0
      %1457 = vmatprep.subr.bf16.mxu0 0
      %1458 = vmatpush2.bf16.msra.mxu0 0
      %1459 = vmatprep.subr.bf16.mxu0 0
      %1460 = vmatpush2.bf16.msra.mxu0 0
      %1461 = vmatprep.subr.bf16.mxu0 0
      %1462 = vmatpush2.bf16.msra.mxu0 0
      %1463 = vmatprep.subr.bf16.mxu0 0
      %1464 = vmatpush2.bf16.msra.mxu0 0
      %1465 = vmatprep.subr.bf16.mxu0 0
      %1466 = vmatpush2.bf16.msra.mxu0 0
      %1467 = vmatprep.subr.bf16.mxu0 0
      %1468 = vmatpush2.bf16.msra.mxu0 0
      %1469 = vmatprep.subr.bf16.mxu0 0
      %1470 = vmatpush2.bf16.msra.mxu0 0
      %1471 = vmatprep.mubr.bf16.mxu0 0
      %1472 = vmatmul.mubr.bf16.gmra.mxu0 %v1437
      %v1473 = vpop.f32.mrf.mxu0
      %v1474 = vadd.f32 0.0, %v1473
      %v1475 = vpop.f32.mrf.mxu0
      %v1476 = vpop.f32.mrf.mxu0
      %v1477 = vadd.f32 0.0, %v1476
      %v1478 = vpop.f32.mrf.mxu0
      %1479 = vdwg.mxu0
      %v1480 = vpack.c.bf16 %v1477, %v1474
      %v1481 = vpack.c.bf16 %v836, %v836
      %v1483 = vsel %vm839, %v1480, 0
      %v1486 = vsel %vm589, %v1481, 0
      %1488 = vmatprep.subr.bf16.mxu0 0
      %1489 = vmatpush1.bf16.msra.mxu0 0
      %1490 = vmatprep.subr.bf16.mxu0 0
      %1491 = vmatpush1.bf16.msra.mxu0 0
      %1492 = vmatprep.subr.bf16.mxu0 0
      %1493 = vmatpush1.bf16.msra.mxu0 0
      %1494 = vmatprep.subr.bf16.mxu0 0
      %1495 = vmatpush1.bf16.msra.mxu0 0
      %1496 = vmatprep.subr.bf16.mxu0 0
      %1497 = vmatpush1.bf16.msra.mxu0 0
      %1498 = vmatprep.subr.bf16.mxu0 0
      %1499 = vmatpush1.bf16.msra.mxu0 0
      %1500 = vmatprep.subr.bf16.mxu0 0
      %1501 = vmatpush1.bf16.msra.mxu0 0
      %1502 = vmatprep.subr.bf16.mxu0 0
      %1503 = vmatpush1.bf16.msra.mxu0 %v1486
      %1504 = vmatprep.subr.bf16.mxu0 0
      %1505 = vmatpush2.bf16.msra.mxu0 0
      %1506 = vmatprep.subr.bf16.mxu0 0
      %1507 = vmatpush2.bf16.msra.mxu0 0
      %1508 = vmatprep.subr.bf16.mxu0 0
      %1509 = vmatpush2.bf16.msra.mxu0 0
      %1510 = vmatprep.subr.bf16.mxu0 0
      %1511 = vmatpush2.bf16.msra.mxu0 0
      %1512 = vmatprep.subr.bf16.mxu0 0
      %1513 = vmatpush2.bf16.msra.mxu0 0
      %1514 = vmatprep.subr.bf16.mxu0 0
      %1515 = vmatpush2.bf16.msra.mxu0 0
      %1516 = vmatprep.subr.bf16.mxu0 0
      %1517 = vmatpush2.bf16.msra.mxu0 0
      %1518 = vmatprep.subr.bf16.mxu0 0
      %1519 = vmatpush2.bf16.msra.mxu0 0
      %1520 = vmatprep.mubr.bf16.mxu0 0
      %1521 = vmatmul.mubr.bf16.gmra.mxu0 %v1483
      %v1522 = vpop.f32.mrf.mxu0
      %v1523 = vadd.f32 0.0, %v1522
      %v1524 = vpop.f32.mrf.mxu0
      %v1525 = vpop.f32.mrf.mxu0
      %v1526 = vadd.f32 0.0, %v1525
      %v1527 = vpop.f32.mrf.mxu0
      %1528 = vdwg.mxu0
      %v1529 = vadd.f32 %v1355, %v1523
      %v1530 = vadd.f32 %v1356, %v1526
      %v1531 = vld [vmem:[%s11] sm:$0x1]
      %v1533 = vlaneseq
      %v1534 = vshrl.u32 %v1533, 7
      %v1535 = vsub.s32 0, %v1534
      %v1536 = vrot.slane %v1531, %v1535
      %v1538 = vadd.f32 %v1529, %v1536
      %v1539 = vadd.f32 %v1530, %v1536
      %v1540 = vadd.f32 %v570, %v1538
      %v1541 = vadd.f32 %v571, %v1539
      %v1542 = vld [vmem:[%s12] sm:$0x1]
      %v1543 = vld [vmem:[%s12 + $0x1] sm:$0x1]
      %v1544 = vsel %vm730, %v1540, 0.0
      %1545 = vadd.xlane.f32.xlu0 %v1544
      %v1546 = vpop.xlane.xlu0 %1545
      %v1547 = vsel %vm730, %v1541, 0.0
      %1548 = vadd.xlane.f32.xlu0 %v1547
      %v1549 = vpop.xlane.xlu0 %1548
      %v1550 = vrcp.pop 32.0
      %v1551 = vmul.f32 %v1546, %v1550
      %v1552 = vmul.f32 %v1549, %v1550
      %v1553 = vsub.f32 %v1540, %v1551
      %v1554 = vsub.f32 %v1541, %v1552
      %v1555 = vmul.f32 %v1553, %v1553
      %v1556 = vmul.f32 %v1554, %v1554
      %v1557 = vsel %vm730, %v1555, 0.0
      %1558 = vadd.xlane.f32.xlu0 %v1557
      %v1559 = vpop.xlane.xlu0 %1558
      %v1560 = vsel %vm730, %v1556, 0.0
      %1561 = vadd.xlane.f32.xlu0 %v1560
      %v1562 = vpop.xlane.xlu0 %1561
      %v1563 = vmul.f32 %v1559, %v1550
      %v1564 = vmul.f32 %v1562, %v1550
      %v1565 = vadd.f32 %v1563, 1e-05
      %v1566 = vadd.f32 %v1564, 1e-05
      %v1567 = vrsqrt.pop %v1565
      %v1568 = vrsqrt.pop %v1566
      %v1569 = vmul.f32 %v1553, %v1567
      %v1570 = vmul.f32 %v1554, %v1568
      %v1571 = vlaneseq
      %v1572 = vshrl.u32 %v1571, 7
      %v1573 = vsub.s32 0, %v1572
      %v1574 = vrot.slane %v1542, %v1573
      %v1575 = vmul.f32 %v1569, %v1574
      %v1576 = vmul.f32 %v1570, %v1574
      %v1577 = vlaneseq
      %v1578 = vshrl.u32 %v1577, 7
      %v1579 = vsub.s32 0, %v1578
      %v1580 = vrot.slane %v1543, %v1579
      %v1581 = vadd.f32 %v1575, %v1580
      %v1582 = vadd.f32 %v1576, %v1580
      %v1583 = vld [vmem:[%s13] sm:$0xff]
      %v1584 = vld [vmem:[%s13 + $0x8] sm:$0xff]
      %v1585 = vld [vmem:[%s13 + $0x10] sm:$0xff]
      %v1586 = vld [vmem:[%s13 + $0x18] sm:$0xff]
      %v1587 = vpack.c.bf16 %v1582, %v1581
      %v1588 = vpack.c.bf16 %v1584, %v1583
      %v1589 = vpack.c.bf16 %v1586, %v1585
      %v1590 = vld [vmem:[%s14] sm:$0x1]
      %v1592 = vlaneseq
      %v1593 = vshrl.u32 %v1592, 7
      %v1594 = vsub.s32 0, %v1593
      %v1595 = vrot.slane %v1590, %v1594
      %v1598 = vsel %vm730, %v1587, 0
      %1600 = vmatprep.subr.bf16.mxu0 0
      %1601 = vmatpush1.bf16.msra.mxu0 0
      %1602 = vmatprep.subr.bf16.mxu0 0
      %1603 = vmatpush1.bf16.msra.mxu0 0
      %1604 = vmatprep.subr.bf16.mxu0 0
      %1605 = vmatpush1.bf16.msra.mxu0 0
      %1606 = vmatprep.subr.bf16.mxu0 0
      %1607 = vmatpush1.bf16.msra.mxu0 0
      %1608 = vmatprep.subr.bf16.mxu0 0
      %1609 = vmatpush1.bf16.msra.mxu0 0
      %1610 = vmatprep.subr.bf16.mxu0 0
      %1611 = vmatpush1.bf16.msra.mxu0 0
      %1612 = vmatprep.subr.bf16.mxu0 0
      %1613 = vmatpush1.bf16.msra.mxu0 %v1589
      %1614 = vmatprep.subr.bf16.mxu0 0
      %1615 = vmatpush1.bf16.msra.mxu0 %v1588
      %1616 = vmatprep.subr.bf16.mxu0 0
      %1617 = vmatpush2.bf16.msra.mxu0 0
      %1618 = vmatprep.subr.bf16.mxu0 0
      %1619 = vmatpush2.bf16.msra.mxu0 0
      %1620 = vmatprep.subr.bf16.mxu0 0
      %1621 = vmatpush2.bf16.msra.mxu0 0
      %1622 = vmatprep.subr.bf16.mxu0 0
      %1623 = vmatpush2.bf16.msra.mxu0 0
      %1624 = vmatprep.subr.bf16.mxu0 0
      %1625 = vmatpush2.bf16.msra.mxu0 0
      %1626 = vmatprep.subr.bf16.mxu0 0
      %1627 = vmatpush2.bf16.msra.mxu0 0
      %1628 = vmatprep.subr.bf16.mxu0 0
      %1629 = vmatpush2.bf16.msra.mxu0 0
      %1630 = vmatprep.subr.bf16.mxu0 0
      %1631 = vmatpush2.bf16.msra.mxu0 0
      %1632 = vmatprep.mubr.bf16.mxu0 0
      %1633 = vmatmul.mubr.bf16.gmra.mxu0 %v1598
      %v1634 = vpop.f32.mrf.mxu0
      %v1635 = vadd.f32 %v1595, %v1634
      %v1636 = vpop.f32.mrf.mxu0
      %v1637 = vpop.f32.mrf.mxu0
      %v1638 = vadd.f32 %v1595, %v1637
      %v1639 = vpop.f32.mrf.mxu0
      %1640 = vdwg.mxu0
      %v1641 = vmax.f32 %v1635, 0.0
      %v1642 = vmax.f32 %v1638, 0.0
      %v1643 = vld [vmem:[%s15] sm:$0xff]
      %v1644 = vld [vmem:[%s15 + $0x8] sm:$0xff]
      %v1645 = vld [vmem:[%s15 + $0x10] sm:$0xff]
      %v1646 = vld [vmem:[%s15 + $0x18] sm:$0xff]
      %v1647 = vld [vmem:[%s15 + $0x20] sm:$0xff]
      %v1648 = vld [vmem:[%s15 + $0x28] sm:$0xff]
      %v1649 = vld [vmem:[%s15 + $0x30] sm:$0xff]
      %v1650 = vld [vmem:[%s15 + $0x38] sm:$0xff]
      %v1651 = vpack.c.bf16 %v1642, %v1641
      %v1652 = vpack.c.bf16 %v1644, %v1643
      %v1653 = vpack.c.bf16 %v1646, %v1645
      %v1654 = vpack.c.bf16 %v1648, %v1647
      %v1655 = vpack.c.bf16 %v1650, %v1649
      %v1656 = vld [vmem:[%s16] sm:$0x1]
      %v1658 = vlaneseq
      %v1659 = vshrl.u32 %v1658, 7
      %v1660 = vsub.s32 0, %v1659
      %v1661 = vrot.slane %v1656, %v1660
      %v1664 = vsel %vm659, %v1651, 0
      %1666 = vmatprep.subr.bf16.mxu0 0
      %1667 = vmatpush1.bf16.msra.mxu0 0
      %1668 = vmatprep.subr.bf16.mxu0 0
      %1669 = vmatpush1.bf16.msra.mxu0 0
      %1670 = vmatprep.subr.bf16.mxu0 0
      %1671 = vmatpush1.bf16.msra.mxu0 0
      %1672 = vmatprep.subr.bf16.mxu0 0
      %1673 = vmatpush1.bf16.msra.mxu0 0
      %1674 = vmatprep.subr.bf16.mxu0 0
      %1675 = vmatpush1.bf16.msra.mxu0 %v1655
      %1676 = vmatprep.subr.bf16.mxu0 0
      %1677 = vmatpush1.bf16.msra.mxu0 %v1654
      %1678 = vmatprep.subr.bf16.mxu0 0
      %1679 = vmatpush1.bf16.msra.mxu0 %v1653
      %1680 = vmatprep.subr.bf16.mxu0 0
      %1681 = vmatpush1.bf16.msra.mxu0 %v1652
      %1682 = vmatprep.subr.bf16.mxu0 0
      %1683 = vmatpush2.bf16.msra.mxu0 0
      %1684 = vmatprep.subr.bf16.mxu0 0
      %1685 = vmatpush2.bf16.msra.mxu0 0
      %1686 = vmatprep.subr.bf16.mxu0 0
      %1687 = vmatpush2.bf16.msra.mxu0 0
      %1688 = vmatprep.subr.bf16.mxu0 0
      %1689 = vmatpush2.bf16.msra.mxu0 0
      %1690 = vmatprep.subr.bf16.mxu0 0
      %1691 = vmatpush2.bf16.msra.mxu0 0
      %1692 = vmatprep.subr.bf16.mxu0 0
      %1693 = vmatpush2.bf16.msra.mxu0 0
      %1694 = vmatprep.subr.bf16.mxu0 0
      %1695 = vmatpush2.bf16.msra.mxu0 0
      %1696 = vmatprep.subr.bf16.mxu0 0
      %1697 = vmatpush2.bf16.msra.mxu0 0
      %1698 = vmatprep.mubr.bf16.mxu0 0
      %1699 = vmatmul.mubr.bf16.gmra.mxu0 %v1664
      %v1700 = vpop.f32.mrf.mxu0
      %v1701 = vadd.f32 %v1661, %v1700
      %v1702 = vpop.f32.mrf.mxu0
      %v1703 = vpop.f32.mrf.mxu0
      %v1704 = vadd.f32 %v1661, %v1703
      %v1705 = vpop.f32.mrf.mxu0
      %1706 = vdwg.mxu0
      %v1707 = vadd.f32 %v1581, %v1701
      %v1708 = vadd.f32 %v1582, %v1704
      %v1709 = vld [vmem:[%s12 + $0x2] sm:$0x1]
      %v1710 = vld [vmem:[%s12 + $0x3] sm:$0x1]
      %v1711 = vsel %vm730, %v1707, 0.0
      %1712 = vadd.xlane.f32.xlu0 %v1711
      %v1713 = vpop.xlane.xlu0 %1712
      %v1714 = vsel %vm730, %v1708, 0.0
      %1715 = vadd.xlane.f32.xlu0 %v1714
      %v1716 = vpop.xlane.xlu0 %1715
      %v1717 = vmul.f32 %v1713, %v1550
      %v1718 = vmul.f32 %v1716, %v1550
      %v1719 = vsub.f32 %v1707, %v1717
      %v1720 = vsub.f32 %v1708, %v1718
      %v1721 = vmul.f32 %v1719, %v1719
      %v1722 = vmul.f32 %v1720, %v1720
      %v1723 = vsel %vm730, %v1721, 0.0
      %1724 = vadd.xlane.f32.xlu0 %v1723
      %v1725 = vpop.xlane.xlu0 %1724
      %v1726 = vsel %vm730, %v1722, 0.0
      %1727 = vadd.xlane.f32.xlu0 %v1726
      %v1728 = vpop.xlane.xlu0 %1727
      %v1729 = vmul.f32 %v1725, %v1550
      %v1730 = vmul.f32 %v1728, %v1550
      %v1731 = vadd.f32 %v1729, 1e-05
      %v1732 = vadd.f32 %v1730, 1e-05
      %v1733 = vrsqrt.pop %v1731
      %v1734 = vrsqrt.pop %v1732
      %v1735 = vmul.f32 %v1719, %v1733
      %v1736 = vmul.f32 %v1720, %v1734
      %v1737 = vlaneseq
      %v1738 = vshrl.u32 %v1737, 7
      %v1739 = vsub.s32 0, %v1738
      %v1740 = vrot.slane %v1709, %v1739
      %v1741 = vmul.f32 %v1735, %v1740
      %v1742 = vmul.f32 %v1736, %v1740
      %v1743 = vlaneseq
      %v1744 = vshrl.u32 %v1743, 7
      %v1745 = vsub.s32 0, %v1744
      %v1746 = vrot.slane %v1710, %v1745
      %v1747 = vadd.f32 %v1741, %v1746
      %v1748 = vadd.f32 %v1742, %v1746
      %1749 = vst.msk [vmem:[%s568] sm:$0xff] %vm730, %v1747
      %1750 = vst.msk [vmem:[%s568 + $0x8] sm:$0xff] %vm730, %v1748
      %p1751 = scmp.lt.s32.totalorder %s28, 1
      %s1752 = scalar_select %p1751, %s28, 1
      %s1753 = smul.addr %s1752, 2
      %s1754 = smul.addr %s1753, 8
      %s1755 = scalar_lea.vmem %s17, %s1754
      // Predicated region
      $region89: #{view_transformer_forward.4} parent=87 // pred_check
        %p1756 = pneg %p413
      $region90: #{view_transformer_forward.4} parent=87 // pred_check_branch
        %1758 = sbr.rel (%p1756) target = $region92
      $region91: #{view_transformer_forward.4} parent=87 // pred_region
        _
      $region92: #{view_transformer_forward.4} parent=87 // pred_fallthru
        _
    $region88: #{view_transformer_forward.4} parent=5 // pred_fallthru
      _
    %p1759 = scmp.le.s32.totalorder 2, %s23
    // Predicated region
    $region93: #{view_transformer_forward.4} parent=5 // pred_check
      %p1760 = pneg %p1759
    $region94: #{view_transformer_forward.4} parent=5 // pred_check_branch
      %1762 = sbr.rel (%p1760) target = $region96
    $region95: #{view_transformer_forward.4} parent=5 // pred_region
      %s1763 = ssub.s32 %s23, 2
      // Predicated region
      $region97: #{view_transformer_forward.4} parent=95 // pred_check
        %p1764 = pneg %p419
      $region98: #{view_transformer_forward.4} parent=95 // pred_check_branch
        %1766 = sbr.rel (%p1764) target = $region100
      $region99: #{view_transformer_forward.4} parent=95 // pred_region
        %p1767 = scmp.lt.s32.totalorder %s29, 1
        %s1768 = scalar_select %p1767, %s29, 1
        %s1769 = smul.addr %s1768, 2
        %s1770 = smul.addr %s1769, 8
        %s1771 = scalar_lea.vmem %s17, %s1770
      $region100: #{view_transformer_forward.4} parent=95 // pred_fallthru
        _
    $region96: #{view_transformer_forward.4} parent=5 // pred_fallthru
      _
  $region6: #{view_transformer_forward.4} parent=0 // loop_footer
    %s27 = sadd.s32 1, %s23
  $region7: #{view_transformer_forward.4} parent=0 // loop_footer_branch
    %22 = sbr.rel target = $region3
  $region8: #{view_transformer_forward.4} parent=0 // loop_exit
    _

</llo_original>
